<compile_context>
chip_gen: v6e
topology: v6e:2x2x1
jax: 0.10.0
libtpu: 0.0.40
codegen_flags: <defaults>
</compile_context>

<pallas_src>
import jax
import jax.numpy as jnp
from jax.experimental import pallas as pl
from jax.experimental.pallas import tpu as pltpu

INPUT_DIM = 256 * (4 * 4 + 13 * 4)           # 17408
HIDDEN = 390
OUT = 4

NCORES = 2                                   # K halves (v7x TensorCore split)
TK = 4352                                    # 34 * 128; 17408 = 2 * 2 * 4352
NK_PER_CORE = INPUT_DIM // (NCORES * TK)     # 2 K-tiles per half


def mlp_kernel(x_ref, w1_ref, b1_ref, w2_ref, b2_ref, out_ref, h_acc):
    j = pl.program_id(0)                     # K-half (parallel across TCs)
    k = pl.program_id(1)                     # K tile within this half

    @pl.when(k == 0)
    def _():
        h_acc[...] = jnp.zeros_like(h_acc)

    # fc1 partial product over this K tile: (1, TK) @ (TK, 390) on the MXU.
    h_acc[...] += jnp.dot(x_ref[...], w1_ref[...],
                          preferred_element_type=jnp.float32)

    @pl.when(k == pl.num_programs(1) - 1)
    def _():
        # Only K-half 0 folds in the biases, so summing the two partial
        # outputs in the wrapper reproduces (x @ W1^T + b1) @ W2^T + b2.
        bias_on = (j == 0).astype(jnp.float32)
        h = h_acc[...] + bias_on * b1_ref[...]
        part = jnp.dot(h, w2_ref[...], preferred_element_type=jnp.float32)
        part = part + bias_on * b2_ref[...]
        out_ref[...] = part[None].astype(out_ref.dtype)


def mlp_forward(x, w1t, b1, w2t, b2):
    """x: (INPUT_DIM,); w1t: (INPUT_DIM, HIDDEN); b1: (HIDDEN,);
       w2t: (HIDDEN, OUT); b2: (OUT,). Returns (OUT,) float32.

    Weights must already be in (in, out) layout (see prepare_params) so no
    per-call transpose / extra HBM copy is needed."""
    assert x.shape[0] == INPUT_DIM, (
        f"Wrong input shape {x.shape[0]}, should be {INPUT_DIM}.")

    x2 = x.reshape(1, INPUT_DIM)             # metadata-only reshape
    b1_2 = b1.reshape(1, HIDDEN)
    b2_2 = b2.reshape(1, OUT)

    partials = pl.pallas_call(
        mlp_kernel,
        out_shape=jax.ShapeDtypeStruct((NCORES, 1, OUT), jnp.float32),
        grid_spec=pltpu.PrefetchScalarGridSpec(
            num_scalar_prefetch=0,
            grid=(NCORES, NK_PER_CORE),
            in_specs=[
                # x tile (1, TK) -- 17 KB per step, negligible.
                pl.BlockSpec((1, TK), lambda j, k: (0, j * NK_PER_CORE + k)),
                # W1^T tile (TK, HIDDEN) -- the streamed operand
                # (contiguous 6.8 MB HBM read per step).
                pl.BlockSpec((TK, HIDDEN),
                             lambda j, k: (j * NK_PER_CORE + k, 0)),
                # Constants: constant index maps => fetched once, kept in VMEM.
                pl.BlockSpec((1, HIDDEN), lambda j, k: (0, 0)),      # b1
                pl.BlockSpec((HIDDEN, OUT), lambda j, k: (0, 0)),    # W2^T
                pl.BlockSpec((1, OUT), lambda j, k: (0, 0)),         # b2
            ],
            # (1, 1, OUT) block == full trailing dims of the (NCORES, 1, OUT)
            # output, so the (8, 128) divisibility rule is satisfied.
            out_specs=pl.BlockSpec((1, 1, OUT), lambda j, k: (j, 0, 0)),
            scratch_shapes=[pltpu.VMEM((1, HIDDEN), jnp.float32)],
        ),
        compiler_params=pltpu.CompilerParams(
            dimension_semantics=("parallel", "arbitrary"),
            # Double-buffered W1 tiles ~17.8 MiB (390 -> 512 lane pad lives in
            # VMEM only); 28 MiB covers v5e's 16 MiB scoped default and stays
            # well inside v7x's 64 MiB physical VMEM.
            vmem_limit_bytes=28 * 1024 * 1024,
        ),
        cost_estimate=pl.CostEstimate(
            flops=2 * INPUT_DIM * HIDDEN + 2 * NCORES * HIDDEN * OUT,
            transcendentals=0,
            bytes_accessed=4 * (INPUT_DIM * HIDDEN + INPUT_DIM + HIDDEN
                                + HIDDEN * OUT + OUT + NCORES * OUT),
        ),
    )(x2, w1t, b1_2, w2t, b2_2)

    # Combine the two K-half partial outputs (one 4-wide add).
    return partials[0, 0] + partials[1, 0]


def xavier_uniform(key, shape, dtype=jnp.float32):
    fan_out, fan_in = shape
    limit = (6.0 / (fan_in + fan_out)) ** 0.5
    return jax.random.uniform(key, shape, dtype, minval=-limit, maxval=limit)


def init_params(key):
    """Parameters in the PyTorch layout (xavier_uniform weights, zero biases),
    matching MLP.initialize_weights()."""
    k_w1, k_w2 = jax.random.split(key)
    w1 = xavier_uniform(k_w1, (HIDDEN, INPUT_DIM))
    b1 = jnp.zeros((HIDDEN,), jnp.float32)
    w2 = xavier_uniform(k_w2, (OUT, HIDDEN))
    b2 = jnp.zeros((OUT,), jnp.float32)
    return w1, b1, w2, b2


def prepare_params(w1, b1, w2, b2):
    """ONE-TIME (model-init) conversion to the kernel's (in, out) layout so
    the per-call forward never re-materialises W^T in HBM."""
    return jnp.asarray(w1.T), b1, jnp.asarray(w2.T), b2


if __name__ == "__main__":
    key = jax.random.PRNGKey(0)
    k_x, k_p = jax.random.split(key)

    # PyTorch-layout params, transposed once at "init" time.
    w1, b1, w2, b2 = init_params(k_p)
    w1t, b1, w2t, b2 = jax.block_until_ready(prepare_params(w1, b1, w2, b2))

    # Input dim is fixed by the module's assert (17408); no smaller shape is
    # consistent with the spec.
    x = jax.random.normal(k_x, (INPUT_DIM,), jnp.float32)

    fwd = jax.jit(mlp_forward)
    out = jax.block_until_ready(fwd(x, w1t, b1, w2t, b2))

    # Reference check in plain JAX (same math as the PyTorch forward).
    ref = (x @ w1.T + b1) @ w2.T + b2
    assert out.shape == (OUT,)
    assert jnp.allclose(out, ref, rtol=1e-4, atol=1e-4), (out, ref)

    print("KERNEL_OK")
</pallas_src>

<mosaic_0001>
module attributes {stable_mosaic.version = 11 : i64} {
  func.func @mlp_kernel(%arg0: i32, %arg1: i32, %arg2: memref<1x4352xf32, #tpu.memory_space<vmem>>, %arg3: memref<4352x390xf32, #tpu.memory_space<vmem>>, %arg4: memref<1x390xf32, #tpu.memory_space<vmem>>, %arg5: memref<390x4xf32, #tpu.memory_space<vmem>>, %arg6: memref<1x4xf32, #tpu.memory_space<vmem>>, %arg7: memref<1x1x4xf32, #tpu.memory_space<vmem>>, %arg8: memref<1x390xf32, #tpu.memory_space<vmem>>) attributes {dimension_semantics = [#tpu.dimension_semantics<parallel>, #tpu.dimension_semantics<arbitrary>], iteration_bounds = array<i64: 2, 2>, scalar_prefetch = 0 : i64, scratch_operands = 1 : i64, tpu.core_type = #tpu.core_type<tc>, window_params = [{transform_indices = @transform_0, window_bounds = array<i64: 1, 4352>}, {transform_indices = @transform_1, window_bounds = array<i64: 4352, 390>}, {pipeline_mode = #tpu.pipeline_mode<synchronous>, transform_indices = @transform_2, window_bounds = array<i64: 1, 390>}, {pipeline_mode = #tpu.pipeline_mode<synchronous>, transform_indices = @transform_3, window_bounds = array<i64: 390, 4>}, {pipeline_mode = #tpu.pipeline_mode<synchronous>, transform_indices = @transform_4, window_bounds = array<i64: 1, 4>}, {transform_indices = @transform_5, window_bounds = array<i64: 1, 1, 4>}]} {
    %c0_i32 = arith.constant 0 : i32
    %0 = arith.cmpi eq, %arg1, %c0_i32 : i32
    %1 = arith.extui %0 : i1 to i32
    %c0_i32_0 = arith.constant 0 : i32
    %2 = arith.cmpi ne, %1, %c0_i32_0 : i32
    scf.if %2 {
      %cst_9 = arith.constant 0.000000e+00 : f32
      %12 = vector.broadcast %cst_9 : f32 to vector<1x390xf32>
      %c0_10 = arith.constant 0 : index
      %c0_11 = arith.constant 0 : index
      %13 = vector.load %arg8[%c0_10, %c0_11] : memref<1x390xf32, #tpu.memory_space<vmem>>, vector<1x390xf32>
      tpu.vector_store %arg8[%c0_10, %c0_11], %12 {strides = array<i32>} : memref<1x390xf32, #tpu.memory_space<vmem>>, vector<1x390xf32>,
    } else {
    }
    %c0 = arith.constant 0 : index
    %c0_1 = arith.constant 0 : index
    %3 = vector.load %arg8[%c0, %c0_1] : memref<1x390xf32, #tpu.memory_space<vmem>>, vector<1x390xf32>
    %c0_2 = arith.constant 0 : index
    %c0_3 = arith.constant 0 : index
    %4 = vector.load %arg2[%c0_2, %c0_3] : memref<1x4352xf32, #tpu.memory_space<vmem>>, vector<1x4352xf32>
    %c0_4 = arith.constant 0 : index
    %c0_5 = arith.constant 0 : index
    %5 = vector.load %arg3[%c0_4, %c0_5] : memref<4352x390xf32, #tpu.memory_space<vmem>>, vector<4352x390xf32>
    %cst = arith.constant dense<0.000000e+00> : vector<1x390xf32>
    %6 = tpu.matmul %4, %5, %cst {dimension_numbers = #tpu.dot_dimension_numbers<[1], [0], [0], [1], [0, 0, 1, 1], [], []>} : vector<1x4352xf32>, vector<4352x390xf32>, vector<1x390xf32> -> vector<1x390xf32>
    %7 = arith.addf %3, %6 : vector<1x390xf32>
    %c0_6 = arith.constant 0 : index
    %c0_7 = arith.constant 0 : index
    %8 = vector.load %arg8[%c0_6, %c0_7] : memref<1x390xf32, #tpu.memory_space<vmem>>, vector<1x390xf32>
    tpu.vector_store %arg8[%c0_6, %c0_7], %7 {strides = array<i32>} : memref<1x390xf32, #tpu.memory_space<vmem>>, vector<1x390xf32>,
    %c1_i32 = arith.constant 1 : i32
    %9 = arith.cmpi eq, %arg1, %c1_i32 : i32
    %10 = arith.extui %9 : i1 to i32
    %c0_i32_8 = arith.constant 0 : i32
    %11 = arith.cmpi ne, %10, %c0_i32_8 : i32
    scf.if %11 {
      %c0_i32_9 = arith.constant 0 : i32
      %12 = arith.cmpi eq, %arg0, %c0_i32_9 : i32
      %13 = arith.extui %12 : i1 to i32
      %14 = arith.sitofp %13 : i32 to f32
      %c0_10 = arith.constant 0 : index
      %c0_11 = arith.constant 0 : index
      %15 = vector.load %arg8[%c0_10, %c0_11] : memref<1x390xf32, #tpu.memory_space<vmem>>, vector<1x390xf32>
      %c0_12 = arith.constant 0 : index
      %c0_13 = arith.constant 0 : index
      %16 = vector.load %arg4[%c0_12, %c0_13] : memref<1x390xf32, #tpu.memory_space<vmem>>, vector<1x390xf32>
      %17 = vector.broadcast %14 : f32 to vector<1x390xf32>
      %18 = arith.mulf %17, %16 : vector<1x390xf32>
      %19 = arith.addf %15, %18 : vector<1x390xf32>
      %c0_14 = arith.constant 0 : index
      %c0_15 = arith.constant 0 : index
      %20 = vector.load %arg5[%c0_14, %c0_15] : memref<390x4xf32, #tpu.memory_space<vmem>>, vector<390x4xf32>
      %cst_16 = arith.constant dense<0.000000e+00> : vector<1x4xf32>
      %21 = tpu.matmul %19, %20, %cst_16 {dimension_numbers = #tpu.dot_dimension_numbers<[1], [0], [0], [1], [0, 0, 1, 1], [], []>} : vector<1x390xf32>, vector<390x4xf32>, vector<1x4xf32> -> vector<1x4xf32>
      %c0_17 = arith.constant 0 : index
      %c0_18 = arith.constant 0 : index
      %22 = vector.load %arg6[%c0_17, %c0_18] : memref<1x4xf32, #tpu.memory_space<vmem>>, vector<1x4xf32>
      %23 = vector.broadcast %14 : f32 to vector<1x4xf32>
      %24 = arith.mulf %23, %22 : vector<1x4xf32>
      %25 = arith.addf %21, %24 : vector<1x4xf32>
      %26 = vector.shape_cast %25 : vector<1x4xf32> to vector<1x1x4xf32>
      %c0_19 = arith.constant 0 : index
      %c0_20 = arith.constant 0 : index
      %c0_21 = arith.constant 0 : index
      %27 = vector.load %arg7[%c0_19, %c0_20, %c0_21] : memref<1x1x4xf32, #tpu.memory_space<vmem>>, vector<1x1x4xf32>
      tpu.vector_store %arg7[%c0_19, %c0_20, %c0_21], %26 {strides = array<i32>} : memref<1x1x4xf32, #tpu.memory_space<vmem>>, vector<1x1x4xf32>,
    } else {
    }
    return
  }
  func.func @transform_0(%arg0: i32, %arg1: i32) -> (i32, i32) {
    %c2_i32 = arith.constant 2 : i32
    %0 = arith.muli %arg0, %c2_i32 : i32
    %1 = arith.addi %0, %arg1 : i32
    %c0_i32 = arith.constant 0 : i32
    %c0_i32_0 = arith.constant 0 : i32
    return %c0_i32, %1 : i32, i32
  }
  func.func @transform_1(%arg0: i32, %arg1: i32) -> (i32, i32) {
    %c2_i32 = arith.constant 2 : i32
    %0 = arith.muli %arg0, %c2_i32 : i32
    %1 = arith.addi %0, %arg1 : i32
    %c0_i32 = arith.constant 0 : i32
    %c0_i32_0 = arith.constant 0 : i32
    return %1, %c0_i32 : i32, i32
  }
  func.func @transform_2(%arg0: i32, %arg1: i32) -> (i32, i32) {
    %c0_i32 = arith.constant 0 : i32
    %c0_i32_0 = arith.constant 0 : i32
    %c0_i32_1 = arith.constant 0 : i32
    return %c0_i32, %c0_i32_0 : i32, i32
  }
  func.func @transform_3(%arg0: i32, %arg1: i32) -> (i32, i32) {
    %c0_i32 = arith.constant 0 : i32
    %c0_i32_0 = arith.constant 0 : i32
    %c0_i32_1 = arith.constant 0 : i32
    return %c0_i32, %c0_i32_0 : i32, i32
  }
  func.func @transform_4(%arg0: i32, %arg1: i32) -> (i32, i32) {
    %c0_i32 = arith.constant 0 : i32
    %c0_i32_0 = arith.constant 0 : i32
    %c0_i32_1 = arith.constant 0 : i32
    return %c0_i32, %c0_i32_0 : i32, i32
  }
  func.func @transform_5(%arg0: i32, %arg1: i32) -> (i32, i32, i32) {
    %c0_i32 = arith.constant 0 : i32
    %c0_i32_0 = arith.constant 0 : i32
    %c0_i32_1 = arith.constant 0 : i32
    return %arg0, %c0_i32, %c0_i32_0 : i32, i32, i32
  }
}

</mosaic_0001>

<llo_original>
// kernel: mlp_forward.1
$region0: #{mlp_forward.1}
  #allocation0 [shape = 'u32[]', space=smem, size = 0x4, offset = 0x4, fixed_abs, tag = 'smem constant byte address 0x4 - core index']
  #allocation1 [shape = 'u32[144,128]{1,0:T(1,128)}', space=vmem, size = 0x12000, scoped, tag = 'internal scratch']
  #allocation2 [shape = 'f32[1,390]{1,0:T(1,128)}', space=vmem, size = 0x800, scoped, tag = 'scratch operand']
  %s0 = inlined_call_operand.vmem [shape: f32[1,17408], index: 0, kind: input, shape index: {}]
  %s1 = inlined_call_operand.vmem [shape: f32[17408,390], index: 1, kind: input, shape index: {}]
  %s2 = inlined_call_operand.vmem [shape: f32[1,390], index: 2, kind: input, shape index: {}]
  %s3 = inlined_call_operand.vmem [shape: f32[390,4], index: 3, kind: input, shape index: {}]
  %s4 = inlined_call_operand.vmem [shape: f32[1,4], index: 4, kind: input, shape index: {}]
  %s5 = inlined_call_operand.vmem [shape: f32[2,1,4], index: 5, kind: output, shape index: {}]
  %s6 = sld [smem:[#allocation0]]
  $region61: #{mlp_forward.1} parent=0
    _
  %s8 = ssub.s32 1, %s6
  %s9 = scalar_select 0, %s8, %s6
  loop: start=0, step=1, limit=6
  $region2: #{mlp_forward.1} parent=0 // loop_pre_header
    _
  $region3: #{mlp_forward.1} parent=0 // loop_header
    %s11 = sphi 0, %s15
    %p12 = scmp.ge.s32.totalorder %s11, 6
    %s18 = sphi 0, %s30
    %s19 = sphi 0, %s26
    %s20 = sphi 0, %s18
    %s21 = sphi 0, %s19
    %s22 = sphi 0, %s20
    %s23 = sphi 0, %s21
    %s37 = sphi 0, %s39
    %s40 = sphi 0, %s37
    %s41 = sphi 0, %s40
    %s57 = sphi 0, %s41
    %s67 = sphi 0, %s69
    %s70 = sphi 0, %s67
    %s71 = sphi 0, %s70
    %s87 = sphi 0, %s71
    %s91 = sphi 0, %s91
    %s93 = sphi 0, %s91
    %s94 = sphi 0, %s93
    %s108 = sphi 0, %s94
    %s112 = sphi 0, %s112
    %s114 = sphi 0, %s112
    %s115 = sphi 0, %s114
    %s129 = sphi 0, %s115
    %s133 = sphi 0, %s133
    %s135 = sphi 0, %s133
    %s136 = sphi 0, %s135
    %s150 = sphi 0, %s136
    %s156 = sphi 0, %s158
    %s159 = sphi 0, %s156
    %s160 = sphi 0, %s159
    %s176 = sphi 0, %s160
  $region4: #{mlp_forward.1} parent=0 // loop_header_branch
    %14 = sbr.rel (%p12) target = $region8
  $region5: #{mlp_forward.1} parent=0 // loop_body
    %s16 = ssub.s32 %s11, 1
    %s17 = ssub.s32 %s11, 2
    %s24 = sadd.s32 1, %s19
    %p25 = scmp.ge.s32.totalorder %s24, 2
    %s26 = scalar_select %p25, 0, %s24
    %s27 = sadd.s32 1, %s18
    %s28 = scalar_select %p25, %s27, %s18
    %p29 = scmp.ge.s32.totalorder %s28, 2
    %s30 = scalar_select %p29, 0, %s28
    %s31 = smul.u32 %s18, 2
    %s32 = sadd.s32 %s31, %s19
    %s33 = smul.u32 %s30, 2
    %s34 = sadd.s32 %s33, %s26
    %s35 = ssub.s32 %s32, %s34
    %p36 = scmp.eq.s32.totalorder %s35, 0
    %s38 = sadd.s32 %s37, 1
    %s39 = scalar_select %p36, %s37, %s38
    %p42 = pneg %p36
    %p43 = scmp.eq.s32.totalorder %s11, 3
    %p44 = por %p42, %p43
    %p45 = scmp.ne.s32.totalorder %s37, %s40
    %p46 = scmp.eq.s32.totalorder %s11, 0
    %p47 = por %p45, %p46
    %p48 = scmp.ne.s32.totalorder %s37, %s40
    %p49 = scmp.eq.s32.totalorder %s16, 3
    %p50 = por %p48, %p49
    %p51 = scmp.ne.s32.totalorder %s40, %s41
    %p52 = scmp.eq.s32.totalorder %s16, 0
    %p53 = por %p51, %p52
    %p54 = scmp.ne.s32.totalorder %s40, %s41
    %p55 = scmp.eq.s32.totalorder %s17, 3
    %p56 = por %p54, %p55
    %p58 = scmp.ne.s32.totalorder %s41, %s57
    %p59 = scmp.eq.s32.totalorder %s17, 0
    %p60 = por %p58, %p59
    %s61 = smul.u32 %s18, 2
    %s62 = sadd.s32 %s61, %s19
    %s63 = smul.u32 %s30, 2
    %s64 = sadd.s32 %s63, %s26
    %s65 = ssub.s32 %s62, %s64
    %p66 = scmp.eq.s32.totalorder %s65, 0
    %s68 = sadd.s32 %s67, 1
    %s69 = scalar_select %p66, %s67, %s68
    %p72 = pneg %p66
    %p73 = scmp.eq.s32.totalorder %s11, 3
    %p74 = por %p72, %p73
    %p75 = scmp.ne.s32.totalorder %s67, %s70
    %p76 = scmp.eq.s32.totalorder %s11, 0
    %p77 = por %p75, %p76
    %p78 = scmp.ne.s32.totalorder %s67, %s70
    %p79 = scmp.eq.s32.totalorder %s16, 3
    %p80 = por %p78, %p79
    %p81 = scmp.ne.s32.totalorder %s70, %s71
    %p82 = scmp.eq.s32.totalorder %s16, 0
    %p83 = por %p81, %p82
    %p84 = scmp.ne.s32.totalorder %s70, %s71
    %p85 = scmp.eq.s32.totalorder %s17, 3
    %p86 = por %p84, %p85
    %p88 = scmp.ne.s32.totalorder %s71, %s87
    %p89 = scmp.eq.s32.totalorder %s17, 0
    %p90 = por %p88, %p89
    %s92 = sadd.s32 %s91, 1
    %p95 = scmp.eq.s32.totalorder %s11, 3
    %p96 = scmp.ne.s32.totalorder %s91, %s93
    %p97 = scmp.eq.s32.totalorder %s11, 0
    %p98 = por %p96, %p97
    %p99 = scmp.ne.s32.totalorder %s91, %s93
    %p100 = scmp.eq.s32.totalorder %s16, 3
    %p101 = por %p99, %p100
    %p102 = scmp.ne.s32.totalorder %s93, %s94
    %p103 = scmp.eq.s32.totalorder %s16, 0
    %p104 = por %p102, %p103
    %p105 = scmp.ne.s32.totalorder %s93, %s94
    %p106 = scmp.eq.s32.totalorder %s17, 3
    %p107 = por %p105, %p106
    %p109 = scmp.ne.s32.totalorder %s94, %s108
    %p110 = scmp.eq.s32.totalorder %s17, 0
    %p111 = por %p109, %p110
    %s113 = sadd.s32 %s112, 1
    %p116 = scmp.eq.s32.totalorder %s11, 3
    %p117 = scmp.ne.s32.totalorder %s112, %s114
    %p118 = scmp.eq.s32.totalorder %s11, 0
    %p119 = por %p117, %p118
    %p120 = scmp.ne.s32.totalorder %s112, %s114
    %p121 = scmp.eq.s32.totalorder %s16, 3
    %p122 = por %p120, %p121
    %p123 = scmp.ne.s32.totalorder %s114, %s115
    %p124 = scmp.eq.s32.totalorder %s16, 0
    %p125 = por %p123, %p124
    %p126 = scmp.ne.s32.totalorder %s114, %s115
    %p127 = scmp.eq.s32.totalorder %s17, 3
    %p128 = por %p126, %p127
    %p130 = scmp.ne.s32.totalorder %s115, %s129
    %p131 = scmp.eq.s32.totalorder %s17, 0
    %p132 = por %p130, %p131
    %s134 = sadd.s32 %s133, 1
    %p137 = scmp.eq.s32.totalorder %s11, 3
    %p138 = scmp.ne.s32.totalorder %s133, %s135
    %p139 = scmp.eq.s32.totalorder %s11, 0
    %p140 = por %p138, %p139
    %p141 = scmp.ne.s32.totalorder %s133, %s135
    %p142 = scmp.eq.s32.totalorder %s16, 3
    %p143 = por %p141, %p142
    %p144 = scmp.ne.s32.totalorder %s135, %s136
    %p145 = scmp.eq.s32.totalorder %s16, 0
    %p146 = por %p144, %p145
    %p147 = scmp.ne.s32.totalorder %s135, %s136
    %p148 = scmp.eq.s32.totalorder %s17, 3
    %p149 = por %p147, %p148
    %p151 = scmp.ne.s32.totalorder %s136, %s150
    %p152 = scmp.eq.s32.totalorder %s17, 0
    %p153 = por %p151, %p152
    %s154 = ssub.s32 %s18, %s30
    %p155 = scmp.eq.s32.totalorder %s154, 0
    %s157 = sadd.s32 %s156, 1
    %s158 = scalar_select %p155, %s156, %s157
    %p161 = pneg %p155
    %p162 = scmp.eq.s32.totalorder %s11, 3
    %p163 = por %p161, %p162
    %p164 = scmp.ne.s32.totalorder %s156, %s159
    %p165 = scmp.eq.s32.totalorder %s11, 0
    %p166 = por %p164, %p165
    %p167 = scmp.ne.s32.totalorder %s156, %s159
    %p168 = scmp.eq.s32.totalorder %s16, 3
    %p169 = por %p167, %p168
    %p170 = scmp.ne.s32.totalorder %s159, %s160
    %p171 = scmp.eq.s32.totalorder %s16, 0
    %p172 = por %p170, %p171
    %p173 = scmp.ne.s32.totalorder %s159, %s160
    %p174 = scmp.eq.s32.totalorder %s17, 3
    %p175 = por %p173, %p174
    %p177 = scmp.ne.s32.totalorder %s160, %s176
    %p178 = scmp.eq.s32.totalorder %s17, 0
    %p179 = por %p177, %p178
    %p180 = scmp.le.s32.totalorder 1, %s11
    %p181 = scmp.lt.s32.totalorder %s11, 5
    %p182 = pnand %p180, %p181
    %p183 = pneg %p182
    // Predicated region
    $region9: #{mlp_forward.1} parent=5 // pred_check
      _
    $region10: #{mlp_forward.1} parent=5 // pred_check_branch
      %185 = sbr.rel (%p182) target = $region12
    $region11: #{mlp_forward.1} parent=5 // pred_region
      %s186 = ssub.s32 %s11, 1
      // Predicated region
      $region13: #{mlp_forward.1} parent=11 // pred_check
        %p187 = pneg %p104
      $region14: #{mlp_forward.1} parent=11 // pred_check_branch
        %189 = sbr.rel (%p187) target = $region16
      $region15: #{mlp_forward.1} parent=11 // pred_region
        _
      $region16: #{mlp_forward.1} parent=11 // pred_fallthru
        _
      // Predicated region
      $region17: #{mlp_forward.1} parent=11 // pred_check
        %p190 = pneg %p125
      $region18: #{mlp_forward.1} parent=11 // pred_check_branch
        %192 = sbr.rel (%p190) target = $region20
      $region19: #{mlp_forward.1} parent=11 // pred_region
        _
      $region20: #{mlp_forward.1} parent=11 // pred_fallthru
        _
      // Predicated region
      $region21: #{mlp_forward.1} parent=11 // pred_check
        %p193 = pneg %p146
      $region22: #{mlp_forward.1} parent=11 // pred_check_branch
        %195 = sbr.rel (%p193) target = $region24
      $region23: #{mlp_forward.1} parent=11 // pred_region
        _
      $region24: #{mlp_forward.1} parent=11 // pred_fallthru
        _
    $region12: #{mlp_forward.1} parent=5 // pred_fallthru
      _
    %p196 = scmp.lt.s32.totalorder %s11, 4
    // Predicated region
    $region25: #{mlp_forward.1} parent=5 // pred_check
      %p197 = pneg %p196
    $region26: #{mlp_forward.1} parent=5 // pred_check_branch
      %199 = sbr.rel (%p197) target = $region28
    $region27: #{mlp_forward.1} parent=5 // pred_region
      // Predicated region
      $region29: #{mlp_forward.1} parent=27 // pred_check
        %p200 = pneg %p47
      $region30: #{mlp_forward.1} parent=27 // pred_check_branch
        %202 = sbr.rel (%p200) target = $region32
      $region31: #{mlp_forward.1} parent=27 // pred_region
        %s203 = smul.u32 %s18, 2
        %s204 = sadd.s32 %s203, %s19
        %s205 = smul.u32 34, %s204
        %p206 = scmp.lt.s32.totalorder %s205, 135
        %s207 = scalar_select %p206, %s205, 135
        %s208 = scalar_lea.vmem %s0, %s207
        %s209 = smul.u32 %s18, 2
        %s210 = sadd.s32 %s209, %s19
        %s211 = smul.u32 34, %s210
      $region32: #{mlp_forward.1} parent=27 // pred_fallthru
        _
      // Predicated region
      $region33: #{mlp_forward.1} parent=27 // pred_check
        %p212 = pneg %p77
      $region34: #{mlp_forward.1} parent=27 // pred_check_branch
        %214 = sbr.rel (%p212) target = $region36
      $region35: #{mlp_forward.1} parent=27 // pred_region
        %s215 = smul.u32 %s18, 2
        %s216 = sadd.s32 %s215, %s19
        %s217 = smul.u32 544, %s216
        %p218 = scmp.lt.s32.totalorder %s217, 2175
        %s219 = scalar_select %p218, %s217, 2175
        %s220 = smul.addr %s219, 4
        %s221 = smul.addr %s220, 8
        %s222 = scalar_lea.vmem %s1, %s221
        %s223 = smul.u32 %s18, 2
        %s224 = sadd.s32 %s223, %s19
        %s225 = smul.u32 544, %s224
      $region36: #{mlp_forward.1} parent=27 // pred_fallthru
        _
    $region28: #{mlp_forward.1} parent=5 // pred_fallthru
      _
    %p226 = scmp.le.s32.totalorder 1, %s11
    %p227 = scmp.lt.s32.totalorder %s11, 5
    %p228 = pnand %p226, %p227
    %p229 = pneg %p228
    // Predicated region
    $region37: #{mlp_forward.1} parent=5 // pred_check
      _
    $region38: #{mlp_forward.1} parent=5 // pred_check_branch
      %231 = sbr.rel (%p228) target = $region40
    $region39: #{mlp_forward.1} parent=5 // pred_region
      %s232 = ssub.s32 %s11, 1
      %s233 = smul.u32 %s20, 2
      %s234 = sadd.s32 %s233, %s21
      %s235 = smul.u32 34, %s234
      %p236 = scmp.lt.s32.totalorder %s235, 135
      %s237 = scalar_select %p236, %s235, 135
      %s238 = scalar_lea.vmem %s0, %s237
      %p239 = pneg %p53
      %p240 = pneg %p50
      %s241 = smul.u32 %s20, 2
      %s242 = sadd.s32 %s241, %s21
      %s243 = smul.u32 544, %s242
      %p244 = scmp.lt.s32.totalorder %s243, 2175
      %s245 = scalar_select %p244, %s243, 2175
      %s246 = smul.addr %s245, 4
      %s247 = smul.addr %s246, 8
      %s248 = scalar_lea.vmem %s1, %s247
      %p249 = pneg %p83
      %p250 = pneg %p80
      %p251 = pneg %p104
      %p252 = pneg %p101
      %p253 = pneg %p125
      %p254 = pneg %p122
      %p255 = pneg %p146
      %p256 = pneg %p143
      %p257 = pneg %p172
      %p258 = pneg %p169
      %p259 = scmp.lt.s32.totalorder %s20, 1
      %s260 = scalar_select %p259, %s20, 1
      %s261 = scalar_lea.vmem %s5, %s260
      %s262 = smul.u32 %s20, 2
      %s263 = sadd.s32 %s262, %s21
      %s264 = smul.u32 34, %s263
      %p265 = scmp.lt.s32.totalorder %s264, 135
      %s266 = scalar_select %p265, %s264, 135
      %s267 = scalar_lea.vmem %s0, %s266
      %s268 = smul.u32 %s20, 2
      %s269 = sadd.s32 %s268, %s21
      %s270 = smul.u32 34, %s269
      %s271 = smul.u32 %s20, 2
      %s272 = sadd.s32 %s271, %s21
      %s273 = smul.u32 544, %s272
      %p274 = scmp.lt.s32.totalorder %s273, 2175
      %s275 = scalar_select %p274, %s273, 2175
      %s276 = smul.addr %s275, 4
      %s277 = smul.addr %s276, 8
      %s278 = scalar_lea.vmem %s1, %s277
      %s279 = smul.u32 %s20, 2
      %s280 = sadd.s32 %s279, %s21
      %s281 = smul.u32 544, %s280
      %p282 = scmp.lt.s32.totalorder %s20, 1
      %s283 = scalar_select %p282, %s20, 1
      %s284 = scalar_lea.vmem %s5, %s283
      %p285 = scmp.eq.s32.totalorder %s21, 0
      // Predicated region
      $region41: #{mlp_forward.1} parent=39 // pred_check
        %p286 = pneg %p285
      $region42: #{mlp_forward.1} parent=39 // pred_check_branch
        %288 = sbr.rel (%p286) target = $region44
      $region43: #{mlp_forward.1} parent=39 // pred_region
        %v289 = vlaneseq
        %vm290 = vcmp.ge.s32.totalorder %v289, 0
        %vm291 = vcmp.lt.s32.totalorder %v289, 390
        %vm292 = vmand %vm290, %vm291
        %293 = vst.msk [vmem:[#allocation2] sm:$0xf] %vm292, 0.0
      $region44: #{mlp_forward.1} parent=39 // pred_fallthru
        _
      %v294 = vld [vmem:[#allocation2] sm:$0xf]
      %v295 = vld [vmem:[%s267] sm:$0xff]
      %v296 = vld [vmem:[%s267 + $0x8] sm:$0xff]
      %v297 = vld [vmem:[%s267 + $0x10] sm:$0xff]
      %v298 = vld [vmem:[%s267 + $0x18] sm:$0xff]
      %v299 = vld [vmem:[%s267 + $0x20] sm:$0x3]
      %v300 = vld [vmem:[%s278] sm:$0xff]
      %v301 = vld [vmem:[%s278 + $0x8] sm:$0xff]
      %v302 = vld [vmem:[%s278 + $0x10] sm:$0xff]
      %v303 = vld [vmem:[%s278 + $0x18] sm:$0xff]
      %v304 = vld [vmem:[%s278 + $0x20] sm:$0xff]
      %v305 = vld [vmem:[%s278 + $0x28] sm:$0xff]
      %v306 = vld [vmem:[%s278 + $0x30] sm:$0xff]
      %v307 = vld [vmem:[%s278 + $0x38] sm:$0xff]
      %v308 = vld [vmem:[%s278 + $0x40] sm:$0xff]
      %v309 = vld [vmem:[%s278 + $0x48] sm:$0xff]
      %v310 = vld [vmem:[%s278 + $0x50] sm:$0xff]
      %v311 = vld [vmem:[%s278 + $0x58] sm:$0xff]
      %v312 = vld [vmem:[%s278 + $0x60] sm:$0xff]
      %v313 = vld [vmem:[%s278 + $0x68] sm:$0xff]
      %v314 = vld [vmem:[%s278 + $0x70] sm:$0xff]
      %v315 = vld [vmem:[%s278 + $0x78] sm:$0xff]
      %v316 = vld [vmem:[%s278 + $0x80] sm:$0xff]
      %v317 = vld [vmem:[%s278 + $0x88] sm:$0xff]
      %v318 = vld [vmem:[%s278 + $0x90] sm:$0xff]
      %v319 = vld [vmem:[%s278 + $0x98] sm:$0xff]
      %v320 = vld [vmem:[%s278 + $0xa0] sm:$0xff]
      %v321 = vld [vmem:[%s278 + $0xa8] sm:$0xff]
      %v322 = vld [vmem:[%s278 + $0xb0] sm:$0xff]
      %v323 = vld [vmem:[%s278 + $0xb8] sm:$0xff]
      %v324 = vld [vmem:[%s278 + $0xc0] sm:$0xff]
      %v325 = vld [vmem:[%s278 + $0xc8] sm:$0xff]
      %v326 = vld [vmem:[%s278 + $0xd0] sm:$0xff]
      %v327 = vld [vmem:[%s278 + $0xd8] sm:$0xff]
      %v328 = vld [vmem:[%s278 + $0xe0] sm:$0xff]
      %v329 = vld [vmem:[%s278 + $0xe8] sm:$0xff]
      %v330 = vld [vmem:[%s278 + $0xf0] sm:$0xff]
      %v331 = vld [vmem:[%s278 + $0xf8] sm:$0xff]
      %v332 = vld [vmem:[%s278 + $0x100] sm:$0xff]
      %v333 = vld [vmem:[%s278 + $0x108] sm:$0xff]
      %v334 = vld [vmem:[%s278 + $0x110] sm:$0xff]
      %v335 = vld [vmem:[%s278 + $0x118] sm:$0xff]
      %v336 = vld [vmem:[%s278 + $0x120] sm:$0xff]
      %v337 = vld [vmem:[%s278 + $0x128] sm:$0xff]
      %v338 = vld [vmem:[%s278 + $0x130] sm:$0xff]
      %v339 = vld [vmem:[%s278 + $0x138] sm:$0xff]
      %v340 = vld [vmem:[%s278 + $0x140] sm:$0xff]
      %v341 = vld [vmem:[%s278 + $0x148] sm:$0xff]
      %v342 = vld [vmem:[%s278 + $0x150] sm:$0xff]
      %v343 = vld [vmem:[%s278 + $0x158] sm:$0xff]
      %v344 = vld [vmem:[%s278 + $0x160] sm:$0xff]
      %v345 = vld [vmem:[%s278 + $0x168] sm:$0xff]
      %v346 = vld [vmem:[%s278 + $0x170] sm:$0xff]
      %v347 = vld [vmem:[%s278 + $0x178] sm:$0xff]
      %v348 = vld [vmem:[%s278 + $0x180] sm:$0xff]
      %v349 = vld [vmem:[%s278 + $0x188] sm:$0xff]
      %v350 = vld [vmem:[%s278 + $0x190] sm:$0xff]
      %v351 = vld [vmem:[%s278 + $0x198] sm:$0xff]
      %v352 = vld [vmem:[%s278 + $0x1a0] sm:$0xff]
      %v353 = vld [vmem:[%s278 + $0x1a8] sm:$0xff]
      %v354 = vld [vmem:[%s278 + $0x1b0] sm:$0xff]
      %v355 = vld [vmem:[%s278 + $0x1b8] sm:$0xff]
      %v356 = vld [vmem:[%s278 + $0x1c0] sm:$0xff]
      %v357 = vld [vmem:[%s278 + $0x1c8] sm:$0xff]
      %v358 = vld [vmem:[%s278 + $0x1d0] sm:$0xff]
      %v359 = vld [vmem:[%s278 + $0x1d8] sm:$0xff]
      %v360 = vld [vmem:[%s278 + $0x1e0] sm:$0xff]
      %v361 = vld [vmem:[%s278 + $0x1e8] sm:$0xff]
      %v362 = vld [vmem:[%s278 + $0x1f0] sm:$0xff]
      %v363 = vld [vmem:[%s278 + $0x1f8] sm:$0xff]
      %v364 = vld [vmem:[%s278 + $0x200] sm:$0xff]
      %v365 = vld [vmem:[%s278 + $0x208] sm:$0xff]
      %v366 = vld [vmem:[%s278 + $0x210] sm:$0xff]
      %v367 = vld [vmem:[%s278 + $0x218] sm:$0xff]
      %v368 = vld [vmem:[%s278 + $0x220] sm:$0xff]
      %v369 = vld [vmem:[%s278 + $0x228] sm:$0xff]
      %v370 = vld [vmem:[%s278 + $0x230] sm:$0xff]
      %v371 = vld [vmem:[%s278 + $0x238] sm:$0xff]
      %v372 = vld [vmem:[%s278 + $0x240] sm:$0xff]
      %v373 = vld [vmem:[%s278 + $0x248] sm:$0xff]
      %v374 = vld [vmem:[%s278 + $0x250] sm:$0xff]
      %v375 = vld [vmem:[%s278 + $0x258] sm:$0xff]
      %v376 = vld [vmem:[%s278 + $0x260] sm:$0xff]
      %v377 = vld [vmem:[%s278 + $0x268] sm:$0xff]
      %v378 = vld [vmem:[%s278 + $0x270] sm:$0xff]
      %v379 = vld [vmem:[%s278 + $0x278] sm:$0xff]
      %v380 = vld [vmem:[%s278 + $0x280] sm:$0xff]
      %v381 = vld [vmem:[%s278 + $0x288] sm:$0xff]
      %v382 = vld [vmem:[%s278 + $0x290] sm:$0xff]
      %v383 = vld [vmem:[%s278 + $0x298] sm:$0xff]
      %v384 = vld [vmem:[%s278 + $0x2a0] sm:$0xff]
      %v385 = vld [vmem:[%s278 + $0x2a8] sm:$0xff]
      %v386 = vld [vmem:[%s278 + $0x2b0] sm:$0xff]
      %v387 = vld [vmem:[%s278 + $0x2b8] sm:$0xff]
      %v388 = vld [vmem:[%s278 + $0x2c0] sm:$0xff]
      %v389 = vld [vmem:[%s278 + $0x2c8] sm:$0xff]
      %v390 = vld [vmem:[%s278 + $0x2d0] sm:$0xff]
      %v391 = vld [vmem:[%s278 + $0x2d8] sm:$0xff]
      %v392 = vld [vmem:[%s278 + $0x2e0] sm:$0xff]
      %v393 = vld [vmem:[%s278 + $0x2e8] sm:$0xff]
      %v394 = vld [vmem:[%s278 + $0x2f0] sm:$0xff]
      %v395 = vld [vmem:[%s278 + $0x2f8] sm:$0xff]
      %v396 = vld [vmem:[%s278 + $0x300] sm:$0xff]
      %v397 = vld [vmem:[%s278 + $0x308] sm:$0xff]
      %v398 = vld [vmem:[%s278 + $0x310] sm:$0xff]
      %v399 = vld [vmem:[%s278 + $0x318] sm:$0xff]
      %v400 = vld [vmem:[%s278 + $0x320] sm:$0xff]
      %v401 = vld [vmem:[%s278 + $0x328] sm:$0xff]
      %v402 = vld [vmem:[%s278 + $0x330] sm:$0xff]
      %v403 = vld [vmem:[%s278 + $0x338] sm:$0xff]
      %v404 = vld [vmem:[%s278 + $0x340] sm:$0xff]
      %v405 = vld [vmem:[%s278 + $0x348] sm:$0xff]
      %v406 = vld [vmem:[%s278 + $0x350] sm:$0xff]
      %v407 = vld [vmem:[%s278 + $0x358] sm:$0xff]
      %v408 = vld [vmem:[%s278 + $0x360] sm:$0xff]
      %v409 = vld [vmem:[%s278 + $0x368] sm:$0xff]
      %v410 = vld [vmem:[%s278 + $0x370] sm:$0xff]
      %v411 = vld [vmem:[%s278 + $0x378] sm:$0xff]
      %v412 = vld [vmem:[%s278 + $0x380] sm:$0xff]
      %v413 = vld [vmem:[%s278 + $0x388] sm:$0xff]
      %v414 = vld [vmem:[%s278 + $0x390] sm:$0xff]
      %v415 = vld [vmem:[%s278 + $0x398] sm:$0xff]
      %v416 = vld [vmem:[%s278 + $0x3a0] sm:$0xff]
      %v417 = vld [vmem:[%s278 + $0x3a8] sm:$0xff]
      %v418 = vld [vmem:[%s278 + $0x3b0] sm:$0xff]
      %v419 = vld [vmem:[%s278 + $0x3b8] sm:$0xff]
      %v420 = vld [vmem:[%s278 + $0x3c0] sm:$0xff]
      %v421 = vld [vmem:[%s278 + $0x3c8] sm:$0xff]
      %v422 = vld [vmem:[%s278 + $0x3d0] sm:$0xff]
      %v423 = vld [vmem:[%s278 + $0x3d8] sm:$0xff]
      %v424 = vld [vmem:[%s278 + $0x3e0] sm:$0xff]
      %v425 = vld [vmem:[%s278 + $0x3e8] sm:$0xff]
      %v426 = vld [vmem:[%s278 + $0x3f0] sm:$0xff]
      %v427 = vld [vmem:[%s278 + $0x3f8] sm:$0xff]
      %v428 = vld [vmem:[%s278 + $0x400] sm:$0xff]
      %v429 = vld [vmem:[%s278 + $0x408] sm:$0xff]
      %v430 = vld [vmem:[%s278 + $0x410] sm:$0xff]
      %v431 = vld [vmem:[%s278 + $0x418] sm:$0xff]
      %v432 = vld [vmem:[%s278 + $0x420] sm:$0xff]
      %v433 = vld [vmem:[%s278 + $0x428] sm:$0xff]
      %v434 = vld [vmem:[%s278 + $0x430] sm:$0xff]
      %v435 = vld [vmem:[%s278 + $0x438] sm:$0xff]
      %v436 = vld [vmem:[%s278 + $0x440] sm:$0xff]
      %v437 = vld [vmem:[%s278 + $0x448] sm:$0xff]
      %v438 = vld [vmem:[%s278 + $0x450] sm:$0xff]
      %v439 = vld [vmem:[%s278 + $0x458] sm:$0xff]
      %v440 = vld [vmem:[%s278 + $0x460] sm:$0xff]
      %v441 = vld [vmem:[%s278 + $0x468] sm:$0xff]
      %v442 = vld [vmem:[%s278 + $0x470] sm:$0xff]
      %v443 = vld [vmem:[%s278 + $0x478] sm:$0xff]
      %v444 = vld [vmem:[%s278 + $0x480] sm:$0xff]
      %v445 = vld [vmem:[%s278 + $0x488] sm:$0xff]
      %v446 = vld [vmem:[%s278 + $0x490] sm:$0xff]
      %v447 = vld [vmem:[%s278 + $0x498] sm:$0xff]
      %v448 = vld [vmem:[%s278 + $0x4a0] sm:$0xff]
      %v449 = vld [vmem:[%s278 + $0x4a8] sm:$0xff]
      %v450 = vld [vmem:[%s278 + $0x4b0] sm:$0xff]
      %v451 = vld [vmem:[%s278 + $0x4b8] sm:$0xff]
      %v452 = vld [vmem:[%s278 + $0x4c0] sm:$0xff]
      %v453 = vld [vmem:[%s278 + $0x4c8] sm:$0xff]
      %v454 = vld [vmem:[%s278 + $0x4d0] sm:$0xff]
      %v455 = vld [vmem:[%s278 + $0x4d8] sm:$0xff]
      %v456 = vld [vmem:[%s278 + $0x4e0] sm:$0xff]
      %v457 = vld [vmem:[%s278 + $0x4e8] sm:$0xff]
      %v458 = vld [vmem:[%s278 + $0x4f0] sm:$0xff]
      %v459 = vld [vmem:[%s278 + $0x4f8] sm:$0xff]
      %v460 = vld [vmem:[%s278 + $0x500] sm:$0xff]
      %v461 = vld [vmem:[%s278 + $0x508] sm:$0xff]
      %v462 = vld [vmem:[%s278 + $0x510] sm:$0xff]
      %v463 = vld [vmem:[%s278 + $0x518] sm:$0xff]
      %v464 = vld [vmem:[%s278 + $0x520] sm:$0xff]
      %v465 = vld [vmem:[%s278 + $0x528] sm:$0xff]
      %v466 = vld [vmem:[%s278 + $0x530] sm:$0xff]
      %v467 = vld [vmem:[%s278 + $0x538] sm:$0xff]
      %v468 = vld [vmem:[%s278 + $0x540] sm:$0xff]
      %v469 = vld [vmem:[%s278 + $0x548] sm:$0xff]
      %v470 = vld [vmem:[%s278 + $0x550] sm:$0xff]
      %v471 = vld [vmem:[%s278 + $0x558] sm:$0xff]
      %v472 = vld [vmem:[%s278 + $0x560] sm:$0xff]
      %v473 = vld [vmem:[%s278 + $0x568] sm:$0xff]
      %v474 = vld [vmem:[%s278 + $0x570] sm:$0xff]
      %v475 = vld [vmem:[%s278 + $0x578] sm:$0xff]
      %v476 = vld [vmem:[%s278 + $0x580] sm:$0xff]
      %v477 = vld [vmem:[%s278 + $0x588] sm:$0xff]
      %v478 = vld [vmem:[%s278 + $0x590] sm:$0xff]
      %v479 = vld [vmem:[%s278 + $0x598] sm:$0xff]
      %v480 = vld [vmem:[%s278 + $0x5a0] sm:$0xff]
      %v481 = vld [vmem:[%s278 + $0x5a8] sm:$0xff]
      %v482 = vld [vmem:[%s278 + $0x5b0] sm:$0xff]
      %v483 = vld [vmem:[%s278 + $0x5b8] sm:$0xff]
      %v484 = vld [vmem:[%s278 + $0x5c0] sm:$0xff]
      %v485 = vld [vmem:[%s278 + $0x5c8] sm:$0xff]
      %v486 = vld [vmem:[%s278 + $0x5d0] sm:$0xff]
      %v487 = vld [vmem:[%s278 + $0x5d8] sm:$0xff]
      %v488 = vld [vmem:[%s278 + $0x5e0] sm:$0xff]
      %v489 = vld [vmem:[%s278 + $0x5e8] sm:$0xff]
      %v490 = vld [vmem:[%s278 + $0x5f0] sm:$0xff]
      %v491 = vld [vmem:[%s278 + $0x5f8] sm:$0xff]
      %v492 = vld [vmem:[%s278 + $0x600] sm:$0xff]
      %v493 = vld [vmem:[%s278 + $0x608] sm:$0xff]
      %v494 = vld [vmem:[%s278 + $0x610] sm:$0xff]
      %v495 = vld [vmem:[%s278 + $0x618] sm:$0xff]
      %v496 = vld [vmem:[%s278 + $0x620] sm:$0xff]
      %v497 = vld [vmem:[%s278 + $0x628] sm:$0xff]
      %v498 = vld [vmem:[%s278 + $0x630] sm:$0xff]
      %v499 = vld [vmem:[%s278 + $0x638] sm:$0xff]
      %v500 = vld [vmem:[%s278 + $0x640] sm:$0xff]
      %v501 = vld [vmem:[%s278 + $0x648] sm:$0xff]
      %v502 = vld [vmem:[%s278 + $0x650] sm:$0xff]
      %v503 = vld [vmem:[%s278 + $0x658] sm:$0xff]
      %v504 = vld [vmem:[%s278 + $0x660] sm:$0xff]
      %v505 = vld [vmem:[%s278 + $0x668] sm:$0xff]
      %v506 = vld [vmem:[%s278 + $0x670] sm:$0xff]
      %v507 = vld [vmem:[%s278 + $0x678] sm:$0xff]
      %v508 = vld [vmem:[%s278 + $0x680] sm:$0xff]
      %v509 = vld [vmem:[%s278 + $0x688] sm:$0xff]
      %v510 = vld [vmem:[%s278 + $0x690] sm:$0xff]
      %v511 = vld [vmem:[%s278 + $0x698] sm:$0xff]
      %v512 = vld [vmem:[%s278 + $0x6a0] sm:$0xff]
      %v513 = vld [vmem:[%s278 + $0x6a8] sm:$0xff]
      %v514 = vld [vmem:[%s278 + $0x6b0] sm:$0xff]
      %v515 = vld [vmem:[%s278 + $0x6b8] sm:$0xff]
      %v516 = vld [vmem:[%s278 + $0x6c0] sm:$0xff]
      %v517 = vld [vmem:[%s278 + $0x6c8] sm:$0xff]
      %v518 = vld [vmem:[%s278 + $0x6d0] sm:$0xff]
      %v519 = vld [vmem:[%s278 + $0x6d8] sm:$0xff]
      %v520 = vld [vmem:[%s278 + $0x6e0] sm:$0xff]
      %v521 = vld [vmem:[%s278 + $0x6e8] sm:$0xff]
      %v522 = vld [vmem:[%s278 + $0x6f0] sm:$0xff]
      %v523 = vld [vmem:[%s278 + $0x6f8] sm:$0xff]
      %v524 = vld [vmem:[%s278 + $0x700] sm:$0xff]
      %v525 = vld [vmem:[%s278 + $0x708] sm:$0xff]
      %v526 = vld [vmem:[%s278 + $0x710] sm:$0xff]
      %v527 = vld [vmem:[%s278 + $0x718] sm:$0xff]
      %v528 = vld [vmem:[%s278 + $0x720] sm:$0xff]
      %v529 = vld [vmem:[%s278 + $0x728] sm:$0xff]
      %v530 = vld [vmem:[%s278 + $0x730] sm:$0xff]
      %v531 = vld [vmem:[%s278 + $0x738] sm:$0xff]
      %v532 = vld [vmem:[%s278 + $0x740] sm:$0xff]
      %v533 = vld [vmem:[%s278 + $0x748] sm:$0xff]
      %v534 = vld [vmem:[%s278 + $0x750] sm:$0xff]
      %v535 = vld [vmem:[%s278 + $0x758] sm:$0xff]
      %v536 = vld [vmem:[%s278 + $0x760] sm:$0xff]
      %v537 = vld [vmem:[%s278 + $0x768] sm:$0xff]
      %v538 = vld [vmem:[%s278 + $0x770] sm:$0xff]
      %v539 = vld [vmem:[%s278 + $0x778] sm:$0xff]
      %v540 = vld [vmem:[%s278 + $0x780] sm:$0xff]
      %v541 = vld [vmem:[%s278 + $0x788] sm:$0xff]
      %v542 = vld [vmem:[%s278 + $0x790] sm:$0xff]
      %v543 = vld [vmem:[%s278 + $0x798] sm:$0xff]
      %v544 = vld [vmem:[%s278 + $0x7a0] sm:$0xff]
      %v545 = vld [vmem:[%s278 + $0x7a8] sm:$0xff]
      %v546 = vld [vmem:[%s278 + $0x7b0] sm:$0xff]
      %v547 = vld [vmem:[%s278 + $0x7b8] sm:$0xff]
      %v548 = vld [vmem:[%s278 + $0x7c0] sm:$0xff]
      %v549 = vld [vmem:[%s278 + $0x7c8] sm:$0xff]
      %v550 = vld [vmem:[%s278 + $0x7d0] sm:$0xff]
      %v551 = vld [vmem:[%s278 + $0x7d8] sm:$0xff]
      %v552 = vld [vmem:[%s278 + $0x7e0] sm:$0xff]
      %v553 = vld [vmem:[%s278 + $0x7e8] sm:$0xff]
      %v554 = vld [vmem:[%s278 + $0x7f0] sm:$0xff]
      %v555 = vld [vmem:[%s278 + $0x7f8] sm:$0xff]
      %v556 = vld [vmem:[%s278 + $0x800] sm:$0xff]
      %v557 = vld [vmem:[%s278 + $0x808] sm:$0xff]
      %v558 = vld [vmem:[%s278 + $0x810] sm:$0xff]
      %v559 = vld [vmem:[%s278 + $0x818] sm:$0xff]
      %v560 = vld [vmem:[%s278 + $0x820] sm:$0xff]
      %v561 = vld [vmem:[%s278 + $0x828] sm:$0xff]
      %v562 = vld [vmem:[%s278 + $0x830] sm:$0xff]
      %v563 = vld [vmem:[%s278 + $0x838] sm:$0xff]
      %v564 = vld [vmem:[%s278 + $0x840] sm:$0xff]
      %v565 = vld [vmem:[%s278 + $0x848] sm:$0xff]
      %v566 = vld [vmem:[%s278 + $0x850] sm:$0xff]
      %v567 = vld [vmem:[%s278 + $0x858] sm:$0xff]
      %v568 = vld [vmem:[%s278 + $0x860] sm:$0xff]
      %v569 = vld [vmem:[%s278 + $0x868] sm:$0xff]
      %v570 = vld [vmem:[%s278 + $0x870] sm:$0xff]
      %v571 = vld [vmem:[%s278 + $0x878] sm:$0xff]
      %v572 = vld [vmem:[%s278 + $0x880] sm:$0xff]
      %v573 = vld [vmem:[%s278 + $0x888] sm:$0xff]
      %v574 = vld [vmem:[%s278 + $0x890] sm:$0xff]
      %v575 = vld [vmem:[%s278 + $0x898] sm:$0xff]
      %v576 = vld [vmem:[%s278 + $0x8a0] sm:$0xff]
      %v577 = vld [vmem:[%s278 + $0x8a8] sm:$0xff]
      %v578 = vld [vmem:[%s278 + $0x8b0] sm:$0xff]
      %v579 = vld [vmem:[%s278 + $0x8b8] sm:$0xff]
      %v580 = vld [vmem:[%s278 + $0x8c0] sm:$0xff]
      %v581 = vld [vmem:[%s278 + $0x8c8] sm:$0xff]
      %v582 = vld [vmem:[%s278 + $0x8d0] sm:$0xff]
      %v583 = vld [vmem:[%s278 + $0x8d8] sm:$0xff]
      %v584 = vld [vmem:[%s278 + $0x8e0] sm:$0xff]
      %v585 = vld [vmem:[%s278 + $0x8e8] sm:$0xff]
      %v586 = vld [vmem:[%s278 + $0x8f0] sm:$0xff]
      %v587 = vld [vmem:[%s278 + $0x8f8] sm:$0xff]
      %v588 = vld [vmem:[%s278 + $0x900] sm:$0xff]
      %v589 = vld [vmem:[%s278 + $0x908] sm:$0xff]
      %v590 = vld [vmem:[%s278 + $0x910] sm:$0xff]
      %v591 = vld [vmem:[%s278 + $0x918] sm:$0xff]
      %v592 = vld [vmem:[%s278 + $0x920] sm:$0xff]
      %v593 = vld [vmem:[%s278 + $0x928] sm:$0xff]
      %v594 = vld [vmem:[%s278 + $0x930] sm:$0xff]
      %v595 = vld [vmem:[%s278 + $0x938] sm:$0xff]
      %v596 = vld [vmem:[%s278 + $0x940] sm:$0xff]
      %v597 = vld [vmem:[%s278 + $0x948] sm:$0xff]
      %v598 = vld [vmem:[%s278 + $0x950] sm:$0xff]
      %v599 = vld [vmem:[%s278 + $0x958] sm:$0xff]
      %v600 = vld [vmem:[%s278 + $0x960] sm:$0xff]
      %v601 = vld [vmem:[%s278 + $0x968] sm:$0xff]
      %v602 = vld [vmem:[%s278 + $0x970] sm:$0xff]
      %v603 = vld [vmem:[%s278 + $0x978] sm:$0xff]
      %v604 = vld [vmem:[%s278 + $0x980] sm:$0xff]
      %v605 = vld [vmem:[%s278 + $0x988] sm:$0xff]
      %v606 = vld [vmem:[%s278 + $0x990] sm:$0xff]
      %v607 = vld [vmem:[%s278 + $0x998] sm:$0xff]
      %v608 = vld [vmem:[%s278 + $0x9a0] sm:$0xff]
      %v609 = vld [vmem:[%s278 + $0x9a8] sm:$0xff]
      %v610 = vld [vmem:[%s278 + $0x9b0] sm:$0xff]
      %v611 = vld [vmem:[%s278 + $0x9b8] sm:$0xff]
      %v612 = vld [vmem:[%s278 + $0x9c0] sm:$0xff]
      %v613 = vld [vmem:[%s278 + $0x9c8] sm:$0xff]
      %v614 = vld [vmem:[%s278 + $0x9d0] sm:$0xff]
      %v615 = vld [vmem:[%s278 + $0x9d8] sm:$0xff]
      %v616 = vld [vmem:[%s278 + $0x9e0] sm:$0xff]
      %v617 = vld [vmem:[%s278 + $0x9e8] sm:$0xff]
      %v618 = vld [vmem:[%s278 + $0x9f0] sm:$0xff]
      %v619 = vld [vmem:[%s278 + $0x9f8] sm:$0xff]
      %v620 = vld [vmem:[%s278 + $0xa00] sm:$0xff]
      %v621 = vld [vmem:[%s278 + $0xa08] sm:$0xff]
      %v622 = vld [vmem:[%s278 + $0xa10] sm:$0xff]
      %v623 = vld [vmem:[%s278 + $0xa18] sm:$0xff]
      %v624 = vld [vmem:[%s278 + $0xa20] sm:$0xff]
      %v625 = vld [vmem:[%s278 + $0xa28] sm:$0xff]
      %v626 = vld [vmem:[%s278 + $0xa30] sm:$0xff]
      %v627 = vld [vmem:[%s278 + $0xa38] sm:$0xff]
      %v628 = vld [vmem:[%s278 + $0xa40] sm:$0xff]
      %v629 = vld [vmem:[%s278 + $0xa48] sm:$0xff]
      %v630 = vld [vmem:[%s278 + $0xa50] sm:$0xff]
      %v631 = vld [vmem:[%s278 + $0xa58] sm:$0xff]
      %v632 = vld [vmem:[%s278 + $0xa60] sm:$0xff]
      %v633 = vld [vmem:[%s278 + $0xa68] sm:$0xff]
      %v634 = vld [vmem:[%s278 + $0xa70] sm:$0xff]
      %v635 = vld [vmem:[%s278 + $0xa78] sm:$0xff]
      %v636 = vld [vmem:[%s278 + $0xa80] sm:$0xff]
      %v637 = vld [vmem:[%s278 + $0xa88] sm:$0xff]
      %v638 = vld [vmem:[%s278 + $0xa90] sm:$0xff]
      %v639 = vld [vmem:[%s278 + $0xa98] sm:$0xff]
      %v640 = vld [vmem:[%s278 + $0xaa0] sm:$0xff]
      %v641 = vld [vmem:[%s278 + $0xaa8] sm:$0xff]
      %v642 = vld [vmem:[%s278 + $0xab0] sm:$0xff]
      %v643 = vld [vmem:[%s278 + $0xab8] sm:$0xff]
      %v644 = vld [vmem:[%s278 + $0xac0] sm:$0xff]
      %v645 = vld [vmem:[%s278 + $0xac8] sm:$0xff]
      %v646 = vld [vmem:[%s278 + $0xad0] sm:$0xff]
      %v647 = vld [vmem:[%s278 + $0xad8] sm:$0xff]
      %v648 = vld [vmem:[%s278 + $0xae0] sm:$0xff]
      %v649 = vld [vmem:[%s278 + $0xae8] sm:$0xff]
      %v650 = vld [vmem:[%s278 + $0xaf0] sm:$0xff]
      %v651 = vld [vmem:[%s278 + $0xaf8] sm:$0xff]
      %v652 = vld [vmem:[%s278 + $0xb00] sm:$0xff]
      %v653 = vld [vmem:[%s278 + $0xb08] sm:$0xff]
      %v654 = vld [vmem:[%s278 + $0xb10] sm:$0xff]
      %v655 = vld [vmem:[%s278 + $0xb18] sm:$0xff]
      %v656 = vld [vmem:[%s278 + $0xb20] sm:$0xff]
      %v657 = vld [vmem:[%s278 + $0xb28] sm:$0xff]
      %v658 = vld [vmem:[%s278 + $0xb30] sm:$0xff]
      %v659 = vld [vmem:[%s278 + $0xb38] sm:$0xff]
      %v660 = vld [vmem:[%s278 + $0xb40] sm:$0xff]
      %v661 = vld [vmem:[%s278 + $0xb48] sm:$0xff]
      %v662 = vld [vmem:[%s278 + $0xb50] sm:$0xff]
      %v663 = vld [vmem:[%s278 + $0xb58] sm:$0xff]
      %v664 = vld [vmem:[%s278 + $0xb60] sm:$0xff]
      %v665 = vld [vmem:[%s278 + $0xb68] sm:$0xff]
      %v666 = vld [vmem:[%s278 + $0xb70] sm:$0xff]
      %v667 = vld [vmem:[%s278 + $0xb78] sm:$0xff]
      %v668 = vld [vmem:[%s278 + $0xb80] sm:$0xff]
      %v669 = vld [vmem:[%s278 + $0xb88] sm:$0xff]
      %v670 = vld [vmem:[%s278 + $0xb90] sm:$0xff]
      %v671 = vld [vmem:[%s278 + $0xb98] sm:$0xff]
      %v672 = vld [vmem:[%s278 + $0xba0] sm:$0xff]
      %v673 = vld [vmem:[%s278 + $0xba8] sm:$0xff]
      %v674 = vld [vmem:[%s278 + $0xbb0] sm:$0xff]
      %v675 = vld [vmem:[%s278 + $0xbb8] sm:$0xff]
      %v676 = vld [vmem:[%s278 + $0xbc0] sm:$0xff]
      %v677 = vld [vmem:[%s278 + $0xbc8] sm:$0xff]
      %v678 = vld [vmem:[%s278 + $0xbd0] sm:$0xff]
      %v679 = vld [vmem:[%s278 + $0xbd8] sm:$0xff]
      %v680 = vld [vmem:[%s278 + $0xbe0] sm:$0xff]
      %v681 = vld [vmem:[%s278 + $0xbe8] sm:$0xff]
      %v682 = vld [vmem:[%s278 + $0xbf0] sm:$0xff]
      %v683 = vld [vmem:[%s278 + $0xbf8] sm:$0xff]
      %v684 = vld [vmem:[%s278 + $0xc00] sm:$0xff]
      %v685 = vld [vmem:[%s278 + $0xc08] sm:$0xff]
      %v686 = vld [vmem:[%s278 + $0xc10] sm:$0xff]
      %v687 = vld [vmem:[%s278 + $0xc18] sm:$0xff]
      %v688 = vld [vmem:[%s278 + $0xc20] sm:$0xff]
      %v689 = vld [vmem:[%s278 + $0xc28] sm:$0xff]
      %v690 = vld [vmem:[%s278 + $0xc30] sm:$0xff]
      %v691 = vld [vmem:[%s278 + $0xc38] sm:$0xff]
      %v692 = vld [vmem:[%s278 + $0xc40] sm:$0xff]
      %v693 = vld [vmem:[%s278 + $0xc48] sm:$0xff]
      %v694 = vld [vmem:[%s278 + $0xc50] sm:$0xff]
      %v695 = vld [vmem:[%s278 + $0xc58] sm:$0xff]
      %v696 = vld [vmem:[%s278 + $0xc60] sm:$0xff]
      %v697 = vld [vmem:[%s278 + $0xc68] sm:$0xff]
      %v698 = vld [vmem:[%s278 + $0xc70] sm:$0xff]
      %v699 = vld [vmem:[%s278 + $0xc78] sm:$0xff]
      %v700 = vld [vmem:[%s278 + $0xc80] sm:$0xff]
      %v701 = vld [vmem:[%s278 + $0xc88] sm:$0xff]
      %v702 = vld [vmem:[%s278 + $0xc90] sm:$0xff]
      %v703 = vld [vmem:[%s278 + $0xc98] sm:$0xff]
      %v704 = vld [vmem:[%s278 + $0xca0] sm:$0xff]
      %v705 = vld [vmem:[%s278 + $0xca8] sm:$0xff]
      %v706 = vld [vmem:[%s278 + $0xcb0] sm:$0xff]
      %v707 = vld [vmem:[%s278 + $0xcb8] sm:$0xff]
      %v708 = vld [vmem:[%s278 + $0xcc0] sm:$0xff]
      %v709 = vld [vmem:[%s278 + $0xcc8] sm:$0xff]
      %v710 = vld [vmem:[%s278 + $0xcd0] sm:$0xff]
      %v711 = vld [vmem:[%s278 + $0xcd8] sm:$0xff]
      %v712 = vld [vmem:[%s278 + $0xce0] sm:$0xff]
      %v713 = vld [vmem:[%s278 + $0xce8] sm:$0xff]
      %v714 = vld [vmem:[%s278 + $0xcf0] sm:$0xff]
      %v715 = vld [vmem:[%s278 + $0xcf8] sm:$0xff]
      %v716 = vld [vmem:[%s278 + $0xd00] sm:$0xff]
      %v717 = vld [vmem:[%s278 + $0xd08] sm:$0xff]
      %v718 = vld [vmem:[%s278 + $0xd10] sm:$0xff]
      %v719 = vld [vmem:[%s278 + $0xd18] sm:$0xff]
      %v720 = vld [vmem:[%s278 + $0xd20] sm:$0xff]
      %v721 = vld [vmem:[%s278 + $0xd28] sm:$0xff]
      %v722 = vld [vmem:[%s278 + $0xd30] sm:$0xff]
      %v723 = vld [vmem:[%s278 + $0xd38] sm:$0xff]
      %v724 = vld [vmem:[%s278 + $0xd40] sm:$0xff]
      %v725 = vld [vmem:[%s278 + $0xd48] sm:$0xff]
      %v726 = vld [vmem:[%s278 + $0xd50] sm:$0xff]
      %v727 = vld [vmem:[%s278 + $0xd58] sm:$0xff]
      %v728 = vld [vmem:[%s278 + $0xd60] sm:$0xff]
      %v729 = vld [vmem:[%s278 + $0xd68] sm:$0xff]
      %v730 = vld [vmem:[%s278 + $0xd70] sm:$0xff]
      %v731 = vld [vmem:[%s278 + $0xd78] sm:$0xff]
      %v732 = vld [vmem:[%s278 + $0xd80] sm:$0xff]
      %v733 = vld [vmem:[%s278 + $0xd88] sm:$0xff]
      %v734 = vld [vmem:[%s278 + $0xd90] sm:$0xff]
      %v735 = vld [vmem:[%s278 + $0xd98] sm:$0xff]
      %v736 = vld [vmem:[%s278 + $0xda0] sm:$0xff]
      %v737 = vld [vmem:[%s278 + $0xda8] sm:$0xff]
      %v738 = vld [vmem:[%s278 + $0xdb0] sm:$0xff]
      %v739 = vld [vmem:[%s278 + $0xdb8] sm:$0xff]
      %v740 = vld [vmem:[%s278 + $0xdc0] sm:$0xff]
      %v741 = vld [vmem:[%s278 + $0xdc8] sm:$0xff]
      %v742 = vld [vmem:[%s278 + $0xdd0] sm:$0xff]
      %v743 = vld [vmem:[%s278 + $0xdd8] sm:$0xff]
      %v744 = vld [vmem:[%s278 + $0xde0] sm:$0xff]
      %v745 = vld [vmem:[%s278 + $0xde8] sm:$0xff]
      %v746 = vld [vmem:[%s278 + $0xdf0] sm:$0xff]
      %v747 = vld [vmem:[%s278 + $0xdf8] sm:$0xff]
      %v748 = vld [vmem:[%s278 + $0xe00] sm:$0xff]
      %v749 = vld [vmem:[%s278 + $0xe08] sm:$0xff]
      %v750 = vld [vmem:[%s278 + $0xe10] sm:$0xff]
      %v751 = vld [vmem:[%s278 + $0xe18] sm:$0xff]
      %v752 = vld [vmem:[%s278 + $0xe20] sm:$0xff]
      %v753 = vld [vmem:[%s278 + $0xe28] sm:$0xff]
      %v754 = vld [vmem:[%s278 + $0xe30] sm:$0xff]
      %v755 = vld [vmem:[%s278 + $0xe38] sm:$0xff]
      %v756 = vld [vmem:[%s278 + $0xe40] sm:$0xff]
      %v757 = vld [vmem:[%s278 + $0xe48] sm:$0xff]
      %v758 = vld [vmem:[%s278 + $0xe50] sm:$0xff]
      %v759 = vld [vmem:[%s278 + $0xe58] sm:$0xff]
      %v760 = vld [vmem:[%s278 + $0xe60] sm:$0xff]
      %v761 = vld [vmem:[%s278 + $0xe68] sm:$0xff]
      %v762 = vld [vmem:[%s278 + $0xe70] sm:$0xff]
      %v763 = vld [vmem:[%s278 + $0xe78] sm:$0xff]
      %v764 = vld [vmem:[%s278 + $0xe80] sm:$0xff]
      %v765 = vld [vmem:[%s278 + $0xe88] sm:$0xff]
      %v766 = vld [vmem:[%s278 + $0xe90] sm:$0xff]
      %v767 = vld [vmem:[%s278 + $0xe98] sm:$0xff]
      %v768 = vld [vmem:[%s278 + $0xea0] sm:$0xff]
      %v769 = vld [vmem:[%s278 + $0xea8] sm:$0xff]
      %v770 = vld [vmem:[%s278 + $0xeb0] sm:$0xff]
      %v771 = vld [vmem:[%s278 + $0xeb8] sm:$0xff]
      %v772 = vld [vmem:[%s278 + $0xec0] sm:$0xff]
      %v773 = vld [vmem:[%s278 + $0xec8] sm:$0xff]
      %v774 = vld [vmem:[%s278 + $0xed0] sm:$0xff]
      %v775 = vld [vmem:[%s278 + $0xed8] sm:$0xff]
      %v776 = vld [vmem:[%s278 + $0xee0] sm:$0xff]
      %v777 = vld [vmem:[%s278 + $0xee8] sm:$0xff]
      %v778 = vld [vmem:[%s278 + $0xef0] sm:$0xff]
      %v779 = vld [vmem:[%s278 + $0xef8] sm:$0xff]
      %v780 = vld [vmem:[%s278 + $0xf00] sm:$0xff]
      %v781 = vld [vmem:[%s278 + $0xf08] sm:$0xff]
      %v782 = vld [vmem:[%s278 + $0xf10] sm:$0xff]
      %v783 = vld [vmem:[%s278 + $0xf18] sm:$0xff]
      %v784 = vld [vmem:[%s278 + $0xf20] sm:$0xff]
      %v785 = vld [vmem:[%s278 + $0xf28] sm:$0xff]
      %v786 = vld [vmem:[%s278 + $0xf30] sm:$0xff]
      %v787 = vld [vmem:[%s278 + $0xf38] sm:$0xff]
      %v788 = vld [vmem:[%s278 + $0xf40] sm:$0xff]
      %v789 = vld [vmem:[%s278 + $0xf48] sm:$0xff]
      %v790 = vld [vmem:[%s278 + $0xf50] sm:$0xff]
      %v791 = vld [vmem:[%s278 + $0xf58] sm:$0xff]
      %v792 = vld [vmem:[%s278 + $0xf60] sm:$0xff]
      %v793 = vld [vmem:[%s278 + $0xf68] sm:$0xff]
      %v794 = vld [vmem:[%s278 + $0xf70] sm:$0xff]
      %v795 = vld [vmem:[%s278 + $0xf78] sm:$0xff]
      %v796 = vld [vmem:[%s278 + $0xf80] sm:$0xff]
      %v797 = vld [vmem:[%s278 + $0xf88] sm:$0xff]
      %v798 = vld [vmem:[%s278 + $0xf90] sm:$0xff]
      %v799 = vld [vmem:[%s278 + $0xf98] sm:$0xff]
      %v800 = vld [vmem:[%s278 + $0xfa0] sm:$0xff]
      %v801 = vld [vmem:[%s278 + $0xfa8] sm:$0xff]
      %v802 = vld [vmem:[%s278 + $0xfb0] sm:$0xff]
      %v803 = vld [vmem:[%s278 + $0xfb8] sm:$0xff]
      %v804 = vld [vmem:[%s278 + $0xfc0] sm:$0xff]
      %v805 = vld [vmem:[%s278 + $0xfc8] sm:$0xff]
      %v806 = vld [vmem:[%s278 + $0xfd0] sm:$0xff]
      %v807 = vld [vmem:[%s278 + $0xfd8] sm:$0xff]
      %v808 = vld [vmem:[%s278 + $0xfe0] sm:$0xff]
      %v809 = vld [vmem:[%s278 + $0xfe8] sm:$0xff]
      %v810 = vld [vmem:[%s278 + $0xff0] sm:$0xff]
      %v811 = vld [vmem:[%s278 + $0xff8] sm:$0xff]
      %v812 = vld [vmem:[%s278 + $0x1000] sm:$0xff]
      %v813 = vld [vmem:[%s278 + $0x1008] sm:$0xff]
      %v814 = vld [vmem:[%s278 + $0x1010] sm:$0xff]
      %v815 = vld [vmem:[%s278 + $0x1018] sm:$0xff]
      %v816 = vld [vmem:[%s278 + $0x1020] sm:$0xff]
      %v817 = vld [vmem:[%s278 + $0x1028] sm:$0xff]
      %v818 = vld [vmem:[%s278 + $0x1030] sm:$0xff]
      %v819 = vld [vmem:[%s278 + $0x1038] sm:$0xff]
      %v820 = vld [vmem:[%s278 + $0x1040] sm:$0xff]
      %v821 = vld [vmem:[%s278 + $0x1048] sm:$0xff]
      %v822 = vld [vmem:[%s278 + $0x1050] sm:$0xff]
      %v823 = vld [vmem:[%s278 + $0x1058] sm:$0xff]
      %v824 = vld [vmem:[%s278 + $0x1060] sm:$0xff]
      %v825 = vld [vmem:[%s278 + $0x1068] sm:$0xff]
      %v826 = vld [vmem:[%s278 + $0x1070] sm:$0xff]
      %v827 = vld [vmem:[%s278 + $0x1078] sm:$0xff]
      %v828 = vld [vmem:[%s278 + $0x1080] sm:$0xff]
      %v829 = vld [vmem:[%s278 + $0x1088] sm:$0xff]
      %v830 = vld [vmem:[%s278 + $0x1090] sm:$0xff]
      %v831 = vld [vmem:[%s278 + $0x1098] sm:$0xff]
      %v832 = vld [vmem:[%s278 + $0x10a0] sm:$0xff]
      %v833 = vld [vmem:[%s278 + $0x10a8] sm:$0xff]
      %v834 = vld [vmem:[%s278 + $0x10b0] sm:$0xff]
      %v835 = vld [vmem:[%s278 + $0x10b8] sm:$0xff]
      %v836 = vld [vmem:[%s278 + $0x10c0] sm:$0xff]
      %v837 = vld [vmem:[%s278 + $0x10c8] sm:$0xff]
      %v838 = vld [vmem:[%s278 + $0x10d0] sm:$0xff]
      %v839 = vld [vmem:[%s278 + $0x10d8] sm:$0xff]
      %v840 = vld [vmem:[%s278 + $0x10e0] sm:$0xff]
      %v841 = vld [vmem:[%s278 + $0x10e8] sm:$0xff]
      %v842 = vld [vmem:[%s278 + $0x10f0] sm:$0xff]
      %v843 = vld [vmem:[%s278 + $0x10f8] sm:$0xff]
      %v844 = vld [vmem:[%s278 + $0x1100] sm:$0xff]
      %v845 = vld [vmem:[%s278 + $0x1108] sm:$0xff]
      %v846 = vld [vmem:[%s278 + $0x1110] sm:$0xff]
      %v847 = vld [vmem:[%s278 + $0x1118] sm:$0xff]
      %v848 = vld [vmem:[%s278 + $0x1120] sm:$0xff]
      %v849 = vld [vmem:[%s278 + $0x1128] sm:$0xff]
      %v850 = vld [vmem:[%s278 + $0x1130] sm:$0xff]
      %v851 = vld [vmem:[%s278 + $0x1138] sm:$0xff]
      %v852 = vld [vmem:[%s278 + $0x1140] sm:$0xff]
      %v853 = vld [vmem:[%s278 + $0x1148] sm:$0xff]
      %v854 = vld [vmem:[%s278 + $0x1150] sm:$0xff]
      %v855 = vld [vmem:[%s278 + $0x1158] sm:$0xff]
      %v856 = vld [vmem:[%s278 + $0x1160] sm:$0xff]
      %v857 = vld [vmem:[%s278 + $0x1168] sm:$0xff]
      %v858 = vld [vmem:[%s278 + $0x1170] sm:$0xff]
      %v859 = vld [vmem:[%s278 + $0x1178] sm:$0xff]
      %v860 = vld [vmem:[%s278 + $0x1180] sm:$0xff]
      %v861 = vld [vmem:[%s278 + $0x1188] sm:$0xff]
      %v862 = vld [vmem:[%s278 + $0x1190] sm:$0xff]
      %v863 = vld [vmem:[%s278 + $0x1198] sm:$0xff]
      %v864 = vld [vmem:[%s278 + $0x11a0] sm:$0xff]
      %v865 = vld [vmem:[%s278 + $0x11a8] sm:$0xff]
      %v866 = vld [vmem:[%s278 + $0x11b0] sm:$0xff]
      %v867 = vld [vmem:[%s278 + $0x11b8] sm:$0xff]
      %v868 = vld [vmem:[%s278 + $0x11c0] sm:$0xff]
      %v869 = vld [vmem:[%s278 + $0x11c8] sm:$0xff]
      %v870 = vld [vmem:[%s278 + $0x11d0] sm:$0xff]
      %v871 = vld [vmem:[%s278 + $0x11d8] sm:$0xff]
      %v872 = vld [vmem:[%s278 + $0x11e0] sm:$0xff]
      %v873 = vld [vmem:[%s278 + $0x11e8] sm:$0xff]
      %v874 = vld [vmem:[%s278 + $0x11f0] sm:$0xff]
      %v875 = vld [vmem:[%s278 + $0x11f8] sm:$0xff]
      %v876 = vld [vmem:[%s278 + $0x1200] sm:$0xff]
      %v877 = vld [vmem:[%s278 + $0x1208] sm:$0xff]
      %v878 = vld [vmem:[%s278 + $0x1210] sm:$0xff]
      %v879 = vld [vmem:[%s278 + $0x1218] sm:$0xff]
      %v880 = vld [vmem:[%s278 + $0x1220] sm:$0xff]
      %v881 = vld [vmem:[%s278 + $0x1228] sm:$0xff]
      %v882 = vld [vmem:[%s278 + $0x1230] sm:$0xff]
      %v883 = vld [vmem:[%s278 + $0x1238] sm:$0xff]
      %v884 = vld [vmem:[%s278 + $0x1240] sm:$0xff]
      %v885 = vld [vmem:[%s278 + $0x1248] sm:$0xff]
      %v886 = vld [vmem:[%s278 + $0x1250] sm:$0xff]
      %v887 = vld [vmem:[%s278 + $0x1258] sm:$0xff]
      %v888 = vld [vmem:[%s278 + $0x1260] sm:$0xff]
      %v889 = vld [vmem:[%s278 + $0x1268] sm:$0xff]
      %v890 = vld [vmem:[%s278 + $0x1270] sm:$0xff]
      %v891 = vld [vmem:[%s278 + $0x1278] sm:$0xff]
      %v892 = vld [vmem:[%s278 + $0x1280] sm:$0xff]
      %v893 = vld [vmem:[%s278 + $0x1288] sm:$0xff]
      %v894 = vld [vmem:[%s278 + $0x1290] sm:$0xff]
      %v895 = vld [vmem:[%s278 + $0x1298] sm:$0xff]
      %v896 = vld [vmem:[%s278 + $0x12a0] sm:$0xff]
      %v897 = vld [vmem:[%s278 + $0x12a8] sm:$0xff]
      %v898 = vld [vmem:[%s278 + $0x12b0] sm:$0xff]
      %v899 = vld [vmem:[%s278 + $0x12b8] sm:$0xff]
      %v900 = vld [vmem:[%s278 + $0x12c0] sm:$0xff]
      %v901 = vld [vmem:[%s278 + $0x12c8] sm:$0xff]
      %v902 = vld [vmem:[%s278 + $0x12d0] sm:$0xff]
      %v903 = vld [vmem:[%s278 + $0x12d8] sm:$0xff]
      %v904 = vld [vmem:[%s278 + $0x12e0] sm:$0xff]
      %v905 = vld [vmem:[%s278 + $0x12e8] sm:$0xff]
      %v906 = vld [vmem:[%s278 + $0x12f0] sm:$0xff]
      %v907 = vld [vmem:[%s278 + $0x12f8] sm:$0xff]
      %v908 = vld [vmem:[%s278 + $0x1300] sm:$0xff]
      %v909 = vld [vmem:[%s278 + $0x1308] sm:$0xff]
      %v910 = vld [vmem:[%s278 + $0x1310] sm:$0xff]
      %v911 = vld [vmem:[%s278 + $0x1318] sm:$0xff]
      %v912 = vld [vmem:[%s278 + $0x1320] sm:$0xff]
      %v913 = vld [vmem:[%s278 + $0x1328] sm:$0xff]
      %v914 = vld [vmem:[%s278 + $0x1330] sm:$0xff]
      %v915 = vld [vmem:[%s278 + $0x1338] sm:$0xff]
      %v916 = vld [vmem:[%s278 + $0x1340] sm:$0xff]
      %v917 = vld [vmem:[%s278 + $0x1348] sm:$0xff]
      %v918 = vld [vmem:[%s278 + $0x1350] sm:$0xff]
      %v919 = vld [vmem:[%s278 + $0x1358] sm:$0xff]
      %v920 = vld [vmem:[%s278 + $0x1360] sm:$0xff]
      %v921 = vld [vmem:[%s278 + $0x1368] sm:$0xff]
      %v922 = vld [vmem:[%s278 + $0x1370] sm:$0xff]
      %v923 = vld [vmem:[%s278 + $0x1378] sm:$0xff]
      %v924 = vld [vmem:[%s278 + $0x1380] sm:$0xff]
      %v925 = vld [vmem:[%s278 + $0x1388] sm:$0xff]
      %v926 = vld [vmem:[%s278 + $0x1390] sm:$0xff]
      %v927 = vld [vmem:[%s278 + $0x1398] sm:$0xff]
      %v928 = vld [vmem:[%s278 + $0x13a0] sm:$0xff]
      %v929 = vld [vmem:[%s278 + $0x13a8] sm:$0xff]
      %v930 = vld [vmem:[%s278 + $0x13b0] sm:$0xff]
      %v931 = vld [vmem:[%s278 + $0x13b8] sm:$0xff]
      %v932 = vld [vmem:[%s278 + $0x13c0] sm:$0xff]
      %v933 = vld [vmem:[%s278 + $0x13c8] sm:$0xff]
      %v934 = vld [vmem:[%s278 + $0x13d0] sm:$0xff]
      %v935 = vld [vmem:[%s278 + $0x13d8] sm:$0xff]
      %v936 = vld [vmem:[%s278 + $0x13e0] sm:$0xff]
      %v937 = vld [vmem:[%s278 + $0x13e8] sm:$0xff]
      %v938 = vld [vmem:[%s278 + $0x13f0] sm:$0xff]
      %v939 = vld [vmem:[%s278 + $0x13f8] sm:$0xff]
      %v940 = vld [vmem:[%s278 + $0x1400] sm:$0xff]
      %v941 = vld [vmem:[%s278 + $0x1408] sm:$0xff]
      %v942 = vld [vmem:[%s278 + $0x1410] sm:$0xff]
      %v943 = vld [vmem:[%s278 + $0x1418] sm:$0xff]
      %v944 = vld [vmem:[%s278 + $0x1420] sm:$0xff]
      %v945 = vld [vmem:[%s278 + $0x1428] sm:$0xff]
      %v946 = vld [vmem:[%s278 + $0x1430] sm:$0xff]
      %v947 = vld [vmem:[%s278 + $0x1438] sm:$0xff]
      %v948 = vld [vmem:[%s278 + $0x1440] sm:$0xff]
      %v949 = vld [vmem:[%s278 + $0x1448] sm:$0xff]
      %v950 = vld [vmem:[%s278 + $0x1450] sm:$0xff]
      %v951 = vld [vmem:[%s278 + $0x1458] sm:$0xff]
      %v952 = vld [vmem:[%s278 + $0x1460] sm:$0xff]
      %v953 = vld [vmem:[%s278 + $0x1468] sm:$0xff]
      %v954 = vld [vmem:[%s278 + $0x1470] sm:$0xff]
      %v955 = vld [vmem:[%s278 + $0x1478] sm:$0xff]
      %v956 = vld [vmem:[%s278 + $0x1480] sm:$0xff]
      %v957 = vld [vmem:[%s278 + $0x1488] sm:$0xff]
      %v958 = vld [vmem:[%s278 + $0x1490] sm:$0xff]
      %v959 = vld [vmem:[%s278 + $0x1498] sm:$0xff]
      %v960 = vld [vmem:[%s278 + $0x14a0] sm:$0xff]
      %v961 = vld [vmem:[%s278 + $0x14a8] sm:$0xff]
      %v962 = vld [vmem:[%s278 + $0x14b0] sm:$0xff]
      %v963 = vld [vmem:[%s278 + $0x14b8] sm:$0xff]
      %v964 = vld [vmem:[%s278 + $0x14c0] sm:$0xff]
      %v965 = vld [vmem:[%s278 + $0x14c8] sm:$0xff]
      %v966 = vld [vmem:[%s278 + $0x14d0] sm:$0xff]
      %v967 = vld [vmem:[%s278 + $0x14d8] sm:$0xff]
      %v968 = vld [vmem:[%s278 + $0x14e0] sm:$0xff]
      %v969 = vld [vmem:[%s278 + $0x14e8] sm:$0xff]
      %v970 = vld [vmem:[%s278 + $0x14f0] sm:$0xff]
      %v971 = vld [vmem:[%s278 + $0x14f8] sm:$0xff]
      %v972 = vld [vmem:[%s278 + $0x1500] sm:$0xff]
      %v973 = vld [vmem:[%s278 + $0x1508] sm:$0xff]
      %v974 = vld [vmem:[%s278 + $0x1510] sm:$0xff]
      %v975 = vld [vmem:[%s278 + $0x1518] sm:$0xff]
      %v976 = vld [vmem:[%s278 + $0x1520] sm:$0xff]
      %v977 = vld [vmem:[%s278 + $0x1528] sm:$0xff]
      %v978 = vld [vmem:[%s278 + $0x1530] sm:$0xff]
      %v979 = vld [vmem:[%s278 + $0x1538] sm:$0xff]
      %v980 = vld [vmem:[%s278 + $0x1540] sm:$0xff]
      %v981 = vld [vmem:[%s278 + $0x1548] sm:$0xff]
      %v982 = vld [vmem:[%s278 + $0x1550] sm:$0xff]
      %v983 = vld [vmem:[%s278 + $0x1558] sm:$0xff]
      %v984 = vld [vmem:[%s278 + $0x1560] sm:$0xff]
      %v985 = vld [vmem:[%s278 + $0x1568] sm:$0xff]
      %v986 = vld [vmem:[%s278 + $0x1570] sm:$0xff]
      %v987 = vld [vmem:[%s278 + $0x1578] sm:$0xff]
      %v988 = vld [vmem:[%s278 + $0x1580] sm:$0xff]
      %v989 = vld [vmem:[%s278 + $0x1588] sm:$0xff]
      %v990 = vld [vmem:[%s278 + $0x1590] sm:$0xff]
      %v991 = vld [vmem:[%s278 + $0x1598] sm:$0xff]
      %v992 = vld [vmem:[%s278 + $0x15a0] sm:$0xff]
      %v993 = vld [vmem:[%s278 + $0x15a8] sm:$0xff]
      %v994 = vld [vmem:[%s278 + $0x15b0] sm:$0xff]
      %v995 = vld [vmem:[%s278 + $0x15b8] sm:$0xff]
      %v996 = vld [vmem:[%s278 + $0x15c0] sm:$0xff]
      %v997 = vld [vmem:[%s278 + $0x15c8] sm:$0xff]
      %v998 = vld [vmem:[%s278 + $0x15d0] sm:$0xff]
      %v999 = vld [vmem:[%s278 + $0x15d8] sm:$0xff]
      %v1000 = vld [vmem:[%s278 + $0x15e0] sm:$0xff]
      %v1001 = vld [vmem:[%s278 + $0x15e8] sm:$0xff]
      %v1002 = vld [vmem:[%s278 + $0x15f0] sm:$0xff]
      %v1003 = vld [vmem:[%s278 + $0x15f8] sm:$0xff]
      %v1004 = vld [vmem:[%s278 + $0x1600] sm:$0xff]
      %v1005 = vld [vmem:[%s278 + $0x1608] sm:$0xff]
      %v1006 = vld [vmem:[%s278 + $0x1610] sm:$0xff]
      %v1007 = vld [vmem:[%s278 + $0x1618] sm:$0xff]
      %v1008 = vld [vmem:[%s278 + $0x1620] sm:$0xff]
      %v1009 = vld [vmem:[%s278 + $0x1628] sm:$0xff]
      %v1010 = vld [vmem:[%s278 + $0x1630] sm:$0xff]
      %v1011 = vld [vmem:[%s278 + $0x1638] sm:$0xff]
      %v1012 = vld [vmem:[%s278 + $0x1640] sm:$0xff]
      %v1013 = vld [vmem:[%s278 + $0x1648] sm:$0xff]
      %v1014 = vld [vmem:[%s278 + $0x1650] sm:$0xff]
      %v1015 = vld [vmem:[%s278 + $0x1658] sm:$0xff]
      %v1016 = vld [vmem:[%s278 + $0x1660] sm:$0xff]
      %v1017 = vld [vmem:[%s278 + $0x1668] sm:$0xff]
      %v1018 = vld [vmem:[%s278 + $0x1670] sm:$0xff]
      %v1019 = vld [vmem:[%s278 + $0x1678] sm:$0xff]
      %v1020 = vld [vmem:[%s278 + $0x1680] sm:$0xff]
      %v1021 = vld [vmem:[%s278 + $0x1688] sm:$0xff]
      %v1022 = vld [vmem:[%s278 + $0x1690] sm:$0xff]
      %v1023 = vld [vmem:[%s278 + $0x1698] sm:$0xff]
      %v1024 = vld [vmem:[%s278 + $0x16a0] sm:$0xff]
      %v1025 = vld [vmem:[%s278 + $0x16a8] sm:$0xff]
      %v1026 = vld [vmem:[%s278 + $0x16b0] sm:$0xff]
      %v1027 = vld [vmem:[%s278 + $0x16b8] sm:$0xff]
      %v1028 = vld [vmem:[%s278 + $0x16c0] sm:$0xff]
      %v1029 = vld [vmem:[%s278 + $0x16c8] sm:$0xff]
      %v1030 = vld [vmem:[%s278 + $0x16d0] sm:$0xff]
      %v1031 = vld [vmem:[%s278 + $0x16d8] sm:$0xff]
      %v1032 = vld [vmem:[%s278 + $0x16e0] sm:$0xff]
      %v1033 = vld [vmem:[%s278 + $0x16e8] sm:$0xff]
      %v1034 = vld [vmem:[%s278 + $0x16f0] sm:$0xff]
      %v1035 = vld [vmem:[%s278 + $0x16f8] sm:$0xff]
      %v1036 = vld [vmem:[%s278 + $0x1700] sm:$0xff]
      %v1037 = vld [vmem:[%s278 + $0x1708] sm:$0xff]
      %v1038 = vld [vmem:[%s278 + $0x1710] sm:$0xff]
      %v1039 = vld [vmem:[%s278 + $0x1718] sm:$0xff]
      %v1040 = vld [vmem:[%s278 + $0x1720] sm:$0xff]
      %v1041 = vld [vmem:[%s278 + $0x1728] sm:$0xff]
      %v1042 = vld [vmem:[%s278 + $0x1730] sm:$0xff]
      %v1043 = vld [vmem:[%s278 + $0x1738] sm:$0xff]
      %v1044 = vld [vmem:[%s278 + $0x1740] sm:$0xff]
      %v1045 = vld [vmem:[%s278 + $0x1748] sm:$0xff]
      %v1046 = vld [vmem:[%s278 + $0x1750] sm:$0xff]
      %v1047 = vld [vmem:[%s278 + $0x1758] sm:$0xff]
      %v1048 = vld [vmem:[%s278 + $0x1760] sm:$0xff]
      %v1049 = vld [vmem:[%s278 + $0x1768] sm:$0xff]
      %v1050 = vld [vmem:[%s278 + $0x1770] sm:$0xff]
      %v1051 = vld [vmem:[%s278 + $0x1778] sm:$0xff]
      %v1052 = vld [vmem:[%s278 + $0x1780] sm:$0xff]
      %v1053 = vld [vmem:[%s278 + $0x1788] sm:$0xff]
      %v1054 = vld [vmem:[%s278 + $0x1790] sm:$0xff]
      %v1055 = vld [vmem:[%s278 + $0x1798] sm:$0xff]
      %v1056 = vld [vmem:[%s278 + $0x17a0] sm:$0xff]
      %v1057 = vld [vmem:[%s278 + $0x17a8] sm:$0xff]
      %v1058 = vld [vmem:[%s278 + $0x17b0] sm:$0xff]
      %v1059 = vld [vmem:[%s278 + $0x17b8] sm:$0xff]
      %v1060 = vld [vmem:[%s278 + $0x17c0] sm:$0xff]
      %v1061 = vld [vmem:[%s278 + $0x17c8] sm:$0xff]
      %v1062 = vld [vmem:[%s278 + $0x17d0] sm:$0xff]
      %v1063 = vld [vmem:[%s278 + $0x17d8] sm:$0xff]
      %v1064 = vld [vmem:[%s278 + $0x17e0] sm:$0xff]
      %v1065 = vld [vmem:[%s278 + $0x17e8] sm:$0xff]
      %v1066 = vld [vmem:[%s278 + $0x17f0] sm:$0xff]
      %v1067 = vld [vmem:[%s278 + $0x17f8] sm:$0xff]
      %v1068 = vld [vmem:[%s278 + $0x1800] sm:$0xff]
      %v1069 = vld [vmem:[%s278 + $0x1808] sm:$0xff]
      %v1070 = vld [vmem:[%s278 + $0x1810] sm:$0xff]
      %v1071 = vld [vmem:[%s278 + $0x1818] sm:$0xff]
      %v1072 = vld [vmem:[%s278 + $0x1820] sm:$0xff]
      %v1073 = vld [vmem:[%s278 + $0x1828] sm:$0xff]
      %v1074 = vld [vmem:[%s278 + $0x1830] sm:$0xff]
      %v1075 = vld [vmem:[%s278 + $0x1838] sm:$0xff]
      %v1076 = vld [vmem:[%s278 + $0x1840] sm:$0xff]
      %v1077 = vld [vmem:[%s278 + $0x1848] sm:$0xff]
      %v1078 = vld [vmem:[%s278 + $0x1850] sm:$0xff]
      %v1079 = vld [vmem:[%s278 + $0x1858] sm:$0xff]
      %v1080 = vld [vmem:[%s278 + $0x1860] sm:$0xff]
      %v1081 = vld [vmem:[%s278 + $0x1868] sm:$0xff]
      %v1082 = vld [vmem:[%s278 + $0x1870] sm:$0xff]
      %v1083 = vld [vmem:[%s278 + $0x1878] sm:$0xff]
      %v1084 = vld [vmem:[%s278 + $0x1880] sm:$0xff]
      %v1085 = vld [vmem:[%s278 + $0x1888] sm:$0xff]
      %v1086 = vld [vmem:[%s278 + $0x1890] sm:$0xff]
      %v1087 = vld [vmem:[%s278 + $0x1898] sm:$0xff]
      %v1088 = vld [vmem:[%s278 + $0x18a0] sm:$0xff]
      %v1089 = vld [vmem:[%s278 + $0x18a8] sm:$0xff]
      %v1090 = vld [vmem:[%s278 + $0x18b0] sm:$0xff]
      %v1091 = vld [vmem:[%s278 + $0x18b8] sm:$0xff]
      %v1092 = vld [vmem:[%s278 + $0x18c0] sm:$0xff]
      %v1093 = vld [vmem:[%s278 + $0x18c8] sm:$0xff]
      %v1094 = vld [vmem:[%s278 + $0x18d0] sm:$0xff]
      %v1095 = vld [vmem:[%s278 + $0x18d8] sm:$0xff]
      %v1096 = vld [vmem:[%s278 + $0x18e0] sm:$0xff]
      %v1097 = vld [vmem:[%s278 + $0x18e8] sm:$0xff]
      %v1098 = vld [vmem:[%s278 + $0x18f0] sm:$0xff]
      %v1099 = vld [vmem:[%s278 + $0x18f8] sm:$0xff]
      %v1100 = vld [vmem:[%s278 + $0x1900] sm:$0xff]
      %v1101 = vld [vmem:[%s278 + $0x1908] sm:$0xff]
      %v1102 = vld [vmem:[%s278 + $0x1910] sm:$0xff]
      %v1103 = vld [vmem:[%s278 + $0x1918] sm:$0xff]
      %v1104 = vld [vmem:[%s278 + $0x1920] sm:$0xff]
      %v1105 = vld [vmem:[%s278 + $0x1928] sm:$0xff]
      %v1106 = vld [vmem:[%s278 + $0x1930] sm:$0xff]
      %v1107 = vld [vmem:[%s278 + $0x1938] sm:$0xff]
      %v1108 = vld [vmem:[%s278 + $0x1940] sm:$0xff]
      %v1109 = vld [vmem:[%s278 + $0x1948] sm:$0xff]
      %v1110 = vld [vmem:[%s278 + $0x1950] sm:$0xff]
      %v1111 = vld [vmem:[%s278 + $0x1958] sm:$0xff]
      %v1112 = vld [vmem:[%s278 + $0x1960] sm:$0xff]
      %v1113 = vld [vmem:[%s278 + $0x1968] sm:$0xff]
      %v1114 = vld [vmem:[%s278 + $0x1970] sm:$0xff]
      %v1115 = vld [vmem:[%s278 + $0x1978] sm:$0xff]
      %v1116 = vld [vmem:[%s278 + $0x1980] sm:$0xff]
      %v1117 = vld [vmem:[%s278 + $0x1988] sm:$0xff]
      %v1118 = vld [vmem:[%s278 + $0x1990] sm:$0xff]
      %v1119 = vld [vmem:[%s278 + $0x1998] sm:$0xff]
      %v1120 = vld [vmem:[%s278 + $0x19a0] sm:$0xff]
      %v1121 = vld [vmem:[%s278 + $0x19a8] sm:$0xff]
      %v1122 = vld [vmem:[%s278 + $0x19b0] sm:$0xff]
      %v1123 = vld [vmem:[%s278 + $0x19b8] sm:$0xff]
      %v1124 = vld [vmem:[%s278 + $0x19c0] sm:$0xff]
      %v1125 = vld [vmem:[%s278 + $0x19c8] sm:$0xff]
      %v1126 = vld [vmem:[%s278 + $0x19d0] sm:$0xff]
      %v1127 = vld [vmem:[%s278 + $0x19d8] sm:$0xff]
      %v1128 = vld [vmem:[%s278 + $0x19e0] sm:$0xff]
      %v1129 = vld [vmem:[%s278 + $0x19e8] sm:$0xff]
      %v1130 = vld [vmem:[%s278 + $0x19f0] sm:$0xff]
      %v1131 = vld [vmem:[%s278 + $0x19f8] sm:$0xff]
      %v1132 = vld [vmem:[%s278 + $0x1a00] sm:$0xff]
      %v1133 = vld [vmem:[%s278 + $0x1a08] sm:$0xff]
      %v1134 = vld [vmem:[%s278 + $0x1a10] sm:$0xff]
      %v1135 = vld [vmem:[%s278 + $0x1a18] sm:$0xff]
      %v1136 = vld [vmem:[%s278 + $0x1a20] sm:$0xff]
      %v1137 = vld [vmem:[%s278 + $0x1a28] sm:$0xff]
      %v1138 = vld [vmem:[%s278 + $0x1a30] sm:$0xff]
      %v1139 = vld [vmem:[%s278 + $0x1a38] sm:$0xff]
      %v1140 = vld [vmem:[%s278 + $0x1a40] sm:$0xff]
      %v1141 = vld [vmem:[%s278 + $0x1a48] sm:$0xff]
      %v1142 = vld [vmem:[%s278 + $0x1a50] sm:$0xff]
      %v1143 = vld [vmem:[%s278 + $0x1a58] sm:$0xff]
      %v1144 = vld [vmem:[%s278 + $0x1a60] sm:$0xff]
      %v1145 = vld [vmem:[%s278 + $0x1a68] sm:$0xff]
      %v1146 = vld [vmem:[%s278 + $0x1a70] sm:$0xff]
      %v1147 = vld [vmem:[%s278 + $0x1a78] sm:$0xff]
      %v1148 = vld [vmem:[%s278 + $0x1a80] sm:$0xff]
      %v1149 = vld [vmem:[%s278 + $0x1a88] sm:$0xff]
      %v1150 = vld [vmem:[%s278 + $0x1a90] sm:$0xff]
      %v1151 = vld [vmem:[%s278 + $0x1a98] sm:$0xff]
      %v1152 = vld [vmem:[%s278 + $0x1aa0] sm:$0xff]
      %v1153 = vld [vmem:[%s278 + $0x1aa8] sm:$0xff]
      %v1154 = vld [vmem:[%s278 + $0x1ab0] sm:$0xff]
      %v1155 = vld [vmem:[%s278 + $0x1ab8] sm:$0xff]
      %v1156 = vld [vmem:[%s278 + $0x1ac0] sm:$0xff]
      %v1157 = vld [vmem:[%s278 + $0x1ac8] sm:$0xff]
      %v1158 = vld [vmem:[%s278 + $0x1ad0] sm:$0xff]
      %v1159 = vld [vmem:[%s278 + $0x1ad8] sm:$0xff]
      %v1160 = vld [vmem:[%s278 + $0x1ae0] sm:$0xff]
      %v1161 = vld [vmem:[%s278 + $0x1ae8] sm:$0xff]
      %v1162 = vld [vmem:[%s278 + $0x1af0] sm:$0xff]
      %v1163 = vld [vmem:[%s278 + $0x1af8] sm:$0xff]
      %v1164 = vld [vmem:[%s278 + $0x1b00] sm:$0xff]
      %v1165 = vld [vmem:[%s278 + $0x1b08] sm:$0xff]
      %v1166 = vld [vmem:[%s278 + $0x1b10] sm:$0xff]
      %v1167 = vld [vmem:[%s278 + $0x1b18] sm:$0xff]
      %v1168 = vld [vmem:[%s278 + $0x1b20] sm:$0xff]
      %v1169 = vld [vmem:[%s278 + $0x1b28] sm:$0xff]
      %v1170 = vld [vmem:[%s278 + $0x1b30] sm:$0xff]
      %v1171 = vld [vmem:[%s278 + $0x1b38] sm:$0xff]
      %v1172 = vld [vmem:[%s278 + $0x1b40] sm:$0xff]
      %v1173 = vld [vmem:[%s278 + $0x1b48] sm:$0xff]
      %v1174 = vld [vmem:[%s278 + $0x1b50] sm:$0xff]
      %v1175 = vld [vmem:[%s278 + $0x1b58] sm:$0xff]
      %v1176 = vld [vmem:[%s278 + $0x1b60] sm:$0xff]
      %v1177 = vld [vmem:[%s278 + $0x1b68] sm:$0xff]
      %v1178 = vld [vmem:[%s278 + $0x1b70] sm:$0xff]
      %v1179 = vld [vmem:[%s278 + $0x1b78] sm:$0xff]
      %v1180 = vld [vmem:[%s278 + $0x1b80] sm:$0xff]
      %v1181 = vld [vmem:[%s278 + $0x1b88] sm:$0xff]
      %v1182 = vld [vmem:[%s278 + $0x1b90] sm:$0xff]
      %v1183 = vld [vmem:[%s278 + $0x1b98] sm:$0xff]
      %v1184 = vld [vmem:[%s278 + $0x1ba0] sm:$0xff]
      %v1185 = vld [vmem:[%s278 + $0x1ba8] sm:$0xff]
      %v1186 = vld [vmem:[%s278 + $0x1bb0] sm:$0xff]
      %v1187 = vld [vmem:[%s278 + $0x1bb8] sm:$0xff]
      %v1188 = vld [vmem:[%s278 + $0x1bc0] sm:$0xff]
      %v1189 = vld [vmem:[%s278 + $0x1bc8] sm:$0xff]
      %v1190 = vld [vmem:[%s278 + $0x1bd0] sm:$0xff]
      %v1191 = vld [vmem:[%s278 + $0x1bd8] sm:$0xff]
      %v1192 = vld [vmem:[%s278 + $0x1be0] sm:$0xff]
      %v1193 = vld [vmem:[%s278 + $0x1be8] sm:$0xff]
      %v1194 = vld [vmem:[%s278 + $0x1bf0] sm:$0xff]
      %v1195 = vld [vmem:[%s278 + $0x1bf8] sm:$0xff]
      %v1196 = vld [vmem:[%s278 + $0x1c00] sm:$0xff]
      %v1197 = vld [vmem:[%s278 + $0x1c08] sm:$0xff]
      %v1198 = vld [vmem:[%s278 + $0x1c10] sm:$0xff]
      %v1199 = vld [vmem:[%s278 + $0x1c18] sm:$0xff]
      %v1200 = vld [vmem:[%s278 + $0x1c20] sm:$0xff]
      %v1201 = vld [vmem:[%s278 + $0x1c28] sm:$0xff]
      %v1202 = vld [vmem:[%s278 + $0x1c30] sm:$0xff]
      %v1203 = vld [vmem:[%s278 + $0x1c38] sm:$0xff]
      %v1204 = vld [vmem:[%s278 + $0x1c40] sm:$0xff]
      %v1205 = vld [vmem:[%s278 + $0x1c48] sm:$0xff]
      %v1206 = vld [vmem:[%s278 + $0x1c50] sm:$0xff]
      %v1207 = vld [vmem:[%s278 + $0x1c58] sm:$0xff]
      %v1208 = vld [vmem:[%s278 + $0x1c60] sm:$0xff]
      %v1209 = vld [vmem:[%s278 + $0x1c68] sm:$0xff]
      %v1210 = vld [vmem:[%s278 + $0x1c70] sm:$0xff]
      %v1211 = vld [vmem:[%s278 + $0x1c78] sm:$0xff]
      %v1212 = vld [vmem:[%s278 + $0x1c80] sm:$0xff]
      %v1213 = vld [vmem:[%s278 + $0x1c88] sm:$0xff]
      %v1214 = vld [vmem:[%s278 + $0x1c90] sm:$0xff]
      %v1215 = vld [vmem:[%s278 + $0x1c98] sm:$0xff]
      %v1216 = vld [vmem:[%s278 + $0x1ca0] sm:$0xff]
      %v1217 = vld [vmem:[%s278 + $0x1ca8] sm:$0xff]
      %v1218 = vld [vmem:[%s278 + $0x1cb0] sm:$0xff]
      %v1219 = vld [vmem:[%s278 + $0x1cb8] sm:$0xff]
      %v1220 = vld [vmem:[%s278 + $0x1cc0] sm:$0xff]
      %v1221 = vld [vmem:[%s278 + $0x1cc8] sm:$0xff]
      %v1222 = vld [vmem:[%s278 + $0x1cd0] sm:$0xff]
      %v1223 = vld [vmem:[%s278 + $0x1cd8] sm:$0xff]
      %v1224 = vld [vmem:[%s278 + $0x1ce0] sm:$0xff]
      %v1225 = vld [vmem:[%s278 + $0x1ce8] sm:$0xff]
      %v1226 = vld [vmem:[%s278 + $0x1cf0] sm:$0xff]
      %v1227 = vld [vmem:[%s278 + $0x1cf8] sm:$0xff]
      %v1228 = vld [vmem:[%s278 + $0x1d00] sm:$0xff]
      %v1229 = vld [vmem:[%s278 + $0x1d08] sm:$0xff]
      %v1230 = vld [vmem:[%s278 + $0x1d10] sm:$0xff]
      %v1231 = vld [vmem:[%s278 + $0x1d18] sm:$0xff]
      %v1232 = vld [vmem:[%s278 + $0x1d20] sm:$0xff]
      %v1233 = vld [vmem:[%s278 + $0x1d28] sm:$0xff]
      %v1234 = vld [vmem:[%s278 + $0x1d30] sm:$0xff]
      %v1235 = vld [vmem:[%s278 + $0x1d38] sm:$0xff]
      %v1236 = vld [vmem:[%s278 + $0x1d40] sm:$0xff]
      %v1237 = vld [vmem:[%s278 + $0x1d48] sm:$0xff]
      %v1238 = vld [vmem:[%s278 + $0x1d50] sm:$0xff]
      %v1239 = vld [vmem:[%s278 + $0x1d58] sm:$0xff]
      %v1240 = vld [vmem:[%s278 + $0x1d60] sm:$0xff]
      %v1241 = vld [vmem:[%s278 + $0x1d68] sm:$0xff]
      %v1242 = vld [vmem:[%s278 + $0x1d70] sm:$0xff]
      %v1243 = vld [vmem:[%s278 + $0x1d78] sm:$0xff]
      %v1244 = vld [vmem:[%s278 + $0x1d80] sm:$0xff]
      %v1245 = vld [vmem:[%s278 + $0x1d88] sm:$0xff]
      %v1246 = vld [vmem:[%s278 + $0x1d90] sm:$0xff]
      %v1247 = vld [vmem:[%s278 + $0x1d98] sm:$0xff]
      %v1248 = vld [vmem:[%s278 + $0x1da0] sm:$0xff]
      %v1249 = vld [vmem:[%s278 + $0x1da8] sm:$0xff]
      %v1250 = vld [vmem:[%s278 + $0x1db0] sm:$0xff]
      %v1251 = vld [vmem:[%s278 + $0x1db8] sm:$0xff]
      %v1252 = vld [vmem:[%s278 + $0x1dc0] sm:$0xff]
      %v1253 = vld [vmem:[%s278 + $0x1dc8] sm:$0xff]
      %v1254 = vld [vmem:[%s278 + $0x1dd0] sm:$0xff]
      %v1255 = vld [vmem:[%s278 + $0x1dd8] sm:$0xff]
      %v1256 = vld [vmem:[%s278 + $0x1de0] sm:$0xff]
      %v1257 = vld [vmem:[%s278 + $0x1de8] sm:$0xff]
      %v1258 = vld [vmem:[%s278 + $0x1df0] sm:$0xff]
      %v1259 = vld [vmem:[%s278 + $0x1df8] sm:$0xff]
      %v1260 = vld [vmem:[%s278 + $0x1e00] sm:$0xff]
      %v1261 = vld [vmem:[%s278 + $0x1e08] sm:$0xff]
      %v1262 = vld [vmem:[%s278 + $0x1e10] sm:$0xff]
      %v1263 = vld [vmem:[%s278 + $0x1e18] sm:$0xff]
      %v1264 = vld [vmem:[%s278 + $0x1e20] sm:$0xff]
      %v1265 = vld [vmem:[%s278 + $0x1e28] sm:$0xff]
      %v1266 = vld [vmem:[%s278 + $0x1e30] sm:$0xff]
      %v1267 = vld [vmem:[%s278 + $0x1e38] sm:$0xff]
      %v1268 = vld [vmem:[%s278 + $0x1e40] sm:$0xff]
      %v1269 = vld [vmem:[%s278 + $0x1e48] sm:$0xff]
      %v1270 = vld [vmem:[%s278 + $0x1e50] sm:$0xff]
      %v1271 = vld [vmem:[%s278 + $0x1e58] sm:$0xff]
      %v1272 = vld [vmem:[%s278 + $0x1e60] sm:$0xff]
      %v1273 = vld [vmem:[%s278 + $0x1e68] sm:$0xff]
      %v1274 = vld [vmem:[%s278 + $0x1e70] sm:$0xff]
      %v1275 = vld [vmem:[%s278 + $0x1e78] sm:$0xff]
      %v1276 = vld [vmem:[%s278 + $0x1e80] sm:$0xff]
      %v1277 = vld [vmem:[%s278 + $0x1e88] sm:$0xff]
      %v1278 = vld [vmem:[%s278 + $0x1e90] sm:$0xff]
      %v1279 = vld [vmem:[%s278 + $0x1e98] sm:$0xff]
      %v1280 = vld [vmem:[%s278 + $0x1ea0] sm:$0xff]
      %v1281 = vld [vmem:[%s278 + $0x1ea8] sm:$0xff]
      %v1282 = vld [vmem:[%s278 + $0x1eb0] sm:$0xff]
      %v1283 = vld [vmem:[%s278 + $0x1eb8] sm:$0xff]
      %v1284 = vld [vmem:[%s278 + $0x1ec0] sm:$0xff]
      %v1285 = vld [vmem:[%s278 + $0x1ec8] sm:$0xff]
      %v1286 = vld [vmem:[%s278 + $0x1ed0] sm:$0xff]
      %v1287 = vld [vmem:[%s278 + $0x1ed8] sm:$0xff]
      %v1288 = vld [vmem:[%s278 + $0x1ee0] sm:$0xff]
      %v1289 = vld [vmem:[%s278 + $0x1ee8] sm:$0xff]
      %v1290 = vld [vmem:[%s278 + $0x1ef0] sm:$0xff]
      %v1291 = vld [vmem:[%s278 + $0x1ef8] sm:$0xff]
      %v1292 = vld [vmem:[%s278 + $0x1f00] sm:$0xff]
      %v1293 = vld [vmem:[%s278 + $0x1f08] sm:$0xff]
      %v1294 = vld [vmem:[%s278 + $0x1f10] sm:$0xff]
      %v1295 = vld [vmem:[%s278 + $0x1f18] sm:$0xff]
      %v1296 = vld [vmem:[%s278 + $0x1f20] sm:$0xff]
      %v1297 = vld [vmem:[%s278 + $0x1f28] sm:$0xff]
      %v1298 = vld [vmem:[%s278 + $0x1f30] sm:$0xff]
      %v1299 = vld [vmem:[%s278 + $0x1f38] sm:$0xff]
      %v1300 = vld [vmem:[%s278 + $0x1f40] sm:$0xff]
      %v1301 = vld [vmem:[%s278 + $0x1f48] sm:$0xff]
      %v1302 = vld [vmem:[%s278 + $0x1f50] sm:$0xff]
      %v1303 = vld [vmem:[%s278 + $0x1f58] sm:$0xff]
      %v1304 = vld [vmem:[%s278 + $0x1f60] sm:$0xff]
      %v1305 = vld [vmem:[%s278 + $0x1f68] sm:$0xff]
      %v1306 = vld [vmem:[%s278 + $0x1f70] sm:$0xff]
      %v1307 = vld [vmem:[%s278 + $0x1f78] sm:$0xff]
      %v1308 = vld [vmem:[%s278 + $0x1f80] sm:$0xff]
      %v1309 = vld [vmem:[%s278 + $0x1f88] sm:$0xff]
      %v1310 = vld [vmem:[%s278 + $0x1f90] sm:$0xff]
      %v1311 = vld [vmem:[%s278 + $0x1f98] sm:$0xff]
      %v1312 = vld [vmem:[%s278 + $0x1fa0] sm:$0xff]
      %v1313 = vld [vmem:[%s278 + $0x1fa8] sm:$0xff]
      %v1314 = vld [vmem:[%s278 + $0x1fb0] sm:$0xff]
      %v1315 = vld [vmem:[%s278 + $0x1fb8] sm:$0xff]
      %v1316 = vld [vmem:[%s278 + $0x1fc0] sm:$0xff]
      %v1317 = vld [vmem:[%s278 + $0x1fc8] sm:$0xff]
      %v1318 = vld [vmem:[%s278 + $0x1fd0] sm:$0xff]
      %v1319 = vld [vmem:[%s278 + $0x1fd8] sm:$0xff]
      %v1320 = vld [vmem:[%s278 + $0x1fe0] sm:$0xff]
      %v1321 = vld [vmem:[%s278 + $0x1fe8] sm:$0xff]
      %v1322 = vld [vmem:[%s278 + $0x1ff0] sm:$0xff]
      %v1323 = vld [vmem:[%s278 + $0x1ff8] sm:$0xff]
      %v1324 = vld [vmem:[%s278 + $0x2000] sm:$0xff]
      %v1325 = vld [vmem:[%s278 + $0x2008] sm:$0xff]
      %v1326 = vld [vmem:[%s278 + $0x2010] sm:$0xff]
      %v1327 = vld [vmem:[%s278 + $0x2018] sm:$0xff]
      %v1328 = vld [vmem:[%s278 + $0x2020] sm:$0xff]
      %v1329 = vld [vmem:[%s278 + $0x2028] sm:$0xff]
      %v1330 = vld [vmem:[%s278 + $0x2030] sm:$0xff]
      %v1331 = vld [vmem:[%s278 + $0x2038] sm:$0xff]
      %v1332 = vld [vmem:[%s278 + $0x2040] sm:$0xff]
      %v1333 = vld [vmem:[%s278 + $0x2048] sm:$0xff]
      %v1334 = vld [vmem:[%s278 + $0x2050] sm:$0xff]
      %v1335 = vld [vmem:[%s278 + $0x2058] sm:$0xff]
      %v1336 = vld [vmem:[%s278 + $0x2060] sm:$0xff]
      %v1337 = vld [vmem:[%s278 + $0x2068] sm:$0xff]
      %v1338 = vld [vmem:[%s278 + $0x2070] sm:$0xff]
      %v1339 = vld [vmem:[%s278 + $0x2078] sm:$0xff]
      %v1340 = vld [vmem:[%s278 + $0x2080] sm:$0xff]
      %v1341 = vld [vmem:[%s278 + $0x2088] sm:$0xff]
      %v1342 = vld [vmem:[%s278 + $0x2090] sm:$0xff]
      %v1343 = vld [vmem:[%s278 + $0x2098] sm:$0xff]
      %v1344 = vld [vmem:[%s278 + $0x20a0] sm:$0xff]
      %v1345 = vld [vmem:[%s278 + $0x20a8] sm:$0xff]
      %v1346 = vld [vmem:[%s278 + $0x20b0] sm:$0xff]
      %v1347 = vld [vmem:[%s278 + $0x20b8] sm:$0xff]
      %v1348 = vld [vmem:[%s278 + $0x20c0] sm:$0xff]
      %v1349 = vld [vmem:[%s278 + $0x20c8] sm:$0xff]
      %v1350 = vld [vmem:[%s278 + $0x20d0] sm:$0xff]
      %v1351 = vld [vmem:[%s278 + $0x20d8] sm:$0xff]
      %v1352 = vld [vmem:[%s278 + $0x20e0] sm:$0xff]
      %v1353 = vld [vmem:[%s278 + $0x20e8] sm:$0xff]
      %v1354 = vld [vmem:[%s278 + $0x20f0] sm:$0xff]
      %v1355 = vld [vmem:[%s278 + $0x20f8] sm:$0xff]
      %v1356 = vld [vmem:[%s278 + $0x2100] sm:$0xff]
      %v1357 = vld [vmem:[%s278 + $0x2108] sm:$0xff]
      %v1358 = vld [vmem:[%s278 + $0x2110] sm:$0xff]
      %v1359 = vld [vmem:[%s278 + $0x2118] sm:$0xff]
      %v1360 = vld [vmem:[%s278 + $0x2120] sm:$0xff]
      %v1361 = vld [vmem:[%s278 + $0x2128] sm:$0xff]
      %v1362 = vld [vmem:[%s278 + $0x2130] sm:$0xff]
      %v1363 = vld [vmem:[%s278 + $0x2138] sm:$0xff]
      %v1364 = vld [vmem:[%s278 + $0x2140] sm:$0xff]
      %v1365 = vld [vmem:[%s278 + $0x2148] sm:$0xff]
      %v1366 = vld [vmem:[%s278 + $0x2150] sm:$0xff]
      %v1367 = vld [vmem:[%s278 + $0x2158] sm:$0xff]
      %v1368 = vld [vmem:[%s278 + $0x2160] sm:$0xff]
      %v1369 = vld [vmem:[%s278 + $0x2168] sm:$0xff]
      %v1370 = vld [vmem:[%s278 + $0x2170] sm:$0xff]
      %v1371 = vld [vmem:[%s278 + $0x2178] sm:$0xff]
      %v1372 = vld [vmem:[%s278 + $0x2180] sm:$0xff]
      %v1373 = vld [vmem:[%s278 + $0x2188] sm:$0xff]
      %v1374 = vld [vmem:[%s278 + $0x2190] sm:$0xff]
      %v1375 = vld [vmem:[%s278 + $0x2198] sm:$0xff]
      %v1376 = vld [vmem:[%s278 + $0x21a0] sm:$0xff]
      %v1377 = vld [vmem:[%s278 + $0x21a8] sm:$0xff]
      %v1378 = vld [vmem:[%s278 + $0x21b0] sm:$0xff]
      %v1379 = vld [vmem:[%s278 + $0x21b8] sm:$0xff]
      %v1380 = vld [vmem:[%s278 + $0x21c0] sm:$0xff]
      %v1381 = vld [vmem:[%s278 + $0x21c8] sm:$0xff]
      %v1382 = vld [vmem:[%s278 + $0x21d0] sm:$0xff]
      %v1383 = vld [vmem:[%s278 + $0x21d8] sm:$0xff]
      %v1384 = vld [vmem:[%s278 + $0x21e0] sm:$0xff]
      %v1385 = vld [vmem:[%s278 + $0x21e8] sm:$0xff]
      %v1386 = vld [vmem:[%s278 + $0x21f0] sm:$0xff]
      %v1387 = vld [vmem:[%s278 + $0x21f8] sm:$0xff]
      %v1388 = vld [vmem:[%s278 + $0x2200] sm:$0xff]
      %v1389 = vld [vmem:[%s278 + $0x2208] sm:$0xff]
      %v1390 = vld [vmem:[%s278 + $0x2210] sm:$0xff]
      %v1391 = vld [vmem:[%s278 + $0x2218] sm:$0xff]
      %v1392 = vld [vmem:[%s278 + $0x2220] sm:$0xff]
      %v1393 = vld [vmem:[%s278 + $0x2228] sm:$0xff]
      %v1394 = vld [vmem:[%s278 + $0x2230] sm:$0xff]
      %v1395 = vld [vmem:[%s278 + $0x2238] sm:$0xff]
      %v1396 = vld [vmem:[%s278 + $0x2240] sm:$0xff]
      %v1397 = vld [vmem:[%s278 + $0x2248] sm:$0xff]
      %v1398 = vld [vmem:[%s278 + $0x2250] sm:$0xff]
      %v1399 = vld [vmem:[%s278 + $0x2258] sm:$0xff]
      %v1400 = vld [vmem:[%s278 + $0x2260] sm:$0xff]
      %v1401 = vld [vmem:[%s278 + $0x2268] sm:$0xff]
      %v1402 = vld [vmem:[%s278 + $0x2270] sm:$0xff]
      %v1403 = vld [vmem:[%s278 + $0x2278] sm:$0xff]
      %v1404 = vld [vmem:[%s278 + $0x2280] sm:$0xff]
      %v1405 = vld [vmem:[%s278 + $0x2288] sm:$0xff]
      %v1406 = vld [vmem:[%s278 + $0x2290] sm:$0xff]
      %v1407 = vld [vmem:[%s278 + $0x2298] sm:$0xff]
      %v1408 = vld [vmem:[%s278 + $0x22a0] sm:$0xff]
      %v1409 = vld [vmem:[%s278 + $0x22a8] sm:$0xff]
      %v1410 = vld [vmem:[%s278 + $0x22b0] sm:$0xff]
      %v1411 = vld [vmem:[%s278 + $0x22b8] sm:$0xff]
      %v1412 = vld [vmem:[%s278 + $0x22c0] sm:$0xff]
      %v1413 = vld [vmem:[%s278 + $0x22c8] sm:$0xff]
      %v1414 = vld [vmem:[%s278 + $0x22d0] sm:$0xff]
      %v1415 = vld [vmem:[%s278 + $0x22d8] sm:$0xff]
      %v1416 = vld [vmem:[%s278 + $0x22e0] sm:$0xff]
      %v1417 = vld [vmem:[%s278 + $0x22e8] sm:$0xff]
      %v1418 = vld [vmem:[%s278 + $0x22f0] sm:$0xff]
      %v1419 = vld [vmem:[%s278 + $0x22f8] sm:$0xff]
      %v1420 = vld [vmem:[%s278 + $0x2300] sm:$0xff]
      %v1421 = vld [vmem:[%s278 + $0x2308] sm:$0xff]
      %v1422 = vld [vmem:[%s278 + $0x2310] sm:$0xff]
      %v1423 = vld [vmem:[%s278 + $0x2318] sm:$0xff]
      %v1424 = vld [vmem:[%s278 + $0x2320] sm:$0xff]
      %v1425 = vld [vmem:[%s278 + $0x2328] sm:$0xff]
      %v1426 = vld [vmem:[%s278 + $0x2330] sm:$0xff]
      %v1427 = vld [vmem:[%s278 + $0x2338] sm:$0xff]
      %v1428 = vld [vmem:[%s278 + $0x2340] sm:$0xff]
      %v1429 = vld [vmem:[%s278 + $0x2348] sm:$0xff]
      %v1430 = vld [vmem:[%s278 + $0x2350] sm:$0xff]
      %v1431 = vld [vmem:[%s278 + $0x2358] sm:$0xff]
      %v1432 = vld [vmem:[%s278 + $0x2360] sm:$0xff]
      %v1433 = vld [vmem:[%s278 + $0x2368] sm:$0xff]
      %v1434 = vld [vmem:[%s278 + $0x2370] sm:$0xff]
      %v1435 = vld [vmem:[%s278 + $0x2378] sm:$0xff]
      %v1436 = vld [vmem:[%s278 + $0x2380] sm:$0xff]
      %v1437 = vld [vmem:[%s278 + $0x2388] sm:$0xff]
      %v1438 = vld [vmem:[%s278 + $0x2390] sm:$0xff]
      %v1439 = vld [vmem:[%s278 + $0x2398] sm:$0xff]
      %v1440 = vld [vmem:[%s278 + $0x23a0] sm:$0xff]
      %v1441 = vld [vmem:[%s278 + $0x23a8] sm:$0xff]
      %v1442 = vld [vmem:[%s278 + $0x23b0] sm:$0xff]
      %v1443 = vld [vmem:[%s278 + $0x23b8] sm:$0xff]
      %v1444 = vld [vmem:[%s278 + $0x23c0] sm:$0xff]
      %v1445 = vld [vmem:[%s278 + $0x23c8] sm:$0xff]
      %v1446 = vld [vmem:[%s278 + $0x23d0] sm:$0xff]
      %v1447 = vld [vmem:[%s278 + $0x23d8] sm:$0xff]
      %v1448 = vld [vmem:[%s278 + $0x23e0] sm:$0xff]
      %v1449 = vld [vmem:[%s278 + $0x23e8] sm:$0xff]
      %v1450 = vld [vmem:[%s278 + $0x23f0] sm:$0xff]
      %v1451 = vld [vmem:[%s278 + $0x23f8] sm:$0xff]
      %v1452 = vld [vmem:[%s278 + $0x2400] sm:$0xff]
      %v1453 = vld [vmem:[%s278 + $0x2408] sm:$0xff]
      %v1454 = vld [vmem:[%s278 + $0x2410] sm:$0xff]
      %v1455 = vld [vmem:[%s278 + $0x2418] sm:$0xff]
      %v1456 = vld [vmem:[%s278 + $0x2420] sm:$0xff]
      %v1457 = vld [vmem:[%s278 + $0x2428] sm:$0xff]
      %v1458 = vld [vmem:[%s278 + $0x2430] sm:$0xff]
      %v1459 = vld [vmem:[%s278 + $0x2438] sm:$0xff]
      %v1460 = vld [vmem:[%s278 + $0x2440] sm:$0xff]
      %v1461 = vld [vmem:[%s278 + $0x2448] sm:$0xff]
      %v1462 = vld [vmem:[%s278 + $0x2450] sm:$0xff]
      %v1463 = vld [vmem:[%s278 + $0x2458] sm:$0xff]
      %v1464 = vld [vmem:[%s278 + $0x2460] sm:$0xff]
      %v1465 = vld [vmem:[%s278 + $0x2468] sm:$0xff]
      %v1466 = vld [vmem:[%s278 + $0x2470] sm:$0xff]
      %v1467 = vld [vmem:[%s278 + $0x2478] sm:$0xff]
      %v1468 = vld [vmem:[%s278 + $0x2480] sm:$0xff]
      %v1469 = vld [vmem:[%s278 + $0x2488] sm:$0xff]
      %v1470 = vld [vmem:[%s278 + $0x2490] sm:$0xff]
      %v1471 = vld [vmem:[%s278 + $0x2498] sm:$0xff]
      %v1472 = vld [vmem:[%s278 + $0x24a0] sm:$0xff]
      %v1473 = vld [vmem:[%s278 + $0x24a8] sm:$0xff]
      %v1474 = vld [vmem:[%s278 + $0x24b0] sm:$0xff]
      %v1475 = vld [vmem:[%s278 + $0x24b8] sm:$0xff]
      %v1476 = vld [vmem:[%s278 + $0x24c0] sm:$0xff]
      %v1477 = vld [vmem:[%s278 + $0x24c8] sm:$0xff]
      %v1478 = vld [vmem:[%s278 + $0x24d0] sm:$0xff]
      %v1479 = vld [vmem:[%s278 + $0x24d8] sm:$0xff]
      %v1480 = vld [vmem:[%s278 + $0x24e0] sm:$0xff]
      %v1481 = vld [vmem:[%s278 + $0x24e8] sm:$0xff]
      %v1482 = vld [vmem:[%s278 + $0x24f0] sm:$0xff]
      %v1483 = vld [vmem:[%s278 + $0x24f8] sm:$0xff]
      %v1484 = vld [vmem:[%s278 + $0x2500] sm:$0xff]
      %v1485 = vld [vmem:[%s278 + $0x2508] sm:$0xff]
      %v1486 = vld [vmem:[%s278 + $0x2510] sm:$0xff]
      %v1487 = vld [vmem:[%s278 + $0x2518] sm:$0xff]
      %v1488 = vld [vmem:[%s278 + $0x2520] sm:$0xff]
      %v1489 = vld [vmem:[%s278 + $0x2528] sm:$0xff]
      %v1490 = vld [vmem:[%s278 + $0x2530] sm:$0xff]
      %v1491 = vld [vmem:[%s278 + $0x2538] sm:$0xff]
      %v1492 = vld [vmem:[%s278 + $0x2540] sm:$0xff]
      %v1493 = vld [vmem:[%s278 + $0x2548] sm:$0xff]
      %v1494 = vld [vmem:[%s278 + $0x2550] sm:$0xff]
      %v1495 = vld [vmem:[%s278 + $0x2558] sm:$0xff]
      %v1496 = vld [vmem:[%s278 + $0x2560] sm:$0xff]
      %v1497 = vld [vmem:[%s278 + $0x2568] sm:$0xff]
      %v1498 = vld [vmem:[%s278 + $0x2570] sm:$0xff]
      %v1499 = vld [vmem:[%s278 + $0x2578] sm:$0xff]
      %v1500 = vld [vmem:[%s278 + $0x2580] sm:$0xff]
      %v1501 = vld [vmem:[%s278 + $0x2588] sm:$0xff]
      %v1502 = vld [vmem:[%s278 + $0x2590] sm:$0xff]
      %v1503 = vld [vmem:[%s278 + $0x2598] sm:$0xff]
      %v1504 = vld [vmem:[%s278 + $0x25a0] sm:$0xff]
      %v1505 = vld [vmem:[%s278 + $0x25a8] sm:$0xff]
      %v1506 = vld [vmem:[%s278 + $0x25b0] sm:$0xff]
      %v1507 = vld [vmem:[%s278 + $0x25b8] sm:$0xff]
      %v1508 = vld [vmem:[%s278 + $0x25c0] sm:$0xff]
      %v1509 = vld [vmem:[%s278 + $0x25c8] sm:$0xff]
      %v1510 = vld [vmem:[%s278 + $0x25d0] sm:$0xff]
      %v1511 = vld [vmem:[%s278 + $0x25d8] sm:$0xff]
      %v1512 = vld [vmem:[%s278 + $0x25e0] sm:$0xff]
      %v1513 = vld [vmem:[%s278 + $0x25e8] sm:$0xff]
      %v1514 = vld [vmem:[%s278 + $0x25f0] sm:$0xff]
      %v1515 = vld [vmem:[%s278 + $0x25f8] sm:$0xff]
      %v1516 = vld [vmem:[%s278 + $0x2600] sm:$0xff]
      %v1517 = vld [vmem:[%s278 + $0x2608] sm:$0xff]
      %v1518 = vld [vmem:[%s278 + $0x2610] sm:$0xff]
      %v1519 = vld [vmem:[%s278 + $0x2618] sm:$0xff]
      %v1520 = vld [vmem:[%s278 + $0x2620] sm:$0xff]
      %v1521 = vld [vmem:[%s278 + $0x2628] sm:$0xff]
      %v1522 = vld [vmem:[%s278 + $0x2630] sm:$0xff]
      %v1523 = vld [vmem:[%s278 + $0x2638] sm:$0xff]
      %v1524 = vld [vmem:[%s278 + $0x2640] sm:$0xff]
      %v1525 = vld [vmem:[%s278 + $0x2648] sm:$0xff]
      %v1526 = vld [vmem:[%s278 + $0x2650] sm:$0xff]
      %v1527 = vld [vmem:[%s278 + $0x2658] sm:$0xff]
      %v1528 = vld [vmem:[%s278 + $0x2660] sm:$0xff]
      %v1529 = vld [vmem:[%s278 + $0x2668] sm:$0xff]
      %v1530 = vld [vmem:[%s278 + $0x2670] sm:$0xff]
      %v1531 = vld [vmem:[%s278 + $0x2678] sm:$0xff]
      %v1532 = vld [vmem:[%s278 + $0x2680] sm:$0xff]
      %v1533 = vld [vmem:[%s278 + $0x2688] sm:$0xff]
      %v1534 = vld [vmem:[%s278 + $0x2690] sm:$0xff]
      %v1535 = vld [vmem:[%s278 + $0x2698] sm:$0xff]
      %v1536 = vld [vmem:[%s278 + $0x26a0] sm:$0xff]
      %v1537 = vld [vmem:[%s278 + $0x26a8] sm:$0xff]
      %v1538 = vld [vmem:[%s278 + $0x26b0] sm:$0xff]
      %v1539 = vld [vmem:[%s278 + $0x26b8] sm:$0xff]
      %v1540 = vld [vmem:[%s278 + $0x26c0] sm:$0xff]
      %v1541 = vld [vmem:[%s278 + $0x26c8] sm:$0xff]
      %v1542 = vld [vmem:[%s278 + $0x26d0] sm:$0xff]
      %v1543 = vld [vmem:[%s278 + $0x26d8] sm:$0xff]
      %v1544 = vld [vmem:[%s278 + $0x26e0] sm:$0xff]
      %v1545 = vld [vmem:[%s278 + $0x26e8] sm:$0xff]
      %v1546 = vld [vmem:[%s278 + $0x26f0] sm:$0xff]
      %v1547 = vld [vmem:[%s278 + $0x26f8] sm:$0xff]
      %v1548 = vld [vmem:[%s278 + $0x2700] sm:$0xff]
      %v1549 = vld [vmem:[%s278 + $0x2708] sm:$0xff]
      %v1550 = vld [vmem:[%s278 + $0x2710] sm:$0xff]
      %v1551 = vld [vmem:[%s278 + $0x2718] sm:$0xff]
      %v1552 = vld [vmem:[%s278 + $0x2720] sm:$0xff]
      %v1553 = vld [vmem:[%s278 + $0x2728] sm:$0xff]
      %v1554 = vld [vmem:[%s278 + $0x2730] sm:$0xff]
      %v1555 = vld [vmem:[%s278 + $0x2738] sm:$0xff]
      %v1556 = vld [vmem:[%s278 + $0x2740] sm:$0xff]
      %v1557 = vld [vmem:[%s278 + $0x2748] sm:$0xff]
      %v1558 = vld [vmem:[%s278 + $0x2750] sm:$0xff]
      %v1559 = vld [vmem:[%s278 + $0x2758] sm:$0xff]
      %v1560 = vld [vmem:[%s278 + $0x2760] sm:$0xff]
      %v1561 = vld [vmem:[%s278 + $0x2768] sm:$0xff]
      %v1562 = vld [vmem:[%s278 + $0x2770] sm:$0xff]
      %v1563 = vld [vmem:[%s278 + $0x2778] sm:$0xff]
      %v1564 = vld [vmem:[%s278 + $0x2780] sm:$0xff]
      %v1565 = vld [vmem:[%s278 + $0x2788] sm:$0xff]
      %v1566 = vld [vmem:[%s278 + $0x2790] sm:$0xff]
      %v1567 = vld [vmem:[%s278 + $0x2798] sm:$0xff]
      %v1568 = vld [vmem:[%s278 + $0x27a0] sm:$0xff]
      %v1569 = vld [vmem:[%s278 + $0x27a8] sm:$0xff]
      %v1570 = vld [vmem:[%s278 + $0x27b0] sm:$0xff]
      %v1571 = vld [vmem:[%s278 + $0x27b8] sm:$0xff]
      %v1572 = vld [vmem:[%s278 + $0x27c0] sm:$0xff]
      %v1573 = vld [vmem:[%s278 + $0x27c8] sm:$0xff]
      %v1574 = vld [vmem:[%s278 + $0x27d0] sm:$0xff]
      %v1575 = vld [vmem:[%s278 + $0x27d8] sm:$0xff]
      %v1576 = vld [vmem:[%s278 + $0x27e0] sm:$0xff]
      %v1577 = vld [vmem:[%s278 + $0x27e8] sm:$0xff]
      %v1578 = vld [vmem:[%s278 + $0x27f0] sm:$0xff]
      %v1579 = vld [vmem:[%s278 + $0x27f8] sm:$0xff]
      %v1580 = vld [vmem:[%s278 + $0x2800] sm:$0xff]
      %v1581 = vld [vmem:[%s278 + $0x2808] sm:$0xff]
      %v1582 = vld [vmem:[%s278 + $0x2810] sm:$0xff]
      %v1583 = vld [vmem:[%s278 + $0x2818] sm:$0xff]
      %v1584 = vld [vmem:[%s278 + $0x2820] sm:$0xff]
      %v1585 = vld [vmem:[%s278 + $0x2828] sm:$0xff]
      %v1586 = vld [vmem:[%s278 + $0x2830] sm:$0xff]
      %v1587 = vld [vmem:[%s278 + $0x2838] sm:$0xff]
      %v1588 = vld [vmem:[%s278 + $0x2840] sm:$0xff]
      %v1589 = vld [vmem:[%s278 + $0x2848] sm:$0xff]
      %v1590 = vld [vmem:[%s278 + $0x2850] sm:$0xff]
      %v1591 = vld [vmem:[%s278 + $0x2858] sm:$0xff]
      %v1592 = vld [vmem:[%s278 + $0x2860] sm:$0xff]
      %v1593 = vld [vmem:[%s278 + $0x2868] sm:$0xff]
      %v1594 = vld [vmem:[%s278 + $0x2870] sm:$0xff]
      %v1595 = vld [vmem:[%s278 + $0x2878] sm:$0xff]
      %v1596 = vld [vmem:[%s278 + $0x2880] sm:$0xff]
      %v1597 = vld [vmem:[%s278 + $0x2888] sm:$0xff]
      %v1598 = vld [vmem:[%s278 + $0x2890] sm:$0xff]
      %v1599 = vld [vmem:[%s278 + $0x2898] sm:$0xff]
      %v1600 = vld [vmem:[%s278 + $0x28a0] sm:$0xff]
      %v1601 = vld [vmem:[%s278 + $0x28a8] sm:$0xff]
      %v1602 = vld [vmem:[%s278 + $0x28b0] sm:$0xff]
      %v1603 = vld [vmem:[%s278 + $0x28b8] sm:$0xff]
      %v1604 = vld [vmem:[%s278 + $0x28c0] sm:$0xff]
      %v1605 = vld [vmem:[%s278 + $0x28c8] sm:$0xff]
      %v1606 = vld [vmem:[%s278 + $0x28d0] sm:$0xff]
      %v1607 = vld [vmem:[%s278 + $0x28d8] sm:$0xff]
      %v1608 = vld [vmem:[%s278 + $0x28e0] sm:$0xff]
      %v1609 = vld [vmem:[%s278 + $0x28e8] sm:$0xff]
      %v1610 = vld [vmem:[%s278 + $0x28f0] sm:$0xff]
      %v1611 = vld [vmem:[%s278 + $0x28f8] sm:$0xff]
      %v1612 = vld [vmem:[%s278 + $0x2900] sm:$0xff]
      %v1613 = vld [vmem:[%s278 + $0x2908] sm:$0xff]
      %v1614 = vld [vmem:[%s278 + $0x2910] sm:$0xff]
      %v1615 = vld [vmem:[%s278 + $0x2918] sm:$0xff]
      %v1616 = vld [vmem:[%s278 + $0x2920] sm:$0xff]
      %v1617 = vld [vmem:[%s278 + $0x2928] sm:$0xff]
      %v1618 = vld [vmem:[%s278 + $0x2930] sm:$0xff]
      %v1619 = vld [vmem:[%s278 + $0x2938] sm:$0xff]
      %v1620 = vld [vmem:[%s278 + $0x2940] sm:$0xff]
      %v1621 = vld [vmem:[%s278 + $0x2948] sm:$0xff]
      %v1622 = vld [vmem:[%s278 + $0x2950] sm:$0xff]
      %v1623 = vld [vmem:[%s278 + $0x2958] sm:$0xff]
      %v1624 = vld [vmem:[%s278 + $0x2960] sm:$0xff]
      %v1625 = vld [vmem:[%s278 + $0x2968] sm:$0xff]
      %v1626 = vld [vmem:[%s278 + $0x2970] sm:$0xff]
      %v1627 = vld [vmem:[%s278 + $0x2978] sm:$0xff]
      %v1628 = vld [vmem:[%s278 + $0x2980] sm:$0xff]
      %v1629 = vld [vmem:[%s278 + $0x2988] sm:$0xff]
      %v1630 = vld [vmem:[%s278 + $0x2990] sm:$0xff]
      %v1631 = vld [vmem:[%s278 + $0x2998] sm:$0xff]
      %v1632 = vld [vmem:[%s278 + $0x29a0] sm:$0xff]
      %v1633 = vld [vmem:[%s278 + $0x29a8] sm:$0xff]
      %v1634 = vld [vmem:[%s278 + $0x29b0] sm:$0xff]
      %v1635 = vld [vmem:[%s278 + $0x29b8] sm:$0xff]
      %v1636 = vld [vmem:[%s278 + $0x29c0] sm:$0xff]
      %v1637 = vld [vmem:[%s278 + $0x29c8] sm:$0xff]
      %v1638 = vld [vmem:[%s278 + $0x29d0] sm:$0xff]
      %v1639 = vld [vmem:[%s278 + $0x29d8] sm:$0xff]
      %v1640 = vld [vmem:[%s278 + $0x29e0] sm:$0xff]
      %v1641 = vld [vmem:[%s278 + $0x29e8] sm:$0xff]
      %v1642 = vld [vmem:[%s278 + $0x29f0] sm:$0xff]
      %v1643 = vld [vmem:[%s278 + $0x29f8] sm:$0xff]
      %v1644 = vld [vmem:[%s278 + $0x2a00] sm:$0xff]
      %v1645 = vld [vmem:[%s278 + $0x2a08] sm:$0xff]
      %v1646 = vld [vmem:[%s278 + $0x2a10] sm:$0xff]
      %v1647 = vld [vmem:[%s278 + $0x2a18] sm:$0xff]
      %v1648 = vld [vmem:[%s278 + $0x2a20] sm:$0xff]
      %v1649 = vld [vmem:[%s278 + $0x2a28] sm:$0xff]
      %v1650 = vld [vmem:[%s278 + $0x2a30] sm:$0xff]
      %v1651 = vld [vmem:[%s278 + $0x2a38] sm:$0xff]
      %v1652 = vld [vmem:[%s278 + $0x2a40] sm:$0xff]
      %v1653 = vld [vmem:[%s278 + $0x2a48] sm:$0xff]
      %v1654 = vld [vmem:[%s278 + $0x2a50] sm:$0xff]
      %v1655 = vld [vmem:[%s278 + $0x2a58] sm:$0xff]
      %v1656 = vld [vmem:[%s278 + $0x2a60] sm:$0xff]
      %v1657 = vld [vmem:[%s278 + $0x2a68] sm:$0xff]
      %v1658 = vld [vmem:[%s278 + $0x2a70] sm:$0xff]
      %v1659 = vld [vmem:[%s278 + $0x2a78] sm:$0xff]
      %v1660 = vld [vmem:[%s278 + $0x2a80] sm:$0xff]
      %v1661 = vld [vmem:[%s278 + $0x2a88] sm:$0xff]
      %v1662 = vld [vmem:[%s278 + $0x2a90] sm:$0xff]
      %v1663 = vld [vmem:[%s278 + $0x2a98] sm:$0xff]
      %v1664 = vld [vmem:[%s278 + $0x2aa0] sm:$0xff]
      %v1665 = vld [vmem:[%s278 + $0x2aa8] sm:$0xff]
      %v1666 = vld [vmem:[%s278 + $0x2ab0] sm:$0xff]
      %v1667 = vld [vmem:[%s278 + $0x2ab8] sm:$0xff]
      %v1668 = vld [vmem:[%s278 + $0x2ac0] sm:$0xff]
      %v1669 = vld [vmem:[%s278 + $0x2ac8] sm:$0xff]
      %v1670 = vld [vmem:[%s278 + $0x2ad0] sm:$0xff]
      %v1671 = vld [vmem:[%s278 + $0x2ad8] sm:$0xff]
      %v1672 = vld [vmem:[%s278 + $0x2ae0] sm:$0xff]
      %v1673 = vld [vmem:[%s278 + $0x2ae8] sm:$0xff]
      %v1674 = vld [vmem:[%s278 + $0x2af0] sm:$0xff]
      %v1675 = vld [vmem:[%s278 + $0x2af8] sm:$0xff]
      %v1676 = vld [vmem:[%s278 + $0x2b00] sm:$0xff]
      %v1677 = vld [vmem:[%s278 + $0x2b08] sm:$0xff]
      %v1678 = vld [vmem:[%s278 + $0x2b10] sm:$0xff]
      %v1679 = vld [vmem:[%s278 + $0x2b18] sm:$0xff]
      %v1680 = vld [vmem:[%s278 + $0x2b20] sm:$0xff]
      %v1681 = vld [vmem:[%s278 + $0x2b28] sm:$0xff]
      %v1682 = vld [vmem:[%s278 + $0x2b30] sm:$0xff]
      %v1683 = vld [vmem:[%s278 + $0x2b38] sm:$0xff]
      %v1684 = vld [vmem:[%s278 + $0x2b40] sm:$0xff]
      %v1685 = vld [vmem:[%s278 + $0x2b48] sm:$0xff]
      %v1686 = vld [vmem:[%s278 + $0x2b50] sm:$0xff]
      %v1687 = vld [vmem:[%s278 + $0x2b58] sm:$0xff]
      %v1688 = vld [vmem:[%s278 + $0x2b60] sm:$0xff]
      %v1689 = vld [vmem:[%s278 + $0x2b68] sm:$0xff]
      %v1690 = vld [vmem:[%s278 + $0x2b70] sm:$0xff]
      %v1691 = vld [vmem:[%s278 + $0x2b78] sm:$0xff]
      %v1692 = vld [vmem:[%s278 + $0x2b80] sm:$0xff]
      %v1693 = vld [vmem:[%s278 + $0x2b88] sm:$0xff]
      %v1694 = vld [vmem:[%s278 + $0x2b90] sm:$0xff]
      %v1695 = vld [vmem:[%s278 + $0x2b98] sm:$0xff]
      %v1696 = vld [vmem:[%s278 + $0x2ba0] sm:$0xff]
      %v1697 = vld [vmem:[%s278 + $0x2ba8] sm:$0xff]
      %v1698 = vld [vmem:[%s278 + $0x2bb0] sm:$0xff]
      %v1699 = vld [vmem:[%s278 + $0x2bb8] sm:$0xff]
      %v1700 = vld [vmem:[%s278 + $0x2bc0] sm:$0xff]
      %v1701 = vld [vmem:[%s278 + $0x2bc8] sm:$0xff]
      %v1702 = vld [vmem:[%s278 + $0x2bd0] sm:$0xff]
      %v1703 = vld [vmem:[%s278 + $0x2bd8] sm:$0xff]
      %v1704 = vld [vmem:[%s278 + $0x2be0] sm:$0xff]
      %v1705 = vld [vmem:[%s278 + $0x2be8] sm:$0xff]
      %v1706 = vld [vmem:[%s278 + $0x2bf0] sm:$0xff]
      %v1707 = vld [vmem:[%s278 + $0x2bf8] sm:$0xff]
      %v1708 = vld [vmem:[%s278 + $0x2c00] sm:$0xff]
      %v1709 = vld [vmem:[%s278 + $0x2c08] sm:$0xff]
      %v1710 = vld [vmem:[%s278 + $0x2c10] sm:$0xff]
      %v1711 = vld [vmem:[%s278 + $0x2c18] sm:$0xff]
      %v1712 = vld [vmem:[%s278 + $0x2c20] sm:$0xff]
      %v1713 = vld [vmem:[%s278 + $0x2c28] sm:$0xff]
      %v1714 = vld [vmem:[%s278 + $0x2c30] sm:$0xff]
      %v1715 = vld [vmem:[%s278 + $0x2c38] sm:$0xff]
      %v1716 = vld [vmem:[%s278 + $0x2c40] sm:$0xff]
      %v1717 = vld [vmem:[%s278 + $0x2c48] sm:$0xff]
      %v1718 = vld [vmem:[%s278 + $0x2c50] sm:$0xff]
      %v1719 = vld [vmem:[%s278 + $0x2c58] sm:$0xff]
      %v1720 = vld [vmem:[%s278 + $0x2c60] sm:$0xff]
      %v1721 = vld [vmem:[%s278 + $0x2c68] sm:$0xff]
      %v1722 = vld [vmem:[%s278 + $0x2c70] sm:$0xff]
      %v1723 = vld [vmem:[%s278 + $0x2c78] sm:$0xff]
      %v1724 = vld [vmem:[%s278 + $0x2c80] sm:$0xff]
      %v1725 = vld [vmem:[%s278 + $0x2c88] sm:$0xff]
      %v1726 = vld [vmem:[%s278 + $0x2c90] sm:$0xff]
      %v1727 = vld [vmem:[%s278 + $0x2c98] sm:$0xff]
      %v1728 = vld [vmem:[%s278 + $0x2ca0] sm:$0xff]
      %v1729 = vld [vmem:[%s278 + $0x2ca8] sm:$0xff]
      %v1730 = vld [vmem:[%s278 + $0x2cb0] sm:$0xff]
      %v1731 = vld [vmem:[%s278 + $0x2cb8] sm:$0xff]
      %v1732 = vld [vmem:[%s278 + $0x2cc0] sm:$0xff]
      %v1733 = vld [vmem:[%s278 + $0x2cc8] sm:$0xff]
      %v1734 = vld [vmem:[%s278 + $0x2cd0] sm:$0xff]
      %v1735 = vld [vmem:[%s278 + $0x2cd8] sm:$0xff]
      %v1736 = vld [vmem:[%s278 + $0x2ce0] sm:$0xff]
      %v1737 = vld [vmem:[%s278 + $0x2ce8] sm:$0xff]
      %v1738 = vld [vmem:[%s278 + $0x2cf0] sm:$0xff]
      %v1739 = vld [vmem:[%s278 + $0x2cf8] sm:$0xff]
      %v1740 = vld [vmem:[%s278 + $0x2d00] sm:$0xff]
      %v1741 = vld [vmem:[%s278 + $0x2d08] sm:$0xff]
      %v1742 = vld [vmem:[%s278 + $0x2d10] sm:$0xff]
      %v1743 = vld [vmem:[%s278 + $0x2d18] sm:$0xff]
      %v1744 = vld [vmem:[%s278 + $0x2d20] sm:$0xff]
      %v1745 = vld [vmem:[%s278 + $0x2d28] sm:$0xff]
      %v1746 = vld [vmem:[%s278 + $0x2d30] sm:$0xff]
      %v1747 = vld [vmem:[%s278 + $0x2d38] sm:$0xff]
      %v1748 = vld [vmem:[%s278 + $0x2d40] sm:$0xff]
      %v1749 = vld [vmem:[%s278 + $0x2d48] sm:$0xff]
      %v1750 = vld [vmem:[%s278 + $0x2d50] sm:$0xff]
      %v1751 = vld [vmem:[%s278 + $0x2d58] sm:$0xff]
      %v1752 = vld [vmem:[%s278 + $0x2d60] sm:$0xff]
      %v1753 = vld [vmem:[%s278 + $0x2d68] sm:$0xff]
      %v1754 = vld [vmem:[%s278 + $0x2d70] sm:$0xff]
      %v1755 = vld [vmem:[%s278 + $0x2d78] sm:$0xff]
      %v1756 = vld [vmem:[%s278 + $0x2d80] sm:$0xff]
      %v1757 = vld [vmem:[%s278 + $0x2d88] sm:$0xff]
      %v1758 = vld [vmem:[%s278 + $0x2d90] sm:$0xff]
      %v1759 = vld [vmem:[%s278 + $0x2d98] sm:$0xff]
      %v1760 = vld [vmem:[%s278 + $0x2da0] sm:$0xff]
      %v1761 = vld [vmem:[%s278 + $0x2da8] sm:$0xff]
      %v1762 = vld [vmem:[%s278 + $0x2db0] sm:$0xff]
      %v1763 = vld [vmem:[%s278 + $0x2db8] sm:$0xff]
      %v1764 = vld [vmem:[%s278 + $0x2dc0] sm:$0xff]
      %v1765 = vld [vmem:[%s278 + $0x2dc8] sm:$0xff]
      %v1766 = vld [vmem:[%s278 + $0x2dd0] sm:$0xff]
      %v1767 = vld [vmem:[%s278 + $0x2dd8] sm:$0xff]
      %v1768 = vld [vmem:[%s278 + $0x2de0] sm:$0xff]
      %v1769 = vld [vmem:[%s278 + $0x2de8] sm:$0xff]
      %v1770 = vld [vmem:[%s278 + $0x2df0] sm:$0xff]
      %v1771 = vld [vmem:[%s278 + $0x2df8] sm:$0xff]
      %v1772 = vld [vmem:[%s278 + $0x2e00] sm:$0xff]
      %v1773 = vld [vmem:[%s278 + $0x2e08] sm:$0xff]
      %v1774 = vld [vmem:[%s278 + $0x2e10] sm:$0xff]
      %v1775 = vld [vmem:[%s278 + $0x2e18] sm:$0xff]
      %v1776 = vld [vmem:[%s278 + $0x2e20] sm:$0xff]
      %v1777 = vld [vmem:[%s278 + $0x2e28] sm:$0xff]
      %v1778 = vld [vmem:[%s278 + $0x2e30] sm:$0xff]
      %v1779 = vld [vmem:[%s278 + $0x2e38] sm:$0xff]
      %v1780 = vld [vmem:[%s278 + $0x2e40] sm:$0xff]
      %v1781 = vld [vmem:[%s278 + $0x2e48] sm:$0xff]
      %v1782 = vld [vmem:[%s278 + $0x2e50] sm:$0xff]
      %v1783 = vld [vmem:[%s278 + $0x2e58] sm:$0xff]
      %v1784 = vld [vmem:[%s278 + $0x2e60] sm:$0xff]
      %v1785 = vld [vmem:[%s278 + $0x2e68] sm:$0xff]
      %v1786 = vld [vmem:[%s278 + $0x2e70] sm:$0xff]
      %v1787 = vld [vmem:[%s278 + $0x2e78] sm:$0xff]
      %v1788 = vld [vmem:[%s278 + $0x2e80] sm:$0xff]
      %v1789 = vld [vmem:[%s278 + $0x2e88] sm:$0xff]
      %v1790 = vld [vmem:[%s278 + $0x2e90] sm:$0xff]
      %v1791 = vld [vmem:[%s278 + $0x2e98] sm:$0xff]
      %v1792 = vld [vmem:[%s278 + $0x2ea0] sm:$0xff]
      %v1793 = vld [vmem:[%s278 + $0x2ea8] sm:$0xff]
      %v1794 = vld [vmem:[%s278 + $0x2eb0] sm:$0xff]
      %v1795 = vld [vmem:[%s278 + $0x2eb8] sm:$0xff]
      %v1796 = vld [vmem:[%s278 + $0x2ec0] sm:$0xff]
      %v1797 = vld [vmem:[%s278 + $0x2ec8] sm:$0xff]
      %v1798 = vld [vmem:[%s278 + $0x2ed0] sm:$0xff]
      %v1799 = vld [vmem:[%s278 + $0x2ed8] sm:$0xff]
      %v1800 = vld [vmem:[%s278 + $0x2ee0] sm:$0xff]
      %v1801 = vld [vmem:[%s278 + $0x2ee8] sm:$0xff]
      %v1802 = vld [vmem:[%s278 + $0x2ef0] sm:$0xff]
      %v1803 = vld [vmem:[%s278 + $0x2ef8] sm:$0xff]
      %v1804 = vld [vmem:[%s278 + $0x2f00] sm:$0xff]
      %v1805 = vld [vmem:[%s278 + $0x2f08] sm:$0xff]
      %v1806 = vld [vmem:[%s278 + $0x2f10] sm:$0xff]
      %v1807 = vld [vmem:[%s278 + $0x2f18] sm:$0xff]
      %v1808 = vld [vmem:[%s278 + $0x2f20] sm:$0xff]
      %v1809 = vld [vmem:[%s278 + $0x2f28] sm:$0xff]
      %v1810 = vld [vmem:[%s278 + $0x2f30] sm:$0xff]
      %v1811 = vld [vmem:[%s278 + $0x2f38] sm:$0xff]
      %v1812 = vld [vmem:[%s278 + $0x2f40] sm:$0xff]
      %v1813 = vld [vmem:[%s278 + $0x2f48] sm:$0xff]
      %v1814 = vld [vmem:[%s278 + $0x2f50] sm:$0xff]
      %v1815 = vld [vmem:[%s278 + $0x2f58] sm:$0xff]
      %v1816 = vld [vmem:[%s278 + $0x2f60] sm:$0xff]
      %v1817 = vld [vmem:[%s278 + $0x2f68] sm:$0xff]
      %v1818 = vld [vmem:[%s278 + $0x2f70] sm:$0xff]
      %v1819 = vld [vmem:[%s278 + $0x2f78] sm:$0xff]
      %v1820 = vld [vmem:[%s278 + $0x2f80] sm:$0xff]
      %v1821 = vld [vmem:[%s278 + $0x2f88] sm:$0xff]
      %v1822 = vld [vmem:[%s278 + $0x2f90] sm:$0xff]
      %v1823 = vld [vmem:[%s278 + $0x2f98] sm:$0xff]
      %v1824 = vld [vmem:[%s278 + $0x2fa0] sm:$0xff]
      %v1825 = vld [vmem:[%s278 + $0x2fa8] sm:$0xff]
      %v1826 = vld [vmem:[%s278 + $0x2fb0] sm:$0xff]
      %v1827 = vld [vmem:[%s278 + $0x2fb8] sm:$0xff]
      %v1828 = vld [vmem:[%s278 + $0x2fc0] sm:$0xff]
      %v1829 = vld [vmem:[%s278 + $0x2fc8] sm:$0xff]
      %v1830 = vld [vmem:[%s278 + $0x2fd0] sm:$0xff]
      %v1831 = vld [vmem:[%s278 + $0x2fd8] sm:$0xff]
      %v1832 = vld [vmem:[%s278 + $0x2fe0] sm:$0xff]
      %v1833 = vld [vmem:[%s278 + $0x2fe8] sm:$0xff]
      %v1834 = vld [vmem:[%s278 + $0x2ff0] sm:$0xff]
      %v1835 = vld [vmem:[%s278 + $0x2ff8] sm:$0xff]
      %v1836 = vld [vmem:[%s278 + $0x3000] sm:$0xff]
      %v1837 = vld [vmem:[%s278 + $0x3008] sm:$0xff]
      %v1838 = vld [vmem:[%s278 + $0x3010] sm:$0xff]
      %v1839 = vld [vmem:[%s278 + $0x3018] sm:$0xff]
      %v1840 = vld [vmem:[%s278 + $0x3020] sm:$0xff]
      %v1841 = vld [vmem:[%s278 + $0x3028] sm:$0xff]
      %v1842 = vld [vmem:[%s278 + $0x3030] sm:$0xff]
      %v1843 = vld [vmem:[%s278 + $0x3038] sm:$0xff]
      %v1844 = vld [vmem:[%s278 + $0x3040] sm:$0xff]
      %v1845 = vld [vmem:[%s278 + $0x3048] sm:$0xff]
      %v1846 = vld [vmem:[%s278 + $0x3050] sm:$0xff]
      %v1847 = vld [vmem:[%s278 + $0x3058] sm:$0xff]
      %v1848 = vld [vmem:[%s278 + $0x3060] sm:$0xff]
      %v1849 = vld [vmem:[%s278 + $0x3068] sm:$0xff]
      %v1850 = vld [vmem:[%s278 + $0x3070] sm:$0xff]
      %v1851 = vld [vmem:[%s278 + $0x3078] sm:$0xff]
      %v1852 = vld [vmem:[%s278 + $0x3080] sm:$0xff]
      %v1853 = vld [vmem:[%s278 + $0x3088] sm:$0xff]
      %v1854 = vld [vmem:[%s278 + $0x3090] sm:$0xff]
      %v1855 = vld [vmem:[%s278 + $0x3098] sm:$0xff]
      %v1856 = vld [vmem:[%s278 + $0x30a0] sm:$0xff]
      %v1857 = vld [vmem:[%s278 + $0x30a8] sm:$0xff]
      %v1858 = vld [vmem:[%s278 + $0x30b0] sm:$0xff]
      %v1859 = vld [vmem:[%s278 + $0x30b8] sm:$0xff]
      %v1860 = vld [vmem:[%s278 + $0x30c0] sm:$0xff]
      %v1861 = vld [vmem:[%s278 + $0x30c8] sm:$0xff]
      %v1862 = vld [vmem:[%s278 + $0x30d0] sm:$0xff]
      %v1863 = vld [vmem:[%s278 + $0x30d8] sm:$0xff]
      %v1864 = vld [vmem:[%s278 + $0x30e0] sm:$0xff]
      %v1865 = vld [vmem:[%s278 + $0x30e8] sm:$0xff]
      %v1866 = vld [vmem:[%s278 + $0x30f0] sm:$0xff]
      %v1867 = vld [vmem:[%s278 + $0x30f8] sm:$0xff]
      %v1868 = vld [vmem:[%s278 + $0x3100] sm:$0xff]
      %v1869 = vld [vmem:[%s278 + $0x3108] sm:$0xff]
      %v1870 = vld [vmem:[%s278 + $0x3110] sm:$0xff]
      %v1871 = vld [vmem:[%s278 + $0x3118] sm:$0xff]
      %v1872 = vld [vmem:[%s278 + $0x3120] sm:$0xff]
      %v1873 = vld [vmem:[%s278 + $0x3128] sm:$0xff]
      %v1874 = vld [vmem:[%s278 + $0x3130] sm:$0xff]
      %v1875 = vld [vmem:[%s278 + $0x3138] sm:$0xff]
      %v1876 = vld [vmem:[%s278 + $0x3140] sm:$0xff]
      %v1877 = vld [vmem:[%s278 + $0x3148] sm:$0xff]
      %v1878 = vld [vmem:[%s278 + $0x3150] sm:$0xff]
      %v1879 = vld [vmem:[%s278 + $0x3158] sm:$0xff]
      %v1880 = vld [vmem:[%s278 + $0x3160] sm:$0xff]
      %v1881 = vld [vmem:[%s278 + $0x3168] sm:$0xff]
      %v1882 = vld [vmem:[%s278 + $0x3170] sm:$0xff]
      %v1883 = vld [vmem:[%s278 + $0x3178] sm:$0xff]
      %v1884 = vld [vmem:[%s278 + $0x3180] sm:$0xff]
      %v1885 = vld [vmem:[%s278 + $0x3188] sm:$0xff]
      %v1886 = vld [vmem:[%s278 + $0x3190] sm:$0xff]
      %v1887 = vld [vmem:[%s278 + $0x3198] sm:$0xff]
      %v1888 = vld [vmem:[%s278 + $0x31a0] sm:$0xff]
      %v1889 = vld [vmem:[%s278 + $0x31a8] sm:$0xff]
      %v1890 = vld [vmem:[%s278 + $0x31b0] sm:$0xff]
      %v1891 = vld [vmem:[%s278 + $0x31b8] sm:$0xff]
      %v1892 = vld [vmem:[%s278 + $0x31c0] sm:$0xff]
      %v1893 = vld [vmem:[%s278 + $0x31c8] sm:$0xff]
      %v1894 = vld [vmem:[%s278 + $0x31d0] sm:$0xff]
      %v1895 = vld [vmem:[%s278 + $0x31d8] sm:$0xff]
      %v1896 = vld [vmem:[%s278 + $0x31e0] sm:$0xff]
      %v1897 = vld [vmem:[%s278 + $0x31e8] sm:$0xff]
      %v1898 = vld [vmem:[%s278 + $0x31f0] sm:$0xff]
      %v1899 = vld [vmem:[%s278 + $0x31f8] sm:$0xff]
      %v1900 = vld [vmem:[%s278 + $0x3200] sm:$0xff]
      %v1901 = vld [vmem:[%s278 + $0x3208] sm:$0xff]
      %v1902 = vld [vmem:[%s278 + $0x3210] sm:$0xff]
      %v1903 = vld [vmem:[%s278 + $0x3218] sm:$0xff]
      %v1904 = vld [vmem:[%s278 + $0x3220] sm:$0xff]
      %v1905 = vld [vmem:[%s278 + $0x3228] sm:$0xff]
      %v1906 = vld [vmem:[%s278 + $0x3230] sm:$0xff]
      %v1907 = vld [vmem:[%s278 + $0x3238] sm:$0xff]
      %v1908 = vld [vmem:[%s278 + $0x3240] sm:$0xff]
      %v1909 = vld [vmem:[%s278 + $0x3248] sm:$0xff]
      %v1910 = vld [vmem:[%s278 + $0x3250] sm:$0xff]
      %v1911 = vld [vmem:[%s278 + $0x3258] sm:$0xff]
      %v1912 = vld [vmem:[%s278 + $0x3260] sm:$0xff]
      %v1913 = vld [vmem:[%s278 + $0x3268] sm:$0xff]
      %v1914 = vld [vmem:[%s278 + $0x3270] sm:$0xff]
      %v1915 = vld [vmem:[%s278 + $0x3278] sm:$0xff]
      %v1916 = vld [vmem:[%s278 + $0x3280] sm:$0xff]
      %v1917 = vld [vmem:[%s278 + $0x3288] sm:$0xff]
      %v1918 = vld [vmem:[%s278 + $0x3290] sm:$0xff]
      %v1919 = vld [vmem:[%s278 + $0x3298] sm:$0xff]
      %v1920 = vld [vmem:[%s278 + $0x32a0] sm:$0xff]
      %v1921 = vld [vmem:[%s278 + $0x32a8] sm:$0xff]
      %v1922 = vld [vmem:[%s278 + $0x32b0] sm:$0xff]
      %v1923 = vld [vmem:[%s278 + $0x32b8] sm:$0xff]
      %v1924 = vld [vmem:[%s278 + $0x32c0] sm:$0xff]
      %v1925 = vld [vmem:[%s278 + $0x32c8] sm:$0xff]
      %v1926 = vld [vmem:[%s278 + $0x32d0] sm:$0xff]
      %v1927 = vld [vmem:[%s278 + $0x32d8] sm:$0xff]
      %v1928 = vld [vmem:[%s278 + $0x32e0] sm:$0xff]
      %v1929 = vld [vmem:[%s278 + $0x32e8] sm:$0xff]
      %v1930 = vld [vmem:[%s278 + $0x32f0] sm:$0xff]
      %v1931 = vld [vmem:[%s278 + $0x32f8] sm:$0xff]
      %v1932 = vld [vmem:[%s278 + $0x3300] sm:$0xff]
      %v1933 = vld [vmem:[%s278 + $0x3308] sm:$0xff]
      %v1934 = vld [vmem:[%s278 + $0x3310] sm:$0xff]
      %v1935 = vld [vmem:[%s278 + $0x3318] sm:$0xff]
      %v1936 = vld [vmem:[%s278 + $0x3320] sm:$0xff]
      %v1937 = vld [vmem:[%s278 + $0x3328] sm:$0xff]
      %v1938 = vld [vmem:[%s278 + $0x3330] sm:$0xff]
      %v1939 = vld [vmem:[%s278 + $0x3338] sm:$0xff]
      %v1940 = vld [vmem:[%s278 + $0x3340] sm:$0xff]
      %v1941 = vld [vmem:[%s278 + $0x3348] sm:$0xff]
      %v1942 = vld [vmem:[%s278 + $0x3350] sm:$0xff]
      %v1943 = vld [vmem:[%s278 + $0x3358] sm:$0xff]
      %v1944 = vld [vmem:[%s278 + $0x3360] sm:$0xff]
      %v1945 = vld [vmem:[%s278 + $0x3368] sm:$0xff]
      %v1946 = vld [vmem:[%s278 + $0x3370] sm:$0xff]
      %v1947 = vld [vmem:[%s278 + $0x3378] sm:$0xff]
      %v1948 = vld [vmem:[%s278 + $0x3380] sm:$0xff]
      %v1949 = vld [vmem:[%s278 + $0x3388] sm:$0xff]
      %v1950 = vld [vmem:[%s278 + $0x3390] sm:$0xff]
      %v1951 = vld [vmem:[%s278 + $0x3398] sm:$0xff]
      %v1952 = vld [vmem:[%s278 + $0x33a0] sm:$0xff]
      %v1953 = vld [vmem:[%s278 + $0x33a8] sm:$0xff]
      %v1954 = vld [vmem:[%s278 + $0x33b0] sm:$0xff]
      %v1955 = vld [vmem:[%s278 + $0x33b8] sm:$0xff]
      %v1956 = vld [vmem:[%s278 + $0x33c0] sm:$0xff]
      %v1957 = vld [vmem:[%s278 + $0x33c8] sm:$0xff]
      %v1958 = vld [vmem:[%s278 + $0x33d0] sm:$0xff]
      %v1959 = vld [vmem:[%s278 + $0x33d8] sm:$0xff]
      %v1960 = vld [vmem:[%s278 + $0x33e0] sm:$0xff]
      %v1961 = vld [vmem:[%s278 + $0x33e8] sm:$0xff]
      %v1962 = vld [vmem:[%s278 + $0x33f0] sm:$0xff]
      %v1963 = vld [vmem:[%s278 + $0x33f8] sm:$0xff]
      %v1964 = vld [vmem:[%s278 + $0x3400] sm:$0xff]
      %v1965 = vld [vmem:[%s278 + $0x3408] sm:$0xff]
      %v1966 = vld [vmem:[%s278 + $0x3410] sm:$0xff]
      %v1967 = vld [vmem:[%s278 + $0x3418] sm:$0xff]
      %v1968 = vld [vmem:[%s278 + $0x3420] sm:$0xff]
      %v1969 = vld [vmem:[%s278 + $0x3428] sm:$0xff]
      %v1970 = vld [vmem:[%s278 + $0x3430] sm:$0xff]
      %v1971 = vld [vmem:[%s278 + $0x3438] sm:$0xff]
      %v1972 = vld [vmem:[%s278 + $0x3440] sm:$0xff]
      %v1973 = vld [vmem:[%s278 + $0x3448] sm:$0xff]
      %v1974 = vld [vmem:[%s278 + $0x3450] sm:$0xff]
      %v1975 = vld [vmem:[%s278 + $0x3458] sm:$0xff]
      %v1976 = vld [vmem:[%s278 + $0x3460] sm:$0xff]
      %v1977 = vld [vmem:[%s278 + $0x3468] sm:$0xff]
      %v1978 = vld [vmem:[%s278 + $0x3470] sm:$0xff]
      %v1979 = vld [vmem:[%s278 + $0x3478] sm:$0xff]
      %v1980 = vld [vmem:[%s278 + $0x3480] sm:$0xff]
      %v1981 = vld [vmem:[%s278 + $0x3488] sm:$0xff]
      %v1982 = vld [vmem:[%s278 + $0x3490] sm:$0xff]
      %v1983 = vld [vmem:[%s278 + $0x3498] sm:$0xff]
      %v1984 = vld [vmem:[%s278 + $0x34a0] sm:$0xff]
      %v1985 = vld [vmem:[%s278 + $0x34a8] sm:$0xff]
      %v1986 = vld [vmem:[%s278 + $0x34b0] sm:$0xff]
      %v1987 = vld [vmem:[%s278 + $0x34b8] sm:$0xff]
      %v1988 = vld [vmem:[%s278 + $0x34c0] sm:$0xff]
      %v1989 = vld [vmem:[%s278 + $0x34c8] sm:$0xff]
      %v1990 = vld [vmem:[%s278 + $0x34d0] sm:$0xff]
      %v1991 = vld [vmem:[%s278 + $0x34d8] sm:$0xff]
      %v1992 = vld [vmem:[%s278 + $0x34e0] sm:$0xff]
      %v1993 = vld [vmem:[%s278 + $0x34e8] sm:$0xff]
      %v1994 = vld [vmem:[%s278 + $0x34f0] sm:$0xff]
      %v1995 = vld [vmem:[%s278 + $0x34f8] sm:$0xff]
      %v1996 = vld [vmem:[%s278 + $0x3500] sm:$0xff]
      %v1997 = vld [vmem:[%s278 + $0x3508] sm:$0xff]
      %v1998 = vld [vmem:[%s278 + $0x3510] sm:$0xff]
      %v1999 = vld [vmem:[%s278 + $0x3518] sm:$0xff]
      %v2000 = vld [vmem:[%s278 + $0x3520] sm:$0xff]
      %v2001 = vld [vmem:[%s278 + $0x3528] sm:$0xff]
      %v2002 = vld [vmem:[%s278 + $0x3530] sm:$0xff]
      %v2003 = vld [vmem:[%s278 + $0x3538] sm:$0xff]
      %v2004 = vld [vmem:[%s278 + $0x3540] sm:$0xff]
      %v2005 = vld [vmem:[%s278 + $0x3548] sm:$0xff]
      %v2006 = vld [vmem:[%s278 + $0x3550] sm:$0xff]
      %v2007 = vld [vmem:[%s278 + $0x3558] sm:$0xff]
      %v2008 = vld [vmem:[%s278 + $0x3560] sm:$0xff]
      %v2009 = vld [vmem:[%s278 + $0x3568] sm:$0xff]
      %v2010 = vld [vmem:[%s278 + $0x3570] sm:$0xff]
      %v2011 = vld [vmem:[%s278 + $0x3578] sm:$0xff]
      %v2012 = vld [vmem:[%s278 + $0x3580] sm:$0xff]
      %v2013 = vld [vmem:[%s278 + $0x3588] sm:$0xff]
      %v2014 = vld [vmem:[%s278 + $0x3590] sm:$0xff]
      %v2015 = vld [vmem:[%s278 + $0x3598] sm:$0xff]
      %v2016 = vld [vmem:[%s278 + $0x35a0] sm:$0xff]
      %v2017 = vld [vmem:[%s278 + $0x35a8] sm:$0xff]
      %v2018 = vld [vmem:[%s278 + $0x35b0] sm:$0xff]
      %v2019 = vld [vmem:[%s278 + $0x35b8] sm:$0xff]
      %v2020 = vld [vmem:[%s278 + $0x35c0] sm:$0xff]
      %v2021 = vld [vmem:[%s278 + $0x35c8] sm:$0xff]
      %v2022 = vld [vmem:[%s278 + $0x35d0] sm:$0xff]
      %v2023 = vld [vmem:[%s278 + $0x35d8] sm:$0xff]
      %v2024 = vld [vmem:[%s278 + $0x35e0] sm:$0xff]
      %v2025 = vld [vmem:[%s278 + $0x35e8] sm:$0xff]
      %v2026 = vld [vmem:[%s278 + $0x35f0] sm:$0xff]
      %v2027 = vld [vmem:[%s278 + $0x35f8] sm:$0xff]
      %v2028 = vld [vmem:[%s278 + $0x3600] sm:$0xff]
      %v2029 = vld [vmem:[%s278 + $0x3608] sm:$0xff]
      %v2030 = vld [vmem:[%s278 + $0x3610] sm:$0xff]
      %v2031 = vld [vmem:[%s278 + $0x3618] sm:$0xff]
      %v2032 = vld [vmem:[%s278 + $0x3620] sm:$0xff]
      %v2033 = vld [vmem:[%s278 + $0x3628] sm:$0xff]
      %v2034 = vld [vmem:[%s278 + $0x3630] sm:$0xff]
      %v2035 = vld [vmem:[%s278 + $0x3638] sm:$0xff]
      %v2036 = vld [vmem:[%s278 + $0x3640] sm:$0xff]
      %v2037 = vld [vmem:[%s278 + $0x3648] sm:$0xff]
      %v2038 = vld [vmem:[%s278 + $0x3650] sm:$0xff]
      %v2039 = vld [vmem:[%s278 + $0x3658] sm:$0xff]
      %v2040 = vld [vmem:[%s278 + $0x3660] sm:$0xff]
      %v2041 = vld [vmem:[%s278 + $0x3668] sm:$0xff]
      %v2042 = vld [vmem:[%s278 + $0x3670] sm:$0xff]
      %v2043 = vld [vmem:[%s278 + $0x3678] sm:$0xff]
      %v2044 = vld [vmem:[%s278 + $0x3680] sm:$0xff]
      %v2045 = vld [vmem:[%s278 + $0x3688] sm:$0xff]
      %v2046 = vld [vmem:[%s278 + $0x3690] sm:$0xff]
      %v2047 = vld [vmem:[%s278 + $0x3698] sm:$0xff]
      %v2048 = vld [vmem:[%s278 + $0x36a0] sm:$0xff]
      %v2049 = vld [vmem:[%s278 + $0x36a8] sm:$0xff]
      %v2050 = vld [vmem:[%s278 + $0x36b0] sm:$0xff]
      %v2051 = vld [vmem:[%s278 + $0x36b8] sm:$0xff]
      %v2052 = vld [vmem:[%s278 + $0x36c0] sm:$0xff]
      %v2053 = vld [vmem:[%s278 + $0x36c8] sm:$0xff]
      %v2054 = vld [vmem:[%s278 + $0x36d0] sm:$0xff]
      %v2055 = vld [vmem:[%s278 + $0x36d8] sm:$0xff]
      %v2056 = vld [vmem:[%s278 + $0x36e0] sm:$0xff]
      %v2057 = vld [vmem:[%s278 + $0x36e8] sm:$0xff]
      %v2058 = vld [vmem:[%s278 + $0x36f0] sm:$0xff]
      %v2059 = vld [vmem:[%s278 + $0x36f8] sm:$0xff]
      %v2060 = vld [vmem:[%s278 + $0x3700] sm:$0xff]
      %v2061 = vld [vmem:[%s278 + $0x3708] sm:$0xff]
      %v2062 = vld [vmem:[%s278 + $0x3710] sm:$0xff]
      %v2063 = vld [vmem:[%s278 + $0x3718] sm:$0xff]
      %v2064 = vld [vmem:[%s278 + $0x3720] sm:$0xff]
      %v2065 = vld [vmem:[%s278 + $0x3728] sm:$0xff]
      %v2066 = vld [vmem:[%s278 + $0x3730] sm:$0xff]
      %v2067 = vld [vmem:[%s278 + $0x3738] sm:$0xff]
      %v2068 = vld [vmem:[%s278 + $0x3740] sm:$0xff]
      %v2069 = vld [vmem:[%s278 + $0x3748] sm:$0xff]
      %v2070 = vld [vmem:[%s278 + $0x3750] sm:$0xff]
      %v2071 = vld [vmem:[%s278 + $0x3758] sm:$0xff]
      %v2072 = vld [vmem:[%s278 + $0x3760] sm:$0xff]
      %v2073 = vld [vmem:[%s278 + $0x3768] sm:$0xff]
      %v2074 = vld [vmem:[%s278 + $0x3770] sm:$0xff]
      %v2075 = vld [vmem:[%s278 + $0x3778] sm:$0xff]
      %v2076 = vld [vmem:[%s278 + $0x3780] sm:$0xff]
      %v2077 = vld [vmem:[%s278 + $0x3788] sm:$0xff]
      %v2078 = vld [vmem:[%s278 + $0x3790] sm:$0xff]
      %v2079 = vld [vmem:[%s278 + $0x3798] sm:$0xff]
      %v2080 = vld [vmem:[%s278 + $0x37a0] sm:$0xff]
      %v2081 = vld [vmem:[%s278 + $0x37a8] sm:$0xff]
      %v2082 = vld [vmem:[%s278 + $0x37b0] sm:$0xff]
      %v2083 = vld [vmem:[%s278 + $0x37b8] sm:$0xff]
      %v2084 = vld [vmem:[%s278 + $0x37c0] sm:$0xff]
      %v2085 = vld [vmem:[%s278 + $0x37c8] sm:$0xff]
      %v2086 = vld [vmem:[%s278 + $0x37d0] sm:$0xff]
      %v2087 = vld [vmem:[%s278 + $0x37d8] sm:$0xff]
      %v2088 = vld [vmem:[%s278 + $0x37e0] sm:$0xff]
      %v2089 = vld [vmem:[%s278 + $0x37e8] sm:$0xff]
      %v2090 = vld [vmem:[%s278 + $0x37f0] sm:$0xff]
      %v2091 = vld [vmem:[%s278 + $0x37f8] sm:$0xff]
      %v2092 = vld [vmem:[%s278 + $0x3800] sm:$0xff]
      %v2093 = vld [vmem:[%s278 + $0x3808] sm:$0xff]
      %v2094 = vld [vmem:[%s278 + $0x3810] sm:$0xff]
      %v2095 = vld [vmem:[%s278 + $0x3818] sm:$0xff]
      %v2096 = vld [vmem:[%s278 + $0x3820] sm:$0xff]
      %v2097 = vld [vmem:[%s278 + $0x3828] sm:$0xff]
      %v2098 = vld [vmem:[%s278 + $0x3830] sm:$0xff]
      %v2099 = vld [vmem:[%s278 + $0x3838] sm:$0xff]
      %v2100 = vld [vmem:[%s278 + $0x3840] sm:$0xff]
      %v2101 = vld [vmem:[%s278 + $0x3848] sm:$0xff]
      %v2102 = vld [vmem:[%s278 + $0x3850] sm:$0xff]
      %v2103 = vld [vmem:[%s278 + $0x3858] sm:$0xff]
      %v2104 = vld [vmem:[%s278 + $0x3860] sm:$0xff]
      %v2105 = vld [vmem:[%s278 + $0x3868] sm:$0xff]
      %v2106 = vld [vmem:[%s278 + $0x3870] sm:$0xff]
      %v2107 = vld [vmem:[%s278 + $0x3878] sm:$0xff]
      %v2108 = vld [vmem:[%s278 + $0x3880] sm:$0xff]
      %v2109 = vld [vmem:[%s278 + $0x3888] sm:$0xff]
      %v2110 = vld [vmem:[%s278 + $0x3890] sm:$0xff]
      %v2111 = vld [vmem:[%s278 + $0x3898] sm:$0xff]
      %v2112 = vld [vmem:[%s278 + $0x38a0] sm:$0xff]
      %v2113 = vld [vmem:[%s278 + $0x38a8] sm:$0xff]
      %v2114 = vld [vmem:[%s278 + $0x38b0] sm:$0xff]
      %v2115 = vld [vmem:[%s278 + $0x38b8] sm:$0xff]
      %v2116 = vld [vmem:[%s278 + $0x38c0] sm:$0xff]
      %v2117 = vld [vmem:[%s278 + $0x38c8] sm:$0xff]
      %v2118 = vld [vmem:[%s278 + $0x38d0] sm:$0xff]
      %v2119 = vld [vmem:[%s278 + $0x38d8] sm:$0xff]
      %v2120 = vld [vmem:[%s278 + $0x38e0] sm:$0xff]
      %v2121 = vld [vmem:[%s278 + $0x38e8] sm:$0xff]
      %v2122 = vld [vmem:[%s278 + $0x38f0] sm:$0xff]
      %v2123 = vld [vmem:[%s278 + $0x38f8] sm:$0xff]
      %v2124 = vld [vmem:[%s278 + $0x3900] sm:$0xff]
      %v2125 = vld [vmem:[%s278 + $0x3908] sm:$0xff]
      %v2126 = vld [vmem:[%s278 + $0x3910] sm:$0xff]
      %v2127 = vld [vmem:[%s278 + $0x3918] sm:$0xff]
      %v2128 = vld [vmem:[%s278 + $0x3920] sm:$0xff]
      %v2129 = vld [vmem:[%s278 + $0x3928] sm:$0xff]
      %v2130 = vld [vmem:[%s278 + $0x3930] sm:$0xff]
      %v2131 = vld [vmem:[%s278 + $0x3938] sm:$0xff]
      %v2132 = vld [vmem:[%s278 + $0x3940] sm:$0xff]
      %v2133 = vld [vmem:[%s278 + $0x3948] sm:$0xff]
      %v2134 = vld [vmem:[%s278 + $0x3950] sm:$0xff]
      %v2135 = vld [vmem:[%s278 + $0x3958] sm:$0xff]
      %v2136 = vld [vmem:[%s278 + $0x3960] sm:$0xff]
      %v2137 = vld [vmem:[%s278 + $0x3968] sm:$0xff]
      %v2138 = vld [vmem:[%s278 + $0x3970] sm:$0xff]
      %v2139 = vld [vmem:[%s278 + $0x3978] sm:$0xff]
      %v2140 = vld [vmem:[%s278 + $0x3980] sm:$0xff]
      %v2141 = vld [vmem:[%s278 + $0x3988] sm:$0xff]
      %v2142 = vld [vmem:[%s278 + $0x3990] sm:$0xff]
      %v2143 = vld [vmem:[%s278 + $0x3998] sm:$0xff]
      %v2144 = vld [vmem:[%s278 + $0x39a0] sm:$0xff]
      %v2145 = vld [vmem:[%s278 + $0x39a8] sm:$0xff]
      %v2146 = vld [vmem:[%s278 + $0x39b0] sm:$0xff]
      %v2147 = vld [vmem:[%s278 + $0x39b8] sm:$0xff]
      %v2148 = vld [vmem:[%s278 + $0x39c0] sm:$0xff]
      %v2149 = vld [vmem:[%s278 + $0x39c8] sm:$0xff]
      %v2150 = vld [vmem:[%s278 + $0x39d0] sm:$0xff]
      %v2151 = vld [vmem:[%s278 + $0x39d8] sm:$0xff]
      %v2152 = vld [vmem:[%s278 + $0x39e0] sm:$0xff]
      %v2153 = vld [vmem:[%s278 + $0x39e8] sm:$0xff]
      %v2154 = vld [vmem:[%s278 + $0x39f0] sm:$0xff]
      %v2155 = vld [vmem:[%s278 + $0x39f8] sm:$0xff]
      %v2156 = vld [vmem:[%s278 + $0x3a00] sm:$0xff]
      %v2157 = vld [vmem:[%s278 + $0x3a08] sm:$0xff]
      %v2158 = vld [vmem:[%s278 + $0x3a10] sm:$0xff]
      %v2159 = vld [vmem:[%s278 + $0x3a18] sm:$0xff]
      %v2160 = vld [vmem:[%s278 + $0x3a20] sm:$0xff]
      %v2161 = vld [vmem:[%s278 + $0x3a28] sm:$0xff]
      %v2162 = vld [vmem:[%s278 + $0x3a30] sm:$0xff]
      %v2163 = vld [vmem:[%s278 + $0x3a38] sm:$0xff]
      %v2164 = vld [vmem:[%s278 + $0x3a40] sm:$0xff]
      %v2165 = vld [vmem:[%s278 + $0x3a48] sm:$0xff]
      %v2166 = vld [vmem:[%s278 + $0x3a50] sm:$0xff]
      %v2167 = vld [vmem:[%s278 + $0x3a58] sm:$0xff]
      %v2168 = vld [vmem:[%s278 + $0x3a60] sm:$0xff]
      %v2169 = vld [vmem:[%s278 + $0x3a68] sm:$0xff]
      %v2170 = vld [vmem:[%s278 + $0x3a70] sm:$0xff]
      %v2171 = vld [vmem:[%s278 + $0x3a78] sm:$0xff]
      %v2172 = vld [vmem:[%s278 + $0x3a80] sm:$0xff]
      %v2173 = vld [vmem:[%s278 + $0x3a88] sm:$0xff]
      %v2174 = vld [vmem:[%s278 + $0x3a90] sm:$0xff]
      %v2175 = vld [vmem:[%s278 + $0x3a98] sm:$0xff]
      %v2176 = vld [vmem:[%s278 + $0x3aa0] sm:$0xff]
      %v2177 = vld [vmem:[%s278 + $0x3aa8] sm:$0xff]
      %v2178 = vld [vmem:[%s278 + $0x3ab0] sm:$0xff]
      %v2179 = vld [vmem:[%s278 + $0x3ab8] sm:$0xff]
      %v2180 = vld [vmem:[%s278 + $0x3ac0] sm:$0xff]
      %v2181 = vld [vmem:[%s278 + $0x3ac8] sm:$0xff]
      %v2182 = vld [vmem:[%s278 + $0x3ad0] sm:$0xff]
      %v2183 = vld [vmem:[%s278 + $0x3ad8] sm:$0xff]
      %v2184 = vld [vmem:[%s278 + $0x3ae0] sm:$0xff]
      %v2185 = vld [vmem:[%s278 + $0x3ae8] sm:$0xff]
      %v2186 = vld [vmem:[%s278 + $0x3af0] sm:$0xff]
      %v2187 = vld [vmem:[%s278 + $0x3af8] sm:$0xff]
      %v2188 = vld [vmem:[%s278 + $0x3b00] sm:$0xff]
      %v2189 = vld [vmem:[%s278 + $0x3b08] sm:$0xff]
      %v2190 = vld [vmem:[%s278 + $0x3b10] sm:$0xff]
      %v2191 = vld [vmem:[%s278 + $0x3b18] sm:$0xff]
      %v2192 = vld [vmem:[%s278 + $0x3b20] sm:$0xff]
      %v2193 = vld [vmem:[%s278 + $0x3b28] sm:$0xff]
      %v2194 = vld [vmem:[%s278 + $0x3b30] sm:$0xff]
      %v2195 = vld [vmem:[%s278 + $0x3b38] sm:$0xff]
      %v2196 = vld [vmem:[%s278 + $0x3b40] sm:$0xff]
      %v2197 = vld [vmem:[%s278 + $0x3b48] sm:$0xff]
      %v2198 = vld [vmem:[%s278 + $0x3b50] sm:$0xff]
      %v2199 = vld [vmem:[%s278 + $0x3b58] sm:$0xff]
      %v2200 = vld [vmem:[%s278 + $0x3b60] sm:$0xff]
      %v2201 = vld [vmem:[%s278 + $0x3b68] sm:$0xff]
      %v2202 = vld [vmem:[%s278 + $0x3b70] sm:$0xff]
      %v2203 = vld [vmem:[%s278 + $0x3b78] sm:$0xff]
      %v2204 = vld [vmem:[%s278 + $0x3b80] sm:$0xff]
      %v2205 = vld [vmem:[%s278 + $0x3b88] sm:$0xff]
      %v2206 = vld [vmem:[%s278 + $0x3b90] sm:$0xff]
      %v2207 = vld [vmem:[%s278 + $0x3b98] sm:$0xff]
      %v2208 = vld [vmem:[%s278 + $0x3ba0] sm:$0xff]
      %v2209 = vld [vmem:[%s278 + $0x3ba8] sm:$0xff]
      %v2210 = vld [vmem:[%s278 + $0x3bb0] sm:$0xff]
      %v2211 = vld [vmem:[%s278 + $0x3bb8] sm:$0xff]
      %v2212 = vld [vmem:[%s278 + $0x3bc0] sm:$0xff]
      %v2213 = vld [vmem:[%s278 + $0x3bc8] sm:$0xff]
      %v2214 = vld [vmem:[%s278 + $0x3bd0] sm:$0xff]
      %v2215 = vld [vmem:[%s278 + $0x3bd8] sm:$0xff]
      %v2216 = vld [vmem:[%s278 + $0x3be0] sm:$0xff]
      %v2217 = vld [vmem:[%s278 + $0x3be8] sm:$0xff]
      %v2218 = vld [vmem:[%s278 + $0x3bf0] sm:$0xff]
      %v2219 = vld [vmem:[%s278 + $0x3bf8] sm:$0xff]
      %v2220 = vld [vmem:[%s278 + $0x3c00] sm:$0xff]
      %v2221 = vld [vmem:[%s278 + $0x3c08] sm:$0xff]
      %v2222 = vld [vmem:[%s278 + $0x3c10] sm:$0xff]
      %v2223 = vld [vmem:[%s278 + $0x3c18] sm:$0xff]
      %v2224 = vld [vmem:[%s278 + $0x3c20] sm:$0xff]
      %v2225 = vld [vmem:[%s278 + $0x3c28] sm:$0xff]
      %v2226 = vld [vmem:[%s278 + $0x3c30] sm:$0xff]
      %v2227 = vld [vmem:[%s278 + $0x3c38] sm:$0xff]
      %v2228 = vld [vmem:[%s278 + $0x3c40] sm:$0xff]
      %v2229 = vld [vmem:[%s278 + $0x3c48] sm:$0xff]
      %v2230 = vld [vmem:[%s278 + $0x3c50] sm:$0xff]
      %v2231 = vld [vmem:[%s278 + $0x3c58] sm:$0xff]
      %v2232 = vld [vmem:[%s278 + $0x3c60] sm:$0xff]
      %v2233 = vld [vmem:[%s278 + $0x3c68] sm:$0xff]
      %v2234 = vld [vmem:[%s278 + $0x3c70] sm:$0xff]
      %v2235 = vld [vmem:[%s278 + $0x3c78] sm:$0xff]
      %v2236 = vld [vmem:[%s278 + $0x3c80] sm:$0xff]
      %v2237 = vld [vmem:[%s278 + $0x3c88] sm:$0xff]
      %v2238 = vld [vmem:[%s278 + $0x3c90] sm:$0xff]
      %v2239 = vld [vmem:[%s278 + $0x3c98] sm:$0xff]
      %v2240 = vld [vmem:[%s278 + $0x3ca0] sm:$0xff]
      %v2241 = vld [vmem:[%s278 + $0x3ca8] sm:$0xff]
      %v2242 = vld [vmem:[%s278 + $0x3cb0] sm:$0xff]
      %v2243 = vld [vmem:[%s278 + $0x3cb8] sm:$0xff]
      %v2244 = vld [vmem:[%s278 + $0x3cc0] sm:$0xff]
      %v2245 = vld [vmem:[%s278 + $0x3cc8] sm:$0xff]
      %v2246 = vld [vmem:[%s278 + $0x3cd0] sm:$0xff]
      %v2247 = vld [vmem:[%s278 + $0x3cd8] sm:$0xff]
      %v2248 = vld [vmem:[%s278 + $0x3ce0] sm:$0xff]
      %v2249 = vld [vmem:[%s278 + $0x3ce8] sm:$0xff]
      %v2250 = vld [vmem:[%s278 + $0x3cf0] sm:$0xff]
      %v2251 = vld [vmem:[%s278 + $0x3cf8] sm:$0xff]
      %v2252 = vld [vmem:[%s278 + $0x3d00] sm:$0xff]
      %v2253 = vld [vmem:[%s278 + $0x3d08] sm:$0xff]
      %v2254 = vld [vmem:[%s278 + $0x3d10] sm:$0xff]
      %v2255 = vld [vmem:[%s278 + $0x3d18] sm:$0xff]
      %v2256 = vld [vmem:[%s278 + $0x3d20] sm:$0xff]
      %v2257 = vld [vmem:[%s278 + $0x3d28] sm:$0xff]
      %v2258 = vld [vmem:[%s278 + $0x3d30] sm:$0xff]
      %v2259 = vld [vmem:[%s278 + $0x3d38] sm:$0xff]
      %v2260 = vld [vmem:[%s278 + $0x3d40] sm:$0xff]
      %v2261 = vld [vmem:[%s278 + $0x3d48] sm:$0xff]
      %v2262 = vld [vmem:[%s278 + $0x3d50] sm:$0xff]
      %v2263 = vld [vmem:[%s278 + $0x3d58] sm:$0xff]
      %v2264 = vld [vmem:[%s278 + $0x3d60] sm:$0xff]
      %v2265 = vld [vmem:[%s278 + $0x3d68] sm:$0xff]
      %v2266 = vld [vmem:[%s278 + $0x3d70] sm:$0xff]
      %v2267 = vld [vmem:[%s278 + $0x3d78] sm:$0xff]
      %v2268 = vld [vmem:[%s278 + $0x3d80] sm:$0xff]
      %v2269 = vld [vmem:[%s278 + $0x3d88] sm:$0xff]
      %v2270 = vld [vmem:[%s278 + $0x3d90] sm:$0xff]
      %v2271 = vld [vmem:[%s278 + $0x3d98] sm:$0xff]
      %v2272 = vld [vmem:[%s278 + $0x3da0] sm:$0xff]
      %v2273 = vld [vmem:[%s278 + $0x3da8] sm:$0xff]
      %v2274 = vld [vmem:[%s278 + $0x3db0] sm:$0xff]
      %v2275 = vld [vmem:[%s278 + $0x3db8] sm:$0xff]
      %v2276 = vld [vmem:[%s278 + $0x3dc0] sm:$0xff]
      %v2277 = vld [vmem:[%s278 + $0x3dc8] sm:$0xff]
      %v2278 = vld [vmem:[%s278 + $0x3dd0] sm:$0xff]
      %v2279 = vld [vmem:[%s278 + $0x3dd8] sm:$0xff]
      %v2280 = vld [vmem:[%s278 + $0x3de0] sm:$0xff]
      %v2281 = vld [vmem:[%s278 + $0x3de8] sm:$0xff]
      %v2282 = vld [vmem:[%s278 + $0x3df0] sm:$0xff]
      %v2283 = vld [vmem:[%s278 + $0x3df8] sm:$0xff]
      %v2284 = vld [vmem:[%s278 + $0x3e00] sm:$0xff]
      %v2285 = vld [vmem:[%s278 + $0x3e08] sm:$0xff]
      %v2286 = vld [vmem:[%s278 + $0x3e10] sm:$0xff]
      %v2287 = vld [vmem:[%s278 + $0x3e18] sm:$0xff]
      %v2288 = vld [vmem:[%s278 + $0x3e20] sm:$0xff]
      %v2289 = vld [vmem:[%s278 + $0x3e28] sm:$0xff]
      %v2290 = vld [vmem:[%s278 + $0x3e30] sm:$0xff]
      %v2291 = vld [vmem:[%s278 + $0x3e38] sm:$0xff]
      %v2292 = vld [vmem:[%s278 + $0x3e40] sm:$0xff]
      %v2293 = vld [vmem:[%s278 + $0x3e48] sm:$0xff]
      %v2294 = vld [vmem:[%s278 + $0x3e50] sm:$0xff]
      %v2295 = vld [vmem:[%s278 + $0x3e58] sm:$0xff]
      %v2296 = vld [vmem:[%s278 + $0x3e60] sm:$0xff]
      %v2297 = vld [vmem:[%s278 + $0x3e68] sm:$0xff]
      %v2298 = vld [vmem:[%s278 + $0x3e70] sm:$0xff]
      %v2299 = vld [vmem:[%s278 + $0x3e78] sm:$0xff]
      %v2300 = vld [vmem:[%s278 + $0x3e80] sm:$0xff]
      %v2301 = vld [vmem:[%s278 + $0x3e88] sm:$0xff]
      %v2302 = vld [vmem:[%s278 + $0x3e90] sm:$0xff]
      %v2303 = vld [vmem:[%s278 + $0x3e98] sm:$0xff]
      %v2304 = vld [vmem:[%s278 + $0x3ea0] sm:$0xff]
      %v2305 = vld [vmem:[%s278 + $0x3ea8] sm:$0xff]
      %v2306 = vld [vmem:[%s278 + $0x3eb0] sm:$0xff]
      %v2307 = vld [vmem:[%s278 + $0x3eb8] sm:$0xff]
      %v2308 = vld [vmem:[%s278 + $0x3ec0] sm:$0xff]
      %v2309 = vld [vmem:[%s278 + $0x3ec8] sm:$0xff]
      %v2310 = vld [vmem:[%s278 + $0x3ed0] sm:$0xff]
      %v2311 = vld [vmem:[%s278 + $0x3ed8] sm:$0xff]
      %v2312 = vld [vmem:[%s278 + $0x3ee0] sm:$0xff]
      %v2313 = vld [vmem:[%s278 + $0x3ee8] sm:$0xff]
      %v2314 = vld [vmem:[%s278 + $0x3ef0] sm:$0xff]
      %v2315 = vld [vmem:[%s278 + $0x3ef8] sm:$0xff]
      %v2316 = vld [vmem:[%s278 + $0x3f00] sm:$0xff]
      %v2317 = vld [vmem:[%s278 + $0x3f08] sm:$0xff]
      %v2318 = vld [vmem:[%s278 + $0x3f10] sm:$0xff]
      %v2319 = vld [vmem:[%s278 + $0x3f18] sm:$0xff]
      %v2320 = vld [vmem:[%s278 + $0x3f20] sm:$0xff]
      %v2321 = vld [vmem:[%s278 + $0x3f28] sm:$0xff]
      %v2322 = vld [vmem:[%s278 + $0x3f30] sm:$0xff]
      %v2323 = vld [vmem:[%s278 + $0x3f38] sm:$0xff]
      %v2324 = vld [vmem:[%s278 + $0x3f40] sm:$0xff]
      %v2325 = vld [vmem:[%s278 + $0x3f48] sm:$0xff]
      %v2326 = vld [vmem:[%s278 + $0x3f50] sm:$0xff]
      %v2327 = vld [vmem:[%s278 + $0x3f58] sm:$0xff]
      %v2328 = vld [vmem:[%s278 + $0x3f60] sm:$0xff]
      %v2329 = vld [vmem:[%s278 + $0x3f68] sm:$0xff]
      %v2330 = vld [vmem:[%s278 + $0x3f70] sm:$0xff]
      %v2331 = vld [vmem:[%s278 + $0x3f78] sm:$0xff]
      %v2332 = vld [vmem:[%s278 + $0x3f80] sm:$0xff]
      %v2333 = vld [vmem:[%s278 + $0x3f88] sm:$0xff]
      %v2334 = vld [vmem:[%s278 + $0x3f90] sm:$0xff]
      %v2335 = vld [vmem:[%s278 + $0x3f98] sm:$0xff]
      %v2336 = vld [vmem:[%s278 + $0x3fa0] sm:$0xff]
      %v2337 = vld [vmem:[%s278 + $0x3fa8] sm:$0xff]
      %v2338 = vld [vmem:[%s278 + $0x3fb0] sm:$0xff]
      %v2339 = vld [vmem:[%s278 + $0x3fb8] sm:$0xff]
      %v2340 = vld [vmem:[%s278 + $0x3fc0] sm:$0xff]
      %v2341 = vld [vmem:[%s278 + $0x3fc8] sm:$0xff]
      %v2342 = vld [vmem:[%s278 + $0x3fd0] sm:$0xff]
      %v2343 = vld [vmem:[%s278 + $0x3fd8] sm:$0xff]
      %v2344 = vld [vmem:[%s278 + $0x3fe0] sm:$0xff]
      %v2345 = vld [vmem:[%s278 + $0x3fe8] sm:$0xff]
      %v2346 = vld [vmem:[%s278 + $0x3ff0] sm:$0xff]
      %v2347 = vld [vmem:[%s278 + $0x3ff8] sm:$0xff]
      %v2348 = vld [vmem:[%s278 + $0x4000] sm:$0xff]
      %v2349 = vld [vmem:[%s278 + $0x4008] sm:$0xff]
      %v2350 = vld [vmem:[%s278 + $0x4010] sm:$0xff]
      %v2351 = vld [vmem:[%s278 + $0x4018] sm:$0xff]
      %v2352 = vld [vmem:[%s278 + $0x4020] sm:$0xff]
      %v2353 = vld [vmem:[%s278 + $0x4028] sm:$0xff]
      %v2354 = vld [vmem:[%s278 + $0x4030] sm:$0xff]
      %v2355 = vld [vmem:[%s278 + $0x4038] sm:$0xff]
      %v2356 = vld [vmem:[%s278 + $0x4040] sm:$0xff]
      %v2357 = vld [vmem:[%s278 + $0x4048] sm:$0xff]
      %v2358 = vld [vmem:[%s278 + $0x4050] sm:$0xff]
      %v2359 = vld [vmem:[%s278 + $0x4058] sm:$0xff]
      %v2360 = vld [vmem:[%s278 + $0x4060] sm:$0xff]
      %v2361 = vld [vmem:[%s278 + $0x4068] sm:$0xff]
      %v2362 = vld [vmem:[%s278 + $0x4070] sm:$0xff]
      %v2363 = vld [vmem:[%s278 + $0x4078] sm:$0xff]
      %v2364 = vld [vmem:[%s278 + $0x4080] sm:$0xff]
      %v2365 = vld [vmem:[%s278 + $0x4088] sm:$0xff]
      %v2366 = vld [vmem:[%s278 + $0x4090] sm:$0xff]
      %v2367 = vld [vmem:[%s278 + $0x4098] sm:$0xff]
      %v2368 = vld [vmem:[%s278 + $0x40a0] sm:$0xff]
      %v2369 = vld [vmem:[%s278 + $0x40a8] sm:$0xff]
      %v2370 = vld [vmem:[%s278 + $0x40b0] sm:$0xff]
      %v2371 = vld [vmem:[%s278 + $0x40b8] sm:$0xff]
      %v2372 = vld [vmem:[%s278 + $0x40c0] sm:$0xff]
      %v2373 = vld [vmem:[%s278 + $0x40c8] sm:$0xff]
      %v2374 = vld [vmem:[%s278 + $0x40d0] sm:$0xff]
      %v2375 = vld [vmem:[%s278 + $0x40d8] sm:$0xff]
      %v2376 = vld [vmem:[%s278 + $0x40e0] sm:$0xff]
      %v2377 = vld [vmem:[%s278 + $0x40e8] sm:$0xff]
      %v2378 = vld [vmem:[%s278 + $0x40f0] sm:$0xff]
      %v2379 = vld [vmem:[%s278 + $0x40f8] sm:$0xff]
      %v2380 = vld [vmem:[%s278 + $0x4100] sm:$0xff]
      %v2381 = vld [vmem:[%s278 + $0x4108] sm:$0xff]
      %v2382 = vld [vmem:[%s278 + $0x4110] sm:$0xff]
      %v2383 = vld [vmem:[%s278 + $0x4118] sm:$0xff]
      %v2384 = vld [vmem:[%s278 + $0x4120] sm:$0xff]
      %v2385 = vld [vmem:[%s278 + $0x4128] sm:$0xff]
      %v2386 = vld [vmem:[%s278 + $0x4130] sm:$0xff]
      %v2387 = vld [vmem:[%s278 + $0x4138] sm:$0xff]
      %v2388 = vld [vmem:[%s278 + $0x4140] sm:$0xff]
      %v2389 = vld [vmem:[%s278 + $0x4148] sm:$0xff]
      %v2390 = vld [vmem:[%s278 + $0x4150] sm:$0xff]
      %v2391 = vld [vmem:[%s278 + $0x4158] sm:$0xff]
      %v2392 = vld [vmem:[%s278 + $0x4160] sm:$0xff]
      %v2393 = vld [vmem:[%s278 + $0x4168] sm:$0xff]
      %v2394 = vld [vmem:[%s278 + $0x4170] sm:$0xff]
      %v2395 = vld [vmem:[%s278 + $0x4178] sm:$0xff]
      %v2396 = vld [vmem:[%s278 + $0x4180] sm:$0xff]
      %v2397 = vld [vmem:[%s278 + $0x4188] sm:$0xff]
      %v2398 = vld [vmem:[%s278 + $0x4190] sm:$0xff]
      %v2399 = vld [vmem:[%s278 + $0x4198] sm:$0xff]
      %v2400 = vld [vmem:[%s278 + $0x41a0] sm:$0xff]
      %v2401 = vld [vmem:[%s278 + $0x41a8] sm:$0xff]
      %v2402 = vld [vmem:[%s278 + $0x41b0] sm:$0xff]
      %v2403 = vld [vmem:[%s278 + $0x41b8] sm:$0xff]
      %v2404 = vld [vmem:[%s278 + $0x41c0] sm:$0xff]
      %v2405 = vld [vmem:[%s278 + $0x41c8] sm:$0xff]
      %v2406 = vld [vmem:[%s278 + $0x41d0] sm:$0xff]
      %v2407 = vld [vmem:[%s278 + $0x41d8] sm:$0xff]
      %v2408 = vld [vmem:[%s278 + $0x41e0] sm:$0xff]
      %v2409 = vld [vmem:[%s278 + $0x41e8] sm:$0xff]
      %v2410 = vld [vmem:[%s278 + $0x41f0] sm:$0xff]
      %v2411 = vld [vmem:[%s278 + $0x41f8] sm:$0xff]
      %v2412 = vld [vmem:[%s278 + $0x4200] sm:$0xff]
      %v2413 = vld [vmem:[%s278 + $0x4208] sm:$0xff]
      %v2414 = vld [vmem:[%s278 + $0x4210] sm:$0xff]
      %v2415 = vld [vmem:[%s278 + $0x4218] sm:$0xff]
      %v2416 = vld [vmem:[%s278 + $0x4220] sm:$0xff]
      %v2417 = vld [vmem:[%s278 + $0x4228] sm:$0xff]
      %v2418 = vld [vmem:[%s278 + $0x4230] sm:$0xff]
      %v2419 = vld [vmem:[%s278 + $0x4238] sm:$0xff]
      %v2420 = vld [vmem:[%s278 + $0x4240] sm:$0xff]
      %v2421 = vld [vmem:[%s278 + $0x4248] sm:$0xff]
      %v2422 = vld [vmem:[%s278 + $0x4250] sm:$0xff]
      %v2423 = vld [vmem:[%s278 + $0x4258] sm:$0xff]
      %v2424 = vld [vmem:[%s278 + $0x4260] sm:$0xff]
      %v2425 = vld [vmem:[%s278 + $0x4268] sm:$0xff]
      %v2426 = vld [vmem:[%s278 + $0x4270] sm:$0xff]
      %v2427 = vld [vmem:[%s278 + $0x4278] sm:$0xff]
      %v2428 = vld [vmem:[%s278 + $0x4280] sm:$0xff]
      %v2429 = vld [vmem:[%s278 + $0x4288] sm:$0xff]
      %v2430 = vld [vmem:[%s278 + $0x4290] sm:$0xff]
      %v2431 = vld [vmem:[%s278 + $0x4298] sm:$0xff]
      %v2432 = vld [vmem:[%s278 + $0x42a0] sm:$0xff]
      %v2433 = vld [vmem:[%s278 + $0x42a8] sm:$0xff]
      %v2434 = vld [vmem:[%s278 + $0x42b0] sm:$0xff]
      %v2435 = vld [vmem:[%s278 + $0x42b8] sm:$0xff]
      %v2436 = vld [vmem:[%s278 + $0x42c0] sm:$0xff]
      %v2437 = vld [vmem:[%s278 + $0x42c8] sm:$0xff]
      %v2438 = vld [vmem:[%s278 + $0x42d0] sm:$0xff]
      %v2439 = vld [vmem:[%s278 + $0x42d8] sm:$0xff]
      %v2440 = vld [vmem:[%s278 + $0x42e0] sm:$0xff]
      %v2441 = vld [vmem:[%s278 + $0x42e8] sm:$0xff]
      %v2442 = vld [vmem:[%s278 + $0x42f0] sm:$0xff]
      %v2443 = vld [vmem:[%s278 + $0x42f8] sm:$0xff]
      %v2444 = vld [vmem:[%s278 + $0x4300] sm:$0xff]
      %v2445 = vld [vmem:[%s278 + $0x4308] sm:$0xff]
      %v2446 = vld [vmem:[%s278 + $0x4310] sm:$0xff]
      %v2447 = vld [vmem:[%s278 + $0x4318] sm:$0xff]
      %v2448 = vld [vmem:[%s278 + $0x4320] sm:$0xff]
      %v2449 = vld [vmem:[%s278 + $0x4328] sm:$0xff]
      %v2450 = vld [vmem:[%s278 + $0x4330] sm:$0xff]
      %v2451 = vld [vmem:[%s278 + $0x4338] sm:$0xff]
      %v2452 = vld [vmem:[%s278 + $0x4340] sm:$0xff]
      %v2453 = vld [vmem:[%s278 + $0x4348] sm:$0xff]
      %v2454 = vld [vmem:[%s278 + $0x4350] sm:$0xff]
      %v2455 = vld [vmem:[%s278 + $0x4358] sm:$0xff]
      %v2456 = vld [vmem:[%s278 + $0x4360] sm:$0xff]
      %v2457 = vld [vmem:[%s278 + $0x4368] sm:$0xff]
      %v2458 = vld [vmem:[%s278 + $0x4370] sm:$0xff]
      %v2459 = vld [vmem:[%s278 + $0x4378] sm:$0xff]
      %v2460 = vld [vmem:[%s278 + $0x4380] sm:$0xff]
      %v2461 = vld [vmem:[%s278 + $0x4388] sm:$0xff]
      %v2462 = vld [vmem:[%s278 + $0x4390] sm:$0xff]
      %v2463 = vld [vmem:[%s278 + $0x4398] sm:$0xff]
      %v2464 = vld [vmem:[%s278 + $0x43a0] sm:$0xff]
      %v2465 = vld [vmem:[%s278 + $0x43a8] sm:$0xff]
      %v2466 = vld [vmem:[%s278 + $0x43b0] sm:$0xff]
      %v2467 = vld [vmem:[%s278 + $0x43b8] sm:$0xff]
      %v2468 = vld [vmem:[%s278 + $0x43c0] sm:$0xff]
      %v2469 = vld [vmem:[%s278 + $0x43c8] sm:$0xff]
      %v2470 = vld [vmem:[%s278 + $0x43d0] sm:$0xff]
      %v2471 = vld [vmem:[%s278 + $0x43d8] sm:$0xff]
      %v2472 = vld [vmem:[%s278 + $0x43e0] sm:$0xff]
      %v2473 = vld [vmem:[%s278 + $0x43e8] sm:$0xff]
      %v2474 = vld [vmem:[%s278 + $0x43f0] sm:$0xff]
      %v2475 = vld [vmem:[%s278 + $0x43f8] sm:$0xff]
      %v2481 = vlaneseq
      %v2482 = vshrl.u32 %v2481, 7
      %v2483 = vsub.s32 0, %v2482
      %v2484 = vrot.slane %v295, %v2483
      %v2485 = vlaneseq
      %v2486 = vshrl.u32 %v2485, 7
      %v2487 = vsub.s32 1, %v2486
      %v2488 = vrot.slane %v295, %v2487
      %v2489 = vlaneseq
      %v2490 = vshrl.u32 %v2489, 7
      %v2491 = vsub.s32 2, %v2490
      %v2492 = vrot.slane %v295, %v2491
      %v2493 = vlaneseq
      %v2494 = vshrl.u32 %v2493, 7
      %v2495 = vsub.s32 3, %v2494
      %v2496 = vrot.slane %v295, %v2495
      %v2497 = vlaneseq
      %v2498 = vshrl.u32 %v2497, 7
      %v2499 = vsub.s32 4, %v2498
      %v2500 = vrot.slane %v295, %v2499
      %v2501 = vlaneseq
      %v2502 = vshrl.u32 %v2501, 7
      %v2503 = vsub.s32 5, %v2502
      %v2504 = vrot.slane %v295, %v2503
      %v2505 = vlaneseq
      %v2506 = vshrl.u32 %v2505, 7
      %v2507 = vsub.s32 6, %v2506
      %v2508 = vrot.slane %v295, %v2507
      %v2509 = vlaneseq
      %v2510 = vshrl.u32 %v2509, 7
      %v2511 = vsub.s32 7, %v2510
      %v2512 = vrot.slane %v295, %v2511
      %v2513 = vlaneseq
      %v2514 = vshrl.u32 %v2513, 7
      %v2515 = vsub.s32 0, %v2514
      %v2516 = vrot.slane %v296, %v2515
      %v2517 = vlaneseq
      %v2518 = vshrl.u32 %v2517, 7
      %v2519 = vsub.s32 1, %v2518
      %v2520 = vrot.slane %v296, %v2519
      %v2521 = vlaneseq
      %v2522 = vshrl.u32 %v2521, 7
      %v2523 = vsub.s32 2, %v2522
      %v2524 = vrot.slane %v296, %v2523
      %v2525 = vlaneseq
      %v2526 = vshrl.u32 %v2525, 7
      %v2527 = vsub.s32 3, %v2526
      %v2528 = vrot.slane %v296, %v2527
      %v2529 = vlaneseq
      %v2530 = vshrl.u32 %v2529, 7
      %v2531 = vsub.s32 4, %v2530
      %v2532 = vrot.slane %v296, %v2531
      %v2533 = vlaneseq
      %v2534 = vshrl.u32 %v2533, 7
      %v2535 = vsub.s32 5, %v2534
      %v2536 = vrot.slane %v296, %v2535
      %v2537 = vlaneseq
      %v2538 = vshrl.u32 %v2537, 7
      %v2539 = vsub.s32 6, %v2538
      %v2540 = vrot.slane %v296, %v2539
      %v2541 = vlaneseq
      %v2542 = vshrl.u32 %v2541, 7
      %v2543 = vsub.s32 7, %v2542
      %v2544 = vrot.slane %v296, %v2543
      %v2545 = vlaneseq
      %v2546 = vshrl.u32 %v2545, 7
      %v2547 = vsub.s32 0, %v2546
      %v2548 = vrot.slane %v297, %v2547
      %v2549 = vlaneseq
      %v2550 = vshrl.u32 %v2549, 7
      %v2551 = vsub.s32 1, %v2550
      %v2552 = vrot.slane %v297, %v2551
      %v2553 = vlaneseq
      %v2554 = vshrl.u32 %v2553, 7
      %v2555 = vsub.s32 2, %v2554
      %v2556 = vrot.slane %v297, %v2555
      %v2557 = vlaneseq
      %v2558 = vshrl.u32 %v2557, 7
      %v2559 = vsub.s32 3, %v2558
      %v2560 = vrot.slane %v297, %v2559
      %v2561 = vlaneseq
      %v2562 = vshrl.u32 %v2561, 7
      %v2563 = vsub.s32 4, %v2562
      %v2564 = vrot.slane %v297, %v2563
      %v2565 = vlaneseq
      %v2566 = vshrl.u32 %v2565, 7
      %v2567 = vsub.s32 5, %v2566
      %v2568 = vrot.slane %v297, %v2567
      %v2569 = vlaneseq
      %v2570 = vshrl.u32 %v2569, 7
      %v2571 = vsub.s32 6, %v2570
      %v2572 = vrot.slane %v297, %v2571
      %v2573 = vlaneseq
      %v2574 = vshrl.u32 %v2573, 7
      %v2575 = vsub.s32 7, %v2574
      %v2576 = vrot.slane %v297, %v2575
      %v2577 = vlaneseq
      %v2578 = vshrl.u32 %v2577, 7
      %v2579 = vsub.s32 0, %v2578
      %v2580 = vrot.slane %v298, %v2579
      %v2581 = vlaneseq
      %v2582 = vshrl.u32 %v2581, 7
      %v2583 = vsub.s32 1, %v2582
      %v2584 = vrot.slane %v298, %v2583
      %v2585 = vlaneseq
      %v2586 = vshrl.u32 %v2585, 7
      %v2587 = vsub.s32 2, %v2586
      %v2588 = vrot.slane %v298, %v2587
      %v2589 = vlaneseq
      %v2590 = vshrl.u32 %v2589, 7
      %v2591 = vsub.s32 3, %v2590
      %v2592 = vrot.slane %v298, %v2591
      %v2593 = vlaneseq
      %v2594 = vshrl.u32 %v2593, 7
      %v2595 = vsub.s32 4, %v2594
      %v2596 = vrot.slane %v298, %v2595
      %v2597 = vlaneseq
      %v2598 = vshrl.u32 %v2597, 7
      %v2599 = vsub.s32 5, %v2598
      %v2600 = vrot.slane %v298, %v2599
      %v2601 = vlaneseq
      %v2602 = vshrl.u32 %v2601, 7
      %v2603 = vsub.s32 6, %v2602
      %v2604 = vrot.slane %v298, %v2603
      %v2605 = vlaneseq
      %v2606 = vshrl.u32 %v2605, 7
      %v2607 = vsub.s32 7, %v2606
      %v2608 = vrot.slane %v298, %v2607
      %v2609 = vlaneseq
      %v2610 = vshrl.u32 %v2609, 7
      %v2611 = vsub.s32 0, %v2610
      %v2612 = vrot.slane %v299, %v2611
      %v2613 = vlaneseq
      %v2614 = vshrl.u32 %v2613, 7
      %v2615 = vsub.s32 1, %v2614
      %v2616 = vrot.slane %v299, %v2615
      %2651 = vmatprep.subr.mxu0 %v361
      %2652 = vmatpush1.msra.mxu0 %v360
      %2653 = vmatprep.subr.mxu0 %v357
      %2654 = vmatpush1.msra.mxu0 %v356
      %2655 = vmatprep.subr.mxu0 %v353
      %2656 = vmatpush1.msra.mxu0 %v352
      %2657 = vmatprep.subr.mxu0 %v349
      %2658 = vmatpush1.msra.mxu0 %v348
      %2659 = vmatprep.subr.mxu0 %v345
      %2660 = vmatpush1.msra.mxu0 %v344
      %2661 = vmatprep.subr.mxu0 %v341
      %2662 = vmatpush1.msra.mxu0 %v340
      %2663 = vmatprep.subr.mxu0 %v337
      %2664 = vmatpush1.msra.mxu0 %v336
      %2665 = vmatprep.subr.mxu0 %v333
      %2666 = vmatpush1.msra.mxu0 %v332
      %2667 = vmatprep.subr.mxu0 %v329
      %2668 = vmatpush1.msra.mxu0 %v328
      %2669 = vmatprep.subr.mxu0 %v325
      %2670 = vmatpush1.msra.mxu0 %v324
      %2671 = vmatprep.subr.mxu0 %v321
      %2672 = vmatpush1.msra.mxu0 %v320
      %2673 = vmatprep.subr.mxu0 %v317
      %2674 = vmatpush1.msra.mxu0 %v316
      %2675 = vmatprep.subr.mxu0 %v313
      %2676 = vmatpush1.msra.mxu0 %v312
      %2677 = vmatprep.subr.mxu0 %v309
      %2678 = vmatpush1.msra.mxu0 %v308
      %2679 = vmatprep.subr.mxu0 %v305
      %2680 = vmatpush1.msra.mxu0 %v304
      %2681 = vmatprep.subr.mxu0 %v301
      %2682 = vmatpush1.msra.mxu0 %v300
      %2683 = vmatprep.subr.mxu0 %v425
      %2684 = vmatpush2.msra.mxu0 %v424
      %2685 = vmatprep.subr.mxu0 %v421
      %2686 = vmatpush2.msra.mxu0 %v420
      %2687 = vmatprep.subr.mxu0 %v417
      %2688 = vmatpush2.msra.mxu0 %v416
      %2689 = vmatprep.subr.mxu0 %v413
      %2690 = vmatpush2.msra.mxu0 %v412
      %2691 = vmatprep.subr.mxu0 %v409
      %2692 = vmatpush2.msra.mxu0 %v408
      %2693 = vmatprep.subr.mxu0 %v405
      %2694 = vmatpush2.msra.mxu0 %v404
      %2695 = vmatprep.subr.mxu0 %v401
      %2696 = vmatpush2.msra.mxu0 %v400
      %2697 = vmatprep.subr.mxu0 %v397
      %2698 = vmatpush2.msra.mxu0 %v396
      %2699 = vmatprep.subr.mxu0 %v393
      %2700 = vmatpush2.msra.mxu0 %v392
      %2701 = vmatprep.subr.mxu0 %v389
      %2702 = vmatpush2.msra.mxu0 %v388
      %2703 = vmatprep.subr.mxu0 %v385
      %2704 = vmatpush2.msra.mxu0 %v384
      %2705 = vmatprep.subr.mxu0 %v381
      %2706 = vmatpush2.msra.mxu0 %v380
      %2707 = vmatprep.subr.mxu0 %v377
      %2708 = vmatpush2.msra.mxu0 %v376
      %2709 = vmatprep.subr.mxu0 %v373
      %2710 = vmatpush2.msra.mxu0 %v372
      %2711 = vmatprep.subr.mxu0 %v369
      %2712 = vmatpush2.msra.mxu0 %v368
      %2713 = vmatprep.subr.mxu0 %v365
      %2714 = vmatpush2.msra.mxu0 %v364
      %2715 = vmatprep.mubr.f32.mxu0 %v2488
      %2716 = vmatmul.mubr.f32.gmra.mxu0 %v2484
      %v2717 = vpop.f32.mrf.mxu0
      %v2718 = vadd.f32 0.0, %v2717
      %v2719 = vpop.f32.mrf.mxu0
      %v2720 = vadd.f32 0.0, %v2719
      %2721 = vdwg.mxu0
      %2722 = vmatprep.subr.mxu0 %v489
      %2723 = vmatpush1.msra.mxu0 %v488
      %2724 = vmatprep.subr.mxu0 %v485
      %2725 = vmatpush1.msra.mxu0 %v484
      %2726 = vmatprep.subr.mxu0 %v481
      %2727 = vmatpush1.msra.mxu0 %v480
      %2728 = vmatprep.subr.mxu0 %v477
      %2729 = vmatpush1.msra.mxu0 %v476
      %2730 = vmatprep.subr.mxu0 %v473
      %2731 = vmatpush1.msra.mxu0 %v472
      %2732 = vmatprep.subr.mxu0 %v469
      %2733 = vmatpush1.msra.mxu0 %v468
      %2734 = vmatprep.subr.mxu0 %v465
      %2735 = vmatpush1.msra.mxu0 %v464
      %2736 = vmatprep.subr.mxu0 %v461
      %2737 = vmatpush1.msra.mxu0 %v460
      %2738 = vmatprep.subr.mxu0 %v457
      %2739 = vmatpush1.msra.mxu0 %v456
      %2740 = vmatprep.subr.mxu0 %v453
      %2741 = vmatpush1.msra.mxu0 %v452
      %2742 = vmatprep.subr.mxu0 %v449
      %2743 = vmatpush1.msra.mxu0 %v448
      %2744 = vmatprep.subr.mxu0 %v445
      %2745 = vmatpush1.msra.mxu0 %v444
      %2746 = vmatprep.subr.mxu0 %v441
      %2747 = vmatpush1.msra.mxu0 %v440
      %2748 = vmatprep.subr.mxu0 %v437
      %2749 = vmatpush1.msra.mxu0 %v436
      %2750 = vmatprep.subr.mxu0 %v433
      %2751 = vmatpush1.msra.mxu0 %v432
      %2752 = vmatprep.subr.mxu0 %v429
      %2753 = vmatpush1.msra.mxu0 %v428
      %2754 = vmatprep.subr.mxu0 %v553
      %2755 = vmatpush2.msra.mxu0 %v552
      %2756 = vmatprep.subr.mxu0 %v549
      %2757 = vmatpush2.msra.mxu0 %v548
      %2758 = vmatprep.subr.mxu0 %v545
      %2759 = vmatpush2.msra.mxu0 %v544
      %2760 = vmatprep.subr.mxu0 %v541
      %2761 = vmatpush2.msra.mxu0 %v540
      %2762 = vmatprep.subr.mxu0 %v537
      %2763 = vmatpush2.msra.mxu0 %v536
      %2764 = vmatprep.subr.mxu0 %v533
      %2765 = vmatpush2.msra.mxu0 %v532
      %2766 = vmatprep.subr.mxu0 %v529
      %2767 = vmatpush2.msra.mxu0 %v528
      %2768 = vmatprep.subr.mxu0 %v525
      %2769 = vmatpush2.msra.mxu0 %v524
      %2770 = vmatprep.subr.mxu0 %v521
      %2771 = vmatpush2.msra.mxu0 %v520
      %2772 = vmatprep.subr.mxu0 %v517
      %2773 = vmatpush2.msra.mxu0 %v516
      %2774 = vmatprep.subr.mxu0 %v513
      %2775 = vmatpush2.msra.mxu0 %v512
      %2776 = vmatprep.subr.mxu0 %v509
      %2777 = vmatpush2.msra.mxu0 %v508
      %2778 = vmatprep.subr.mxu0 %v505
      %2779 = vmatpush2.msra.mxu0 %v504
      %2780 = vmatprep.subr.mxu0 %v501
      %2781 = vmatpush2.msra.mxu0 %v500
      %2782 = vmatprep.subr.mxu0 %v497
      %2783 = vmatpush2.msra.mxu0 %v496
      %2784 = vmatprep.subr.mxu0 %v493
      %2785 = vmatpush2.msra.mxu0 %v492
      %2786 = vmatprep.mubr.f32.mxu0 %v2496
      %2787 = vmatmul.mubr.f32.gmra.mxu0 %v2492
      %v2788 = vpop.f32.mrf.mxu0
      %v2789 = vadd.f32 %v2718, %v2788
      %v2790 = vpop.f32.mrf.mxu0
      %v2791 = vadd.f32 %v2720, %v2790
      %2792 = vdwg.mxu0
      %2793 = vmatprep.subr.mxu0 %v617
      %2794 = vmatpush1.msra.mxu0 %v616
      %2795 = vmatprep.subr.mxu0 %v613
      %2796 = vmatpush1.msra.mxu0 %v612
      %2797 = vmatprep.subr.mxu0 %v609
      %2798 = vmatpush1.msra.mxu0 %v608
      %2799 = vmatprep.subr.mxu0 %v605
      %2800 = vmatpush1.msra.mxu0 %v604
      %2801 = vmatprep.subr.mxu0 %v601
      %2802 = vmatpush1.msra.mxu0 %v600
      %2803 = vmatprep.subr.mxu0 %v597
      %2804 = vmatpush1.msra.mxu0 %v596
      %2805 = vmatprep.subr.mxu0 %v593
      %2806 = vmatpush1.msra.mxu0 %v592
      %2807 = vmatprep.subr.mxu0 %v589
      %2808 = vmatpush1.msra.mxu0 %v588
      %2809 = vmatprep.subr.mxu0 %v585
      %2810 = vmatpush1.msra.mxu0 %v584
      %2811 = vmatprep.subr.mxu0 %v581
      %2812 = vmatpush1.msra.mxu0 %v580
      %2813 = vmatprep.subr.mxu0 %v577
      %2814 = vmatpush1.msra.mxu0 %v576
      %2815 = vmatprep.subr.mxu0 %v573
      %2816 = vmatpush1.msra.mxu0 %v572
      %2817 = vmatprep.subr.mxu0 %v569
      %2818 = vmatpush1.msra.mxu0 %v568
      %2819 = vmatprep.subr.mxu0 %v565
      %2820 = vmatpush1.msra.mxu0 %v564
      %2821 = vmatprep.subr.mxu0 %v561
      %2822 = vmatpush1.msra.mxu0 %v560
      %2823 = vmatprep.subr.mxu0 %v557
      %2824 = vmatpush1.msra.mxu0 %v556
      %2825 = vmatprep.subr.mxu0 %v681
      %2826 = vmatpush2.msra.mxu0 %v680
      %2827 = vmatprep.subr.mxu0 %v677
      %2828 = vmatpush2.msra.mxu0 %v676
      %2829 = vmatprep.subr.mxu0 %v673
      %2830 = vmatpush2.msra.mxu0 %v672
      %2831 = vmatprep.subr.mxu0 %v669
      %2832 = vmatpush2.msra.mxu0 %v668
      %2833 = vmatprep.subr.mxu0 %v665
      %2834 = vmatpush2.msra.mxu0 %v664
      %2835 = vmatprep.subr.mxu0 %v661
      %2836 = vmatpush2.msra.mxu0 %v660
      %2837 = vmatprep.subr.mxu0 %v657
      %2838 = vmatpush2.msra.mxu0 %v656
      %2839 = vmatprep.subr.mxu0 %v653
      %2840 = vmatpush2.msra.mxu0 %v652
      %2841 = vmatprep.subr.mxu0 %v649
      %2842 = vmatpush2.msra.mxu0 %v648
      %2843 = vmatprep.subr.mxu0 %v645
      %2844 = vmatpush2.msra.mxu0 %v644
      %2845 = vmatprep.subr.mxu0 %v641
      %2846 = vmatpush2.msra.mxu0 %v640
      %2847 = vmatprep.subr.mxu0 %v637
      %2848 = vmatpush2.msra.mxu0 %v636
      %2849 = vmatprep.subr.mxu0 %v633
      %2850 = vmatpush2.msra.mxu0 %v632
      %2851 = vmatprep.subr.mxu0 %v629
      %2852 = vmatpush2.msra.mxu0 %v628
      %2853 = vmatprep.subr.mxu0 %v625
      %2854 = vmatpush2.msra.mxu0 %v624
      %2855 = vmatprep.subr.mxu0 %v621
      %2856 = vmatpush2.msra.mxu0 %v620
      %2857 = vmatprep.mubr.f32.mxu0 %v2504
      %2858 = vmatmul.mubr.f32.gmra.mxu0 %v2500
      %v2859 = vpop.f32.mrf.mxu0
      %v2860 = vadd.f32 %v2789, %v2859
      %v2861 = vpop.f32.mrf.mxu0
      %v2862 = vadd.f32 %v2791, %v2861
      %2863 = vdwg.mxu0
      %2864 = vmatprep.subr.mxu0 %v745
      %2865 = vmatpush1.msra.mxu0 %v744
      %2866 = vmatprep.subr.mxu0 %v741
      %2867 = vmatpush1.msra.mxu0 %v740
      %2868 = vmatprep.subr.mxu0 %v737
      %2869 = vmatpush1.msra.mxu0 %v736
      %2870 = vmatprep.subr.mxu0 %v733
      %2871 = vmatpush1.msra.mxu0 %v732
      %2872 = vmatprep.subr.mxu0 %v729
      %2873 = vmatpush1.msra.mxu0 %v728
      %2874 = vmatprep.subr.mxu0 %v725
      %2875 = vmatpush1.msra.mxu0 %v724
      %2876 = vmatprep.subr.mxu0 %v721
      %2877 = vmatpush1.msra.mxu0 %v720
      %2878 = vmatprep.subr.mxu0 %v717
      %2879 = vmatpush1.msra.mxu0 %v716
      %2880 = vmatprep.subr.mxu0 %v713
      %2881 = vmatpush1.msra.mxu0 %v712
      %2882 = vmatprep.subr.mxu0 %v709
      %2883 = vmatpush1.msra.mxu0 %v708
      %2884 = vmatprep.subr.mxu0 %v705
      %2885 = vmatpush1.msra.mxu0 %v704
      %2886 = vmatprep.subr.mxu0 %v701
      %2887 = vmatpush1.msra.mxu0 %v700
      %2888 = vmatprep.subr.mxu0 %v697
      %2889 = vmatpush1.msra.mxu0 %v696
      %2890 = vmatprep.subr.mxu0 %v693
      %2891 = vmatpush1.msra.mxu0 %v692
      %2892 = vmatprep.subr.mxu0 %v689
      %2893 = vmatpush1.msra.mxu0 %v688
      %2894 = vmatprep.subr.mxu0 %v685
      %2895 = vmatpush1.msra.mxu0 %v684
      %2896 = vmatprep.subr.mxu0 %v809
      %2897 = vmatpush2.msra.mxu0 %v808
      %2898 = vmatprep.subr.mxu0 %v805
      %2899 = vmatpush2.msra.mxu0 %v804
      %2900 = vmatprep.subr.mxu0 %v801
      %2901 = vmatpush2.msra.mxu0 %v800
      %2902 = vmatprep.subr.mxu0 %v797
      %2903 = vmatpush2.msra.mxu0 %v796
      %2904 = vmatprep.subr.mxu0 %v793
      %2905 = vmatpush2.msra.mxu0 %v792
      %2906 = vmatprep.subr.mxu0 %v789
      %2907 = vmatpush2.msra.mxu0 %v788
      %2908 = vmatprep.subr.mxu0 %v785
      %2909 = vmatpush2.msra.mxu0 %v784
      %2910 = vmatprep.subr.mxu0 %v781
      %2911 = vmatpush2.msra.mxu0 %v780
      %2912 = vmatprep.subr.mxu0 %v777
      %2913 = vmatpush2.msra.mxu0 %v776
      %2914 = vmatprep.subr.mxu0 %v773
      %2915 = vmatpush2.msra.mxu0 %v772
      %2916 = vmatprep.subr.mxu0 %v769
      %2917 = vmatpush2.msra.mxu0 %v768
      %2918 = vmatprep.subr.mxu0 %v765
      %2919 = vmatpush2.msra.mxu0 %v764
      %2920 = vmatprep.subr.mxu0 %v761
      %2921 = vmatpush2.msra.mxu0 %v760
      %2922 = vmatprep.subr.mxu0 %v757
      %2923 = vmatpush2.msra.mxu0 %v756
      %2924 = vmatprep.subr.mxu0 %v753
      %2925 = vmatpush2.msra.mxu0 %v752
      %2926 = vmatprep.subr.mxu0 %v749
      %2927 = vmatpush2.msra.mxu0 %v748
      %2928 = vmatprep.mubr.f32.mxu0 %v2512
      %2929 = vmatmul.mubr.f32.gmra.mxu0 %v2508
      %v2930 = vpop.f32.mrf.mxu0
      %v2931 = vadd.f32 %v2860, %v2930
      %v2932 = vpop.f32.mrf.mxu0
      %v2933 = vadd.f32 %v2862, %v2932
      %2934 = vdwg.mxu0
      %2935 = vmatprep.subr.mxu0 %v873
      %2936 = vmatpush1.msra.mxu0 %v872
      %2937 = vmatprep.subr.mxu0 %v869
      %2938 = vmatpush1.msra.mxu0 %v868
      %2939 = vmatprep.subr.mxu0 %v865
      %2940 = vmatpush1.msra.mxu0 %v864
      %2941 = vmatprep.subr.mxu0 %v861
      %2942 = vmatpush1.msra.mxu0 %v860
      %2943 = vmatprep.subr.mxu0 %v857
      %2944 = vmatpush1.msra.mxu0 %v856
      %2945 = vmatprep.subr.mxu0 %v853
      %2946 = vmatpush1.msra.mxu0 %v852
      %2947 = vmatprep.subr.mxu0 %v849
      %2948 = vmatpush1.msra.mxu0 %v848
      %2949 = vmatprep.subr.mxu0 %v845
      %2950 = vmatpush1.msra.mxu0 %v844
      %2951 = vmatprep.subr.mxu0 %v841
      %2952 = vmatpush1.msra.mxu0 %v840
      %2953 = vmatprep.subr.mxu0 %v837
      %2954 = vmatpush1.msra.mxu0 %v836
      %2955 = vmatprep.subr.mxu0 %v833
      %2956 = vmatpush1.msra.mxu0 %v832
      %2957 = vmatprep.subr.mxu0 %v829
      %2958 = vmatpush1.msra.mxu0 %v828
      %2959 = vmatprep.subr.mxu0 %v825
      %2960 = vmatpush1.msra.mxu0 %v824
      %2961 = vmatprep.subr.mxu0 %v821
      %2962 = vmatpush1.msra.mxu0 %v820
      %2963 = vmatprep.subr.mxu0 %v817
      %2964 = vmatpush1.msra.mxu0 %v816
      %2965 = vmatprep.subr.mxu0 %v813
      %2966 = vmatpush1.msra.mxu0 %v812
      %2967 = vmatprep.subr.mxu0 %v937
      %2968 = vmatpush2.msra.mxu0 %v936
      %2969 = vmatprep.subr.mxu0 %v933
      %2970 = vmatpush2.msra.mxu0 %v932
      %2971 = vmatprep.subr.mxu0 %v929
      %2972 = vmatpush2.msra.mxu0 %v928
      %2973 = vmatprep.subr.mxu0 %v925
      %2974 = vmatpush2.msra.mxu0 %v924
      %2975 = vmatprep.subr.mxu0 %v921
      %2976 = vmatpush2.msra.mxu0 %v920
      %2977 = vmatprep.subr.mxu0 %v917
      %2978 = vmatpush2.msra.mxu0 %v916
      %2979 = vmatprep.subr.mxu0 %v913
      %2980 = vmatpush2.msra.mxu0 %v912
      %2981 = vmatprep.subr.mxu0 %v909
      %2982 = vmatpush2.msra.mxu0 %v908
      %2983 = vmatprep.subr.mxu0 %v905
      %2984 = vmatpush2.msra.mxu0 %v904
      %2985 = vmatprep.subr.mxu0 %v901
      %2986 = vmatpush2.msra.mxu0 %v900
      %2987 = vmatprep.subr.mxu0 %v897
      %2988 = vmatpush2.msra.mxu0 %v896
      %2989 = vmatprep.subr.mxu0 %v893
      %2990 = vmatpush2.msra.mxu0 %v892
      %2991 = vmatprep.subr.mxu0 %v889
      %2992 = vmatpush2.msra.mxu0 %v888
      %2993 = vmatprep.subr.mxu0 %v885
      %2994 = vmatpush2.msra.mxu0 %v884
      %2995 = vmatprep.subr.mxu0 %v881
      %2996 = vmatpush2.msra.mxu0 %v880
      %2997 = vmatprep.subr.mxu0 %v877
      %2998 = vmatpush2.msra.mxu0 %v876
      %2999 = vmatprep.mubr.f32.mxu0 %v2520
      %3000 = vmatmul.mubr.f32.gmra.mxu0 %v2516
      %v3001 = vpop.f32.mrf.mxu0
      %v3002 = vadd.f32 %v2931, %v3001
      %v3003 = vpop.f32.mrf.mxu0
      %v3004 = vadd.f32 %v2933, %v3003
      %3005 = vdwg.mxu0
      %3006 = vmatprep.subr.mxu0 %v1001
      %3007 = vmatpush1.msra.mxu0 %v1000
      %3008 = vmatprep.subr.mxu0 %v997
      %3009 = vmatpush1.msra.mxu0 %v996
      %3010 = vmatprep.subr.mxu0 %v993
      %3011 = vmatpush1.msra.mxu0 %v992
      %3012 = vmatprep.subr.mxu0 %v989
      %3013 = vmatpush1.msra.mxu0 %v988
      %3014 = vmatprep.subr.mxu0 %v985
      %3015 = vmatpush1.msra.mxu0 %v984
      %3016 = vmatprep.subr.mxu0 %v981
      %3017 = vmatpush1.msra.mxu0 %v980
      %3018 = vmatprep.subr.mxu0 %v977
      %3019 = vmatpush1.msra.mxu0 %v976
      %3020 = vmatprep.subr.mxu0 %v973
      %3021 = vmatpush1.msra.mxu0 %v972
      %3022 = vmatprep.subr.mxu0 %v969
      %3023 = vmatpush1.msra.mxu0 %v968
      %3024 = vmatprep.subr.mxu0 %v965
      %3025 = vmatpush1.msra.mxu0 %v964
      %3026 = vmatprep.subr.mxu0 %v961
      %3027 = vmatpush1.msra.mxu0 %v960
      %3028 = vmatprep.subr.mxu0 %v957
      %3029 = vmatpush1.msra.mxu0 %v956
      %3030 = vmatprep.subr.mxu0 %v953
      %3031 = vmatpush1.msra.mxu0 %v952
      %3032 = vmatprep.subr.mxu0 %v949
      %3033 = vmatpush1.msra.mxu0 %v948
      %3034 = vmatprep.subr.mxu0 %v945
      %3035 = vmatpush1.msra.mxu0 %v944
      %3036 = vmatprep.subr.mxu0 %v941
      %3037 = vmatpush1.msra.mxu0 %v940
      %3038 = vmatprep.subr.mxu0 %v1065
      %3039 = vmatpush2.msra.mxu0 %v1064
      %3040 = vmatprep.subr.mxu0 %v1061
      %3041 = vmatpush2.msra.mxu0 %v1060
      %3042 = vmatprep.subr.mxu0 %v1057
      %3043 = vmatpush2.msra.mxu0 %v1056
      %3044 = vmatprep.subr.mxu0 %v1053
      %3045 = vmatpush2.msra.mxu0 %v1052
      %3046 = vmatprep.subr.mxu0 %v1049
      %3047 = vmatpush2.msra.mxu0 %v1048
      %3048 = vmatprep.subr.mxu0 %v1045
      %3049 = vmatpush2.msra.mxu0 %v1044
      %3050 = vmatprep.subr.mxu0 %v1041
      %3051 = vmatpush2.msra.mxu0 %v1040
      %3052 = vmatprep.subr.mxu0 %v1037
      %3053 = vmatpush2.msra.mxu0 %v1036
      %3054 = vmatprep.subr.mxu0 %v1033
      %3055 = vmatpush2.msra.mxu0 %v1032
      %3056 = vmatprep.subr.mxu0 %v1029
      %3057 = vmatpush2.msra.mxu0 %v1028
      %3058 = vmatprep.subr.mxu0 %v1025
      %3059 = vmatpush2.msra.mxu0 %v1024
      %3060 = vmatprep.subr.mxu0 %v1021
      %3061 = vmatpush2.msra.mxu0 %v1020
      %3062 = vmatprep.subr.mxu0 %v1017
      %3063 = vmatpush2.msra.mxu0 %v1016
      %3064 = vmatprep.subr.mxu0 %v1013
      %3065 = vmatpush2.msra.mxu0 %v1012
      %3066 = vmatprep.subr.mxu0 %v1009
      %3067 = vmatpush2.msra.mxu0 %v1008
      %3068 = vmatprep.subr.mxu0 %v1005
      %3069 = vmatpush2.msra.mxu0 %v1004
      %3070 = vmatprep.mubr.f32.mxu0 %v2528
      %3071 = vmatmul.mubr.f32.gmra.mxu0 %v2524
      %v3072 = vpop.f32.mrf.mxu0
      %v3073 = vadd.f32 %v3002, %v3072
      %v3074 = vpop.f32.mrf.mxu0
      %v3075 = vadd.f32 %v3004, %v3074
      %3076 = vdwg.mxu0
      %3077 = vmatprep.subr.mxu0 %v1129
      %3078 = vmatpush1.msra.mxu0 %v1128
      %3079 = vmatprep.subr.mxu0 %v1125
      %3080 = vmatpush1.msra.mxu0 %v1124
      %3081 = vmatprep.subr.mxu0 %v1121
      %3082 = vmatpush1.msra.mxu0 %v1120
      %3083 = vmatprep.subr.mxu0 %v1117
      %3084 = vmatpush1.msra.mxu0 %v1116
      %3085 = vmatprep.subr.mxu0 %v1113
      %3086 = vmatpush1.msra.mxu0 %v1112
      %3087 = vmatprep.subr.mxu0 %v1109
      %3088 = vmatpush1.msra.mxu0 %v1108
      %3089 = vmatprep.subr.mxu0 %v1105
      %3090 = vmatpush1.msra.mxu0 %v1104
      %3091 = vmatprep.subr.mxu0 %v1101
      %3092 = vmatpush1.msra.mxu0 %v1100
      %3093 = vmatprep.subr.mxu0 %v1097
      %3094 = vmatpush1.msra.mxu0 %v1096
      %3095 = vmatprep.subr.mxu0 %v1093
      %3096 = vmatpush1.msra.mxu0 %v1092
      %3097 = vmatprep.subr.mxu0 %v1089
      %3098 = vmatpush1.msra.mxu0 %v1088
      %3099 = vmatprep.subr.mxu0 %v1085
      %3100 = vmatpush1.msra.mxu0 %v1084
      %3101 = vmatprep.subr.mxu0 %v1081
      %3102 = vmatpush1.msra.mxu0 %v1080
      %3103 = vmatprep.subr.mxu0 %v1077
      %3104 = vmatpush1.msra.mxu0 %v1076
      %3105 = vmatprep.subr.mxu0 %v1073
      %3106 = vmatpush1.msra.mxu0 %v1072
      %3107 = vmatprep.subr.mxu0 %v1069
      %3108 = vmatpush1.msra.mxu0 %v1068
      %3109 = vmatprep.subr.mxu0 %v1193
      %3110 = vmatpush2.msra.mxu0 %v1192
      %3111 = vmatprep.subr.mxu0 %v1189
      %3112 = vmatpush2.msra.mxu0 %v1188
      %3113 = vmatprep.subr.mxu0 %v1185
      %3114 = vmatpush2.msra.mxu0 %v1184
      %3115 = vmatprep.subr.mxu0 %v1181
      %3116 = vmatpush2.msra.mxu0 %v1180
      %3117 = vmatprep.subr.mxu0 %v1177
      %3118 = vmatpush2.msra.mxu0 %v1176
      %3119 = vmatprep.subr.mxu0 %v1173
      %3120 = vmatpush2.msra.mxu0 %v1172
      %3121 = vmatprep.subr.mxu0 %v1169
      %3122 = vmatpush2.msra.mxu0 %v1168
      %3123 = vmatprep.subr.mxu0 %v1165
      %3124 = vmatpush2.msra.mxu0 %v1164
      %3125 = vmatprep.subr.mxu0 %v1161
      %3126 = vmatpush2.msra.mxu0 %v1160
      %3127 = vmatprep.subr.mxu0 %v1157
      %3128 = vmatpush2.msra.mxu0 %v1156
      %3129 = vmatprep.subr.mxu0 %v1153
      %3130 = vmatpush2.msra.mxu0 %v1152
      %3131 = vmatprep.subr.mxu0 %v1149
      %3132 = vmatpush2.msra.mxu0 %v1148
      %3133 = vmatprep.subr.mxu0 %v1145
      %3134 = vmatpush2.msra.mxu0 %v1144
      %3135 = vmatprep.subr.mxu0 %v1141
      %3136 = vmatpush2.msra.mxu0 %v1140
      %3137 = vmatprep.subr.mxu0 %v1137
      %3138 = vmatpush2.msra.mxu0 %v1136
      %3139 = vmatprep.subr.mxu0 %v1133
      %3140 = vmatpush2.msra.mxu0 %v1132
      %3141 = vmatprep.mubr.f32.mxu0 %v2536
      %3142 = vmatmul.mubr.f32.gmra.mxu0 %v2532
      %v3143 = vpop.f32.mrf.mxu0
      %v3144 = vadd.f32 %v3073, %v3143
      %v3145 = vpop.f32.mrf.mxu0
      %v3146 = vadd.f32 %v3075, %v3145
      %3147 = vdwg.mxu0
      %3148 = vmatprep.subr.mxu0 %v1257
      %3149 = vmatpush1.msra.mxu0 %v1256
      %3150 = vmatprep.subr.mxu0 %v1253
      %3151 = vmatpush1.msra.mxu0 %v1252
      %3152 = vmatprep.subr.mxu0 %v1249
      %3153 = vmatpush1.msra.mxu0 %v1248
      %3154 = vmatprep.subr.mxu0 %v1245
      %3155 = vmatpush1.msra.mxu0 %v1244
      %3156 = vmatprep.subr.mxu0 %v1241
      %3157 = vmatpush1.msra.mxu0 %v1240
      %3158 = vmatprep.subr.mxu0 %v1237
      %3159 = vmatpush1.msra.mxu0 %v1236
      %3160 = vmatprep.subr.mxu0 %v1233
      %3161 = vmatpush1.msra.mxu0 %v1232
      %3162 = vmatprep.subr.mxu0 %v1229
      %3163 = vmatpush1.msra.mxu0 %v1228
      %3164 = vmatprep.subr.mxu0 %v1225
      %3165 = vmatpush1.msra.mxu0 %v1224
      %3166 = vmatprep.subr.mxu0 %v1221
      %3167 = vmatpush1.msra.mxu0 %v1220
      %3168 = vmatprep.subr.mxu0 %v1217
      %3169 = vmatpush1.msra.mxu0 %v1216
      %3170 = vmatprep.subr.mxu0 %v1213
      %3171 = vmatpush1.msra.mxu0 %v1212
      %3172 = vmatprep.subr.mxu0 %v1209
      %3173 = vmatpush1.msra.mxu0 %v1208
      %3174 = vmatprep.subr.mxu0 %v1205
      %3175 = vmatpush1.msra.mxu0 %v1204
      %3176 = vmatprep.subr.mxu0 %v1201
      %3177 = vmatpush1.msra.mxu0 %v1200
      %3178 = vmatprep.subr.mxu0 %v1197
      %3179 = vmatpush1.msra.mxu0 %v1196
      %3180 = vmatprep.subr.mxu0 %v1321
      %3181 = vmatpush2.msra.mxu0 %v1320
      %3182 = vmatprep.subr.mxu0 %v1317
      %3183 = vmatpush2.msra.mxu0 %v1316
      %3184 = vmatprep.subr.mxu0 %v1313
      %3185 = vmatpush2.msra.mxu0 %v1312
      %3186 = vmatprep.subr.mxu0 %v1309
      %3187 = vmatpush2.msra.mxu0 %v1308
      %3188 = vmatprep.subr.mxu0 %v1305
      %3189 = vmatpush2.msra.mxu0 %v1304
      %3190 = vmatprep.subr.mxu0 %v1301
      %3191 = vmatpush2.msra.mxu0 %v1300
      %3192 = vmatprep.subr.mxu0 %v1297
      %3193 = vmatpush2.msra.mxu0 %v1296
      %3194 = vmatprep.subr.mxu0 %v1293
      %3195 = vmatpush2.msra.mxu0 %v1292
      %3196 = vmatprep.subr.mxu0 %v1289
      %3197 = vmatpush2.msra.mxu0 %v1288
      %3198 = vmatprep.subr.mxu0 %v1285
      %3199 = vmatpush2.msra.mxu0 %v1284
      %3200 = vmatprep.subr.mxu0 %v1281
      %3201 = vmatpush2.msra.mxu0 %v1280
      %3202 = vmatprep.subr.mxu0 %v1277
      %3203 = vmatpush2.msra.mxu0 %v1276
      %3204 = vmatprep.subr.mxu0 %v1273
      %3205 = vmatpush2.msra.mxu0 %v1272
      %3206 = vmatprep.subr.mxu0 %v1269
      %3207 = vmatpush2.msra.mxu0 %v1268
      %3208 = vmatprep.subr.mxu0 %v1265
      %3209 = vmatpush2.msra.mxu0 %v1264
      %3210 = vmatprep.subr.mxu0 %v1261
      %3211 = vmatpush2.msra.mxu0 %v1260
      %3212 = vmatprep.mubr.f32.mxu0 %v2544
      %3213 = vmatmul.mubr.f32.gmra.mxu0 %v2540
      %v3214 = vpop.f32.mrf.mxu0
      %v3215 = vadd.f32 %v3144, %v3214
      %v3216 = vpop.f32.mrf.mxu0
      %v3217 = vadd.f32 %v3146, %v3216
      %3218 = vdwg.mxu0
      %3219 = vmatprep.subr.mxu0 %v1385
      %3220 = vmatpush1.msra.mxu0 %v1384
      %3221 = vmatprep.subr.mxu0 %v1381
      %3222 = vmatpush1.msra.mxu0 %v1380
      %3223 = vmatprep.subr.mxu0 %v1377
      %3224 = vmatpush1.msra.mxu0 %v1376
      %3225 = vmatprep.subr.mxu0 %v1373
      %3226 = vmatpush1.msra.mxu0 %v1372
      %3227 = vmatprep.subr.mxu0 %v1369
      %3228 = vmatpush1.msra.mxu0 %v1368
      %3229 = vmatprep.subr.mxu0 %v1365
      %3230 = vmatpush1.msra.mxu0 %v1364
      %3231 = vmatprep.subr.mxu0 %v1361
      %3232 = vmatpush1.msra.mxu0 %v1360
      %3233 = vmatprep.subr.mxu0 %v1357
      %3234 = vmatpush1.msra.mxu0 %v1356
      %3235 = vmatprep.subr.mxu0 %v1353
      %3236 = vmatpush1.msra.mxu0 %v1352
      %3237 = vmatprep.subr.mxu0 %v1349
      %3238 = vmatpush1.msra.mxu0 %v1348
      %3239 = vmatprep.subr.mxu0 %v1345
      %3240 = vmatpush1.msra.mxu0 %v1344
      %3241 = vmatprep.subr.mxu0 %v1341
      %3242 = vmatpush1.msra.mxu0 %v1340
      %3243 = vmatprep.subr.mxu0 %v1337
      %3244 = vmatpush1.msra.mxu0 %v1336
      %3245 = vmatprep.subr.mxu0 %v1333
      %3246 = vmatpush1.msra.mxu0 %v1332
      %3247 = vmatprep.subr.mxu0 %v1329
      %3248 = vmatpush1.msra.mxu0 %v1328
      %3249 = vmatprep.subr.mxu0 %v1325
      %3250 = vmatpush1.msra.mxu0 %v1324
      %3251 = vmatprep.subr.mxu0 %v1449
      %3252 = vmatpush2.msra.mxu0 %v1448
      %3253 = vmatprep.subr.mxu0 %v1445
      %3254 = vmatpush2.msra.mxu0 %v1444
      %3255 = vmatprep.subr.mxu0 %v1441
      %3256 = vmatpush2.msra.mxu0 %v1440
      %3257 = vmatprep.subr.mxu0 %v1437
      %3258 = vmatpush2.msra.mxu0 %v1436
      %3259 = vmatprep.subr.mxu0 %v1433
      %3260 = vmatpush2.msra.mxu0 %v1432
      %3261 = vmatprep.subr.mxu0 %v1429
      %3262 = vmatpush2.msra.mxu0 %v1428
      %3263 = vmatprep.subr.mxu0 %v1425
      %3264 = vmatpush2.msra.mxu0 %v1424
      %3265 = vmatprep.subr.mxu0 %v1421
      %3266 = vmatpush2.msra.mxu0 %v1420
      %3267 = vmatprep.subr.mxu0 %v1417
      %3268 = vmatpush2.msra.mxu0 %v1416
      %3269 = vmatprep.subr.mxu0 %v1413
      %3270 = vmatpush2.msra.mxu0 %v1412
      %3271 = vmatprep.subr.mxu0 %v1409
      %3272 = vmatpush2.msra.mxu0 %v1408
      %3273 = vmatprep.subr.mxu0 %v1405
      %3274 = vmatpush2.msra.mxu0 %v1404
      %3275 = vmatprep.subr.mxu0 %v1401
      %3276 = vmatpush2.msra.mxu0 %v1400
      %3277 = vmatprep.subr.mxu0 %v1397
      %3278 = vmatpush2.msra.mxu0 %v1396
      %3279 = vmatprep.subr.mxu0 %v1393
      %3280 = vmatpush2.msra.mxu0 %v1392
      %3281 = vmatprep.subr.mxu0 %v1389
      %3282 = vmatpush2.msra.mxu0 %v1388
      %3283 = vmatprep.mubr.f32.mxu0 %v2552
      %3284 = vmatmul.mubr.f32.gmra.mxu0 %v2548
      %v3285 = vpop.f32.mrf.mxu0
      %v3286 = vadd.f32 %v3215, %v3285
      %v3287 = vpop.f32.mrf.mxu0
      %v3288 = vadd.f32 %v3217, %v3287
      %3289 = vdwg.mxu0
      %3290 = vmatprep.subr.mxu0 %v1513
      %3291 = vmatpush1.msra.mxu0 %v1512
      %3292 = vmatprep.subr.mxu0 %v1509
      %3293 = vmatpush1.msra.mxu0 %v1508
      %3294 = vmatprep.subr.mxu0 %v1505
      %3295 = vmatpush1.msra.mxu0 %v1504
      %3296 = vmatprep.subr.mxu0 %v1501
      %3297 = vmatpush1.msra.mxu0 %v1500
      %3298 = vmatprep.subr.mxu0 %v1497
      %3299 = vmatpush1.msra.mxu0 %v1496
      %3300 = vmatprep.subr.mxu0 %v1493
      %3301 = vmatpush1.msra.mxu0 %v1492
      %3302 = vmatprep.subr.mxu0 %v1489
      %3303 = vmatpush1.msra.mxu0 %v1488
      %3304 = vmatprep.subr.mxu0 %v1485
      %3305 = vmatpush1.msra.mxu0 %v1484
      %3306 = vmatprep.subr.mxu0 %v1481
      %3307 = vmatpush1.msra.mxu0 %v1480
      %3308 = vmatprep.subr.mxu0 %v1477
      %3309 = vmatpush1.msra.mxu0 %v1476
      %3310 = vmatprep.subr.mxu0 %v1473
      %3311 = vmatpush1.msra.mxu0 %v1472
      %3312 = vmatprep.subr.mxu0 %v1469
      %3313 = vmatpush1.msra.mxu0 %v1468
      %3314 = vmatprep.subr.mxu0 %v1465
      %3315 = vmatpush1.msra.mxu0 %v1464
      %3316 = vmatprep.subr.mxu0 %v1461
      %3317 = vmatpush1.msra.mxu0 %v1460
      %3318 = vmatprep.subr.mxu0 %v1457
      %3319 = vmatpush1.msra.mxu0 %v1456
      %3320 = vmatprep.subr.mxu0 %v1453
      %3321 = vmatpush1.msra.mxu0 %v1452
      %3322 = vmatprep.subr.mxu0 %v1577
      %3323 = vmatpush2.msra.mxu0 %v1576
      %3324 = vmatprep.subr.mxu0 %v1573
      %3325 = vmatpush2.msra.mxu0 %v1572
      %3326 = vmatprep.subr.mxu0 %v1569
      %3327 = vmatpush2.msra.mxu0 %v1568
      %3328 = vmatprep.subr.mxu0 %v1565
      %3329 = vmatpush2.msra.mxu0 %v1564
      %3330 = vmatprep.subr.mxu0 %v1561
      %3331 = vmatpush2.msra.mxu0 %v1560
      %3332 = vmatprep.subr.mxu0 %v1557
      %3333 = vmatpush2.msra.mxu0 %v1556
      %3334 = vmatprep.subr.mxu0 %v1553
      %3335 = vmatpush2.msra.mxu0 %v1552
      %3336 = vmatprep.subr.mxu0 %v1549
      %3337 = vmatpush2.msra.mxu0 %v1548
      %3338 = vmatprep.subr.mxu0 %v1545
      %3339 = vmatpush2.msra.mxu0 %v1544
      %3340 = vmatprep.subr.mxu0 %v1541
      %3341 = vmatpush2.msra.mxu0 %v1540
      %3342 = vmatprep.subr.mxu0 %v1537
      %3343 = vmatpush2.msra.mxu0 %v1536
      %3344 = vmatprep.subr.mxu0 %v1533
      %3345 = vmatpush2.msra.mxu0 %v1532
      %3346 = vmatprep.subr.mxu0 %v1529
      %3347 = vmatpush2.msra.mxu0 %v1528
      %3348 = vmatprep.subr.mxu0 %v1525
      %3349 = vmatpush2.msra.mxu0 %v1524
      %3350 = vmatprep.subr.mxu0 %v1521
      %3351 = vmatpush2.msra.mxu0 %v1520
      %3352 = vmatprep.subr.mxu0 %v1517
      %3353 = vmatpush2.msra.mxu0 %v1516
      %3354 = vmatprep.mubr.f32.mxu0 %v2560
      %3355 = vmatmul.mubr.f32.gmra.mxu0 %v2556
      %v3356 = vpop.f32.mrf.mxu0
      %v3357 = vadd.f32 %v3286, %v3356
      %v3358 = vpop.f32.mrf.mxu0
      %v3359 = vadd.f32 %v3288, %v3358
      %3360 = vdwg.mxu0
      %3361 = vmatprep.subr.mxu0 %v1641
      %3362 = vmatpush1.msra.mxu0 %v1640
      %3363 = vmatprep.subr.mxu0 %v1637
      %3364 = vmatpush1.msra.mxu0 %v1636
      %3365 = vmatprep.subr.mxu0 %v1633
      %3366 = vmatpush1.msra.mxu0 %v1632
      %3367 = vmatprep.subr.mxu0 %v1629
      %3368 = vmatpush1.msra.mxu0 %v1628
      %3369 = vmatprep.subr.mxu0 %v1625
      %3370 = vmatpush1.msra.mxu0 %v1624
      %3371 = vmatprep.subr.mxu0 %v1621
      %3372 = vmatpush1.msra.mxu0 %v1620
      %3373 = vmatprep.subr.mxu0 %v1617
      %3374 = vmatpush1.msra.mxu0 %v1616
      %3375 = vmatprep.subr.mxu0 %v1613
      %3376 = vmatpush1.msra.mxu0 %v1612
      %3377 = vmatprep.subr.mxu0 %v1609
      %3378 = vmatpush1.msra.mxu0 %v1608
      %3379 = vmatprep.subr.mxu0 %v1605
      %3380 = vmatpush1.msra.mxu0 %v1604
      %3381 = vmatprep.subr.mxu0 %v1601
      %3382 = vmatpush1.msra.mxu0 %v1600
      %3383 = vmatprep.subr.mxu0 %v1597
      %3384 = vmatpush1.msra.mxu0 %v1596
      %3385 = vmatprep.subr.mxu0 %v1593
      %3386 = vmatpush1.msra.mxu0 %v1592
      %3387 = vmatprep.subr.mxu0 %v1589
      %3388 = vmatpush1.msra.mxu0 %v1588
      %3389 = vmatprep.subr.mxu0 %v1585
      %3390 = vmatpush1.msra.mxu0 %v1584
      %3391 = vmatprep.subr.mxu0 %v1581
      %3392 = vmatpush1.msra.mxu0 %v1580
      %3393 = vmatprep.subr.mxu0 %v1705
      %3394 = vmatpush2.msra.mxu0 %v1704
      %3395 = vmatprep.subr.mxu0 %v1701
      %3396 = vmatpush2.msra.mxu0 %v1700
      %3397 = vmatprep.subr.mxu0 %v1697
      %3398 = vmatpush2.msra.mxu0 %v1696
      %3399 = vmatprep.subr.mxu0 %v1693
      %3400 = vmatpush2.msra.mxu0 %v1692
      %3401 = vmatprep.subr.mxu0 %v1689
      %3402 = vmatpush2.msra.mxu0 %v1688
      %3403 = vmatprep.subr.mxu0 %v1685
      %3404 = vmatpush2.msra.mxu0 %v1684
      %3405 = vmatprep.subr.mxu0 %v1681
      %3406 = vmatpush2.msra.mxu0 %v1680
      %3407 = vmatprep.subr.mxu0 %v1677
      %3408 = vmatpush2.msra.mxu0 %v1676
      %3409 = vmatprep.subr.mxu0 %v1673
      %3410 = vmatpush2.msra.mxu0 %v1672
      %3411 = vmatprep.subr.mxu0 %v1669
      %3412 = vmatpush2.msra.mxu0 %v1668
      %3413 = vmatprep.subr.mxu0 %v1665
      %3414 = vmatpush2.msra.mxu0 %v1664
      %3415 = vmatprep.subr.mxu0 %v1661
      %3416 = vmatpush2.msra.mxu0 %v1660
      %3417 = vmatprep.subr.mxu0 %v1657
      %3418 = vmatpush2.msra.mxu0 %v1656
      %3419 = vmatprep.subr.mxu0 %v1653
      %3420 = vmatpush2.msra.mxu0 %v1652
      %3421 = vmatprep.subr.mxu0 %v1649
      %3422 = vmatpush2.msra.mxu0 %v1648
      %3423 = vmatprep.subr.mxu0 %v1645
      %3424 = vmatpush2.msra.mxu0 %v1644
      %3425 = vmatprep.mubr.f32.mxu0 %v2568
      %3426 = vmatmul.mubr.f32.gmra.mxu0 %v2564
      %v3427 = vpop.f32.mrf.mxu0
      %v3428 = vadd.f32 %v3357, %v3427
      %v3429 = vpop.f32.mrf.mxu0
      %v3430 = vadd.f32 %v3359, %v3429
      %3431 = vdwg.mxu0
      %3432 = vmatprep.subr.mxu0 %v1769
      %3433 = vmatpush1.msra.mxu0 %v1768
      %3434 = vmatprep.subr.mxu0 %v1765
      %3435 = vmatpush1.msra.mxu0 %v1764
      %3436 = vmatprep.subr.mxu0 %v1761
      %3437 = vmatpush1.msra.mxu0 %v1760
      %3438 = vmatprep.subr.mxu0 %v1757
      %3439 = vmatpush1.msra.mxu0 %v1756
      %3440 = vmatprep.subr.mxu0 %v1753
      %3441 = vmatpush1.msra.mxu0 %v1752
      %3442 = vmatprep.subr.mxu0 %v1749
      %3443 = vmatpush1.msra.mxu0 %v1748
      %3444 = vmatprep.subr.mxu0 %v1745
      %3445 = vmatpush1.msra.mxu0 %v1744
      %3446 = vmatprep.subr.mxu0 %v1741
      %3447 = vmatpush1.msra.mxu0 %v1740
      %3448 = vmatprep.subr.mxu0 %v1737
      %3449 = vmatpush1.msra.mxu0 %v1736
      %3450 = vmatprep.subr.mxu0 %v1733
      %3451 = vmatpush1.msra.mxu0 %v1732
      %3452 = vmatprep.subr.mxu0 %v1729
      %3453 = vmatpush1.msra.mxu0 %v1728
      %3454 = vmatprep.subr.mxu0 %v1725
      %3455 = vmatpush1.msra.mxu0 %v1724
      %3456 = vmatprep.subr.mxu0 %v1721
      %3457 = vmatpush1.msra.mxu0 %v1720
      %3458 = vmatprep.subr.mxu0 %v1717
      %3459 = vmatpush1.msra.mxu0 %v1716
      %3460 = vmatprep.subr.mxu0 %v1713
      %3461 = vmatpush1.msra.mxu0 %v1712
      %3462 = vmatprep.subr.mxu0 %v1709
      %3463 = vmatpush1.msra.mxu0 %v1708
      %3464 = vmatprep.subr.mxu0 %v1833
      %3465 = vmatpush2.msra.mxu0 %v1832
      %3466 = vmatprep.subr.mxu0 %v1829
      %3467 = vmatpush2.msra.mxu0 %v1828
      %3468 = vmatprep.subr.mxu0 %v1825
      %3469 = vmatpush2.msra.mxu0 %v1824
      %3470 = vmatprep.subr.mxu0 %v1821
      %3471 = vmatpush2.msra.mxu0 %v1820
      %3472 = vmatprep.subr.mxu0 %v1817
      %3473 = vmatpush2.msra.mxu0 %v1816
      %3474 = vmatprep.subr.mxu0 %v1813
      %3475 = vmatpush2.msra.mxu0 %v1812
      %3476 = vmatprep.subr.mxu0 %v1809
      %3477 = vmatpush2.msra.mxu0 %v1808
      %3478 = vmatprep.subr.mxu0 %v1805
      %3479 = vmatpush2.msra.mxu0 %v1804
      %3480 = vmatprep.subr.mxu0 %v1801
      %3481 = vmatpush2.msra.mxu0 %v1800
      %3482 = vmatprep.subr.mxu0 %v1797
      %3483 = vmatpush2.msra.mxu0 %v1796
      %3484 = vmatprep.subr.mxu0 %v1793
      %3485 = vmatpush2.msra.mxu0 %v1792
      %3486 = vmatprep.subr.mxu0 %v1789
      %3487 = vmatpush2.msra.mxu0 %v1788
      %3488 = vmatprep.subr.mxu0 %v1785
      %3489 = vmatpush2.msra.mxu0 %v1784
      %3490 = vmatprep.subr.mxu0 %v1781
      %3491 = vmatpush2.msra.mxu0 %v1780
      %3492 = vmatprep.subr.mxu0 %v1777
      %3493 = vmatpush2.msra.mxu0 %v1776
      %3494 = vmatprep.subr.mxu0 %v1773
      %3495 = vmatpush2.msra.mxu0 %v1772
      %3496 = vmatprep.mubr.f32.mxu0 %v2576
      %3497 = vmatmul.mubr.f32.gmra.mxu0 %v2572
      %v3498 = vpop.f32.mrf.mxu0
      %v3499 = vadd.f32 %v3428, %v3498
      %v3500 = vpop.f32.mrf.mxu0
      %v3501 = vadd.f32 %v3430, %v3500
      %3502 = vdwg.mxu0
      %3503 = vmatprep.subr.mxu0 %v1897
      %3504 = vmatpush1.msra.mxu0 %v1896
      %3505 = vmatprep.subr.mxu0 %v1893
      %3506 = vmatpush1.msra.mxu0 %v1892
      %3507 = vmatprep.subr.mxu0 %v1889
      %3508 = vmatpush1.msra.mxu0 %v1888
      %3509 = vmatprep.subr.mxu0 %v1885
      %3510 = vmatpush1.msra.mxu0 %v1884
      %3511 = vmatprep.subr.mxu0 %v1881
      %3512 = vmatpush1.msra.mxu0 %v1880
      %3513 = vmatprep.subr.mxu0 %v1877
      %3514 = vmatpush1.msra.mxu0 %v1876
      %3515 = vmatprep.subr.mxu0 %v1873
      %3516 = vmatpush1.msra.mxu0 %v1872
      %3517 = vmatprep.subr.mxu0 %v1869
      %3518 = vmatpush1.msra.mxu0 %v1868
      %3519 = vmatprep.subr.mxu0 %v1865
      %3520 = vmatpush1.msra.mxu0 %v1864
      %3521 = vmatprep.subr.mxu0 %v1861
      %3522 = vmatpush1.msra.mxu0 %v1860
      %3523 = vmatprep.subr.mxu0 %v1857
      %3524 = vmatpush1.msra.mxu0 %v1856
      %3525 = vmatprep.subr.mxu0 %v1853
      %3526 = vmatpush1.msra.mxu0 %v1852
      %3527 = vmatprep.subr.mxu0 %v1849
      %3528 = vmatpush1.msra.mxu0 %v1848
      %3529 = vmatprep.subr.mxu0 %v1845
      %3530 = vmatpush1.msra.mxu0 %v1844
      %3531 = vmatprep.subr.mxu0 %v1841
      %3532 = vmatpush1.msra.mxu0 %v1840
      %3533 = vmatprep.subr.mxu0 %v1837
      %3534 = vmatpush1.msra.mxu0 %v1836
      %3535 = vmatprep.subr.mxu0 %v1961
      %3536 = vmatpush2.msra.mxu0 %v1960
      %3537 = vmatprep.subr.mxu0 %v1957
      %3538 = vmatpush2.msra.mxu0 %v1956
      %3539 = vmatprep.subr.mxu0 %v1953
      %3540 = vmatpush2.msra.mxu0 %v1952
      %3541 = vmatprep.subr.mxu0 %v1949
      %3542 = vmatpush2.msra.mxu0 %v1948
      %3543 = vmatprep.subr.mxu0 %v1945
      %3544 = vmatpush2.msra.mxu0 %v1944
      %3545 = vmatprep.subr.mxu0 %v1941
      %3546 = vmatpush2.msra.mxu0 %v1940
      %3547 = vmatprep.subr.mxu0 %v1937
      %3548 = vmatpush2.msra.mxu0 %v1936
      %3549 = vmatprep.subr.mxu0 %v1933
      %3550 = vmatpush2.msra.mxu0 %v1932
      %3551 = vmatprep.subr.mxu0 %v1929
      %3552 = vmatpush2.msra.mxu0 %v1928
      %3553 = vmatprep.subr.mxu0 %v1925
      %3554 = vmatpush2.msra.mxu0 %v1924
      %3555 = vmatprep.subr.mxu0 %v1921
      %3556 = vmatpush2.msra.mxu0 %v1920
      %3557 = vmatprep.subr.mxu0 %v1917
      %3558 = vmatpush2.msra.mxu0 %v1916
      %3559 = vmatprep.subr.mxu0 %v1913
      %3560 = vmatpush2.msra.mxu0 %v1912
      %3561 = vmatprep.subr.mxu0 %v1909
      %3562 = vmatpush2.msra.mxu0 %v1908
      %3563 = vmatprep.subr.mxu0 %v1905
      %3564 = vmatpush2.msra.mxu0 %v1904
      %3565 = vmatprep.subr.mxu0 %v1901
      %3566 = vmatpush2.msra.mxu0 %v1900
      %3567 = vmatprep.mubr.f32.mxu0 %v2584
      %3568 = vmatmul.mubr.f32.gmra.mxu0 %v2580
      %v3569 = vpop.f32.mrf.mxu0
      %v3570 = vadd.f32 %v3499, %v3569
      %v3571 = vpop.f32.mrf.mxu0
      %v3572 = vadd.f32 %v3501, %v3571
      %3573 = vdwg.mxu0
      %3574 = vmatprep.subr.mxu0 %v2025
      %3575 = vmatpush1.msra.mxu0 %v2024
      %3576 = vmatprep.subr.mxu0 %v2021
      %3577 = vmatpush1.msra.mxu0 %v2020
      %3578 = vmatprep.subr.mxu0 %v2017
      %3579 = vmatpush1.msra.mxu0 %v2016
      %3580 = vmatprep.subr.mxu0 %v2013
      %3581 = vmatpush1.msra.mxu0 %v2012
      %3582 = vmatprep.subr.mxu0 %v2009
      %3583 = vmatpush1.msra.mxu0 %v2008
      %3584 = vmatprep.subr.mxu0 %v2005
      %3585 = vmatpush1.msra.mxu0 %v2004
      %3586 = vmatprep.subr.mxu0 %v2001
      %3587 = vmatpush1.msra.mxu0 %v2000
      %3588 = vmatprep.subr.mxu0 %v1997
      %3589 = vmatpush1.msra.mxu0 %v1996
      %3590 = vmatprep.subr.mxu0 %v1993
      %3591 = vmatpush1.msra.mxu0 %v1992
      %3592 = vmatprep.subr.mxu0 %v1989
      %3593 = vmatpush1.msra.mxu0 %v1988
      %3594 = vmatprep.subr.mxu0 %v1985
      %3595 = vmatpush1.msra.mxu0 %v1984
      %3596 = vmatprep.subr.mxu0 %v1981
      %3597 = vmatpush1.msra.mxu0 %v1980
      %3598 = vmatprep.subr.mxu0 %v1977
      %3599 = vmatpush1.msra.mxu0 %v1976
      %3600 = vmatprep.subr.mxu0 %v1973
      %3601 = vmatpush1.msra.mxu0 %v1972
      %3602 = vmatprep.subr.mxu0 %v1969
      %3603 = vmatpush1.msra.mxu0 %v1968
      %3604 = vmatprep.subr.mxu0 %v1965
      %3605 = vmatpush1.msra.mxu0 %v1964
      %3606 = vmatprep.subr.mxu0 %v2089
      %3607 = vmatpush2.msra.mxu0 %v2088
      %3608 = vmatprep.subr.mxu0 %v2085
      %3609 = vmatpush2.msra.mxu0 %v2084
      %3610 = vmatprep.subr.mxu0 %v2081
      %3611 = vmatpush2.msra.mxu0 %v2080
      %3612 = vmatprep.subr.mxu0 %v2077
      %3613 = vmatpush2.msra.mxu0 %v2076
      %3614 = vmatprep.subr.mxu0 %v2073
      %3615 = vmatpush2.msra.mxu0 %v2072
      %3616 = vmatprep.subr.mxu0 %v2069
      %3617 = vmatpush2.msra.mxu0 %v2068
      %3618 = vmatprep.subr.mxu0 %v2065
      %3619 = vmatpush2.msra.mxu0 %v2064
      %3620 = vmatprep.subr.mxu0 %v2061
      %3621 = vmatpush2.msra.mxu0 %v2060
      %3622 = vmatprep.subr.mxu0 %v2057
      %3623 = vmatpush2.msra.mxu0 %v2056
      %3624 = vmatprep.subr.mxu0 %v2053
      %3625 = vmatpush2.msra.mxu0 %v2052
      %3626 = vmatprep.subr.mxu0 %v2049
      %3627 = vmatpush2.msra.mxu0 %v2048
      %3628 = vmatprep.subr.mxu0 %v2045
      %3629 = vmatpush2.msra.mxu0 %v2044
      %3630 = vmatprep.subr.mxu0 %v2041
      %3631 = vmatpush2.msra.mxu0 %v2040
      %3632 = vmatprep.subr.mxu0 %v2037
      %3633 = vmatpush2.msra.mxu0 %v2036
      %3634 = vmatprep.subr.mxu0 %v2033
      %3635 = vmatpush2.msra.mxu0 %v2032
      %3636 = vmatprep.subr.mxu0 %v2029
      %3637 = vmatpush2.msra.mxu0 %v2028
      %3638 = vmatprep.mubr.f32.mxu0 %v2592
      %3639 = vmatmul.mubr.f32.gmra.mxu0 %v2588
      %v3640 = vpop.f32.mrf.mxu0
      %v3641 = vadd.f32 %v3570, %v3640
      %v3642 = vpop.f32.mrf.mxu0
      %v3643 = vadd.f32 %v3572, %v3642
      %3644 = vdwg.mxu0
      %3645 = vmatprep.subr.mxu0 %v2153
      %3646 = vmatpush1.msra.mxu0 %v2152
      %3647 = vmatprep.subr.mxu0 %v2149
      %3648 = vmatpush1.msra.mxu0 %v2148
      %3649 = vmatprep.subr.mxu0 %v2145
      %3650 = vmatpush1.msra.mxu0 %v2144
      %3651 = vmatprep.subr.mxu0 %v2141
      %3652 = vmatpush1.msra.mxu0 %v2140
      %3653 = vmatprep.subr.mxu0 %v2137
      %3654 = vmatpush1.msra.mxu0 %v2136
      %3655 = vmatprep.subr.mxu0 %v2133
      %3656 = vmatpush1.msra.mxu0 %v2132
      %3657 = vmatprep.subr.mxu0 %v2129
      %3658 = vmatpush1.msra.mxu0 %v2128
      %3659 = vmatprep.subr.mxu0 %v2125
      %3660 = vmatpush1.msra.mxu0 %v2124
      %3661 = vmatprep.subr.mxu0 %v2121
      %3662 = vmatpush1.msra.mxu0 %v2120
      %3663 = vmatprep.subr.mxu0 %v2117
      %3664 = vmatpush1.msra.mxu0 %v2116
      %3665 = vmatprep.subr.mxu0 %v2113
      %3666 = vmatpush1.msra.mxu0 %v2112
      %3667 = vmatprep.subr.mxu0 %v2109
      %3668 = vmatpush1.msra.mxu0 %v2108
      %3669 = vmatprep.subr.mxu0 %v2105
      %3670 = vmatpush1.msra.mxu0 %v2104
      %3671 = vmatprep.subr.mxu0 %v2101
      %3672 = vmatpush1.msra.mxu0 %v2100
      %3673 = vmatprep.subr.mxu0 %v2097
      %3674 = vmatpush1.msra.mxu0 %v2096
      %3675 = vmatprep.subr.mxu0 %v2093
      %3676 = vmatpush1.msra.mxu0 %v2092
      %3677 = vmatprep.subr.mxu0 %v2217
      %3678 = vmatpush2.msra.mxu0 %v2216
      %3679 = vmatprep.subr.mxu0 %v2213
      %3680 = vmatpush2.msra.mxu0 %v2212
      %3681 = vmatprep.subr.mxu0 %v2209
      %3682 = vmatpush2.msra.mxu0 %v2208
      %3683 = vmatprep.subr.mxu0 %v2205
      %3684 = vmatpush2.msra.mxu0 %v2204
      %3685 = vmatprep.subr.mxu0 %v2201
      %3686 = vmatpush2.msra.mxu0 %v2200
      %3687 = vmatprep.subr.mxu0 %v2197
      %3688 = vmatpush2.msra.mxu0 %v2196
      %3689 = vmatprep.subr.mxu0 %v2193
      %3690 = vmatpush2.msra.mxu0 %v2192
      %3691 = vmatprep.subr.mxu0 %v2189
      %3692 = vmatpush2.msra.mxu0 %v2188
      %3693 = vmatprep.subr.mxu0 %v2185
      %3694 = vmatpush2.msra.mxu0 %v2184
      %3695 = vmatprep.subr.mxu0 %v2181
      %3696 = vmatpush2.msra.mxu0 %v2180
      %3697 = vmatprep.subr.mxu0 %v2177
      %3698 = vmatpush2.msra.mxu0 %v2176
      %3699 = vmatprep.subr.mxu0 %v2173
      %3700 = vmatpush2.msra.mxu0 %v2172
      %3701 = vmatprep.subr.mxu0 %v2169
      %3702 = vmatpush2.msra.mxu0 %v2168
      %3703 = vmatprep.subr.mxu0 %v2165
      %3704 = vmatpush2.msra.mxu0 %v2164
      %3705 = vmatprep.subr.mxu0 %v2161
      %3706 = vmatpush2.msra.mxu0 %v2160
      %3707 = vmatprep.subr.mxu0 %v2157
      %3708 = vmatpush2.msra.mxu0 %v2156
      %3709 = vmatprep.mubr.f32.mxu0 %v2600
      %3710 = vmatmul.mubr.f32.gmra.mxu0 %v2596
      %v3711 = vpop.f32.mrf.mxu0
      %v3712 = vadd.f32 %v3641, %v3711
      %v3713 = vpop.f32.mrf.mxu0
      %v3714 = vadd.f32 %v3643, %v3713
      %3715 = vdwg.mxu0
      %3716 = vmatprep.subr.mxu0 %v2281
      %3717 = vmatpush1.msra.mxu0 %v2280
      %3718 = vmatprep.subr.mxu0 %v2277
      %3719 = vmatpush1.msra.mxu0 %v2276
      %3720 = vmatprep.subr.mxu0 %v2273
      %3721 = vmatpush1.msra.mxu0 %v2272
      %3722 = vmatprep.subr.mxu0 %v2269
      %3723 = vmatpush1.msra.mxu0 %v2268
      %3724 = vmatprep.subr.mxu0 %v2265
      %3725 = vmatpush1.msra.mxu0 %v2264
      %3726 = vmatprep.subr.mxu0 %v2261
      %3727 = vmatpush1.msra.mxu0 %v2260
      %3728 = vmatprep.subr.mxu0 %v2257
      %3729 = vmatpush1.msra.mxu0 %v2256
      %3730 = vmatprep.subr.mxu0 %v2253
      %3731 = vmatpush1.msra.mxu0 %v2252
      %3732 = vmatprep.subr.mxu0 %v2249
      %3733 = vmatpush1.msra.mxu0 %v2248
      %3734 = vmatprep.subr.mxu0 %v2245
      %3735 = vmatpush1.msra.mxu0 %v2244
      %3736 = vmatprep.subr.mxu0 %v2241
      %3737 = vmatpush1.msra.mxu0 %v2240
      %3738 = vmatprep.subr.mxu0 %v2237
      %3739 = vmatpush1.msra.mxu0 %v2236
      %3740 = vmatprep.subr.mxu0 %v2233
      %3741 = vmatpush1.msra.mxu0 %v2232
      %3742 = vmatprep.subr.mxu0 %v2229
      %3743 = vmatpush1.msra.mxu0 %v2228
      %3744 = vmatprep.subr.mxu0 %v2225
      %3745 = vmatpush1.msra.mxu0 %v2224
      %3746 = vmatprep.subr.mxu0 %v2221
      %3747 = vmatpush1.msra.mxu0 %v2220
      %3748 = vmatprep.subr.mxu0 %v2345
      %3749 = vmatpush2.msra.mxu0 %v2344
      %3750 = vmatprep.subr.mxu0 %v2341
      %3751 = vmatpush2.msra.mxu0 %v2340
      %3752 = vmatprep.subr.mxu0 %v2337
      %3753 = vmatpush2.msra.mxu0 %v2336
      %3754 = vmatprep.subr.mxu0 %v2333
      %3755 = vmatpush2.msra.mxu0 %v2332
      %3756 = vmatprep.subr.mxu0 %v2329
      %3757 = vmatpush2.msra.mxu0 %v2328
      %3758 = vmatprep.subr.mxu0 %v2325
      %3759 = vmatpush2.msra.mxu0 %v2324
      %3760 = vmatprep.subr.mxu0 %v2321
      %3761 = vmatpush2.msra.mxu0 %v2320
      %3762 = vmatprep.subr.mxu0 %v2317
      %3763 = vmatpush2.msra.mxu0 %v2316
      %3764 = vmatprep.subr.mxu0 %v2313
      %3765 = vmatpush2.msra.mxu0 %v2312
      %3766 = vmatprep.subr.mxu0 %v2309
      %3767 = vmatpush2.msra.mxu0 %v2308
      %3768 = vmatprep.subr.mxu0 %v2305
      %3769 = vmatpush2.msra.mxu0 %v2304
      %3770 = vmatprep.subr.mxu0 %v2301
      %3771 = vmatpush2.msra.mxu0 %v2300
      %3772 = vmatprep.subr.mxu0 %v2297
      %3773 = vmatpush2.msra.mxu0 %v2296
      %3774 = vmatprep.subr.mxu0 %v2293
      %3775 = vmatpush2.msra.mxu0 %v2292
      %3776 = vmatprep.subr.mxu0 %v2289
      %3777 = vmatpush2.msra.mxu0 %v2288
      %3778 = vmatprep.subr.mxu0 %v2285
      %3779 = vmatpush2.msra.mxu0 %v2284
      %3780 = vmatprep.mubr.f32.mxu0 %v2608
      %3781 = vmatmul.mubr.f32.gmra.mxu0 %v2604
      %v3782 = vpop.f32.mrf.mxu0
      %v3783 = vadd.f32 %v3712, %v3782
      %v3784 = vpop.f32.mrf.mxu0
      %v3785 = vadd.f32 %v3714, %v3784
      %3786 = vdwg.mxu0
      %3787 = vmatprep.subr.mxu0 %v2409
      %3788 = vmatpush1.msra.mxu0 %v2408
      %3789 = vmatprep.subr.mxu0 %v2405
      %3790 = vmatpush1.msra.mxu0 %v2404
      %3791 = vmatprep.subr.mxu0 %v2401
      %3792 = vmatpush1.msra.mxu0 %v2400
      %3793 = vmatprep.subr.mxu0 %v2397
      %3794 = vmatpush1.msra.mxu0 %v2396
      %3795 = vmatprep.subr.mxu0 %v2393
      %3796 = vmatpush1.msra.mxu0 %v2392
      %3797 = vmatprep.subr.mxu0 %v2389
      %3798 = vmatpush1.msra.mxu0 %v2388
      %3799 = vmatprep.subr.mxu0 %v2385
      %3800 = vmatpush1.msra.mxu0 %v2384
      %3801 = vmatprep.subr.mxu0 %v2381
      %3802 = vmatpush1.msra.mxu0 %v2380
      %3803 = vmatprep.subr.mxu0 %v2377
      %3804 = vmatpush1.msra.mxu0 %v2376
      %3805 = vmatprep.subr.mxu0 %v2373
      %3806 = vmatpush1.msra.mxu0 %v2372
      %3807 = vmatprep.subr.mxu0 %v2369
      %3808 = vmatpush1.msra.mxu0 %v2368
      %3809 = vmatprep.subr.mxu0 %v2365
      %3810 = vmatpush1.msra.mxu0 %v2364
      %3811 = vmatprep.subr.mxu0 %v2361
      %3812 = vmatpush1.msra.mxu0 %v2360
      %3813 = vmatprep.subr.mxu0 %v2357
      %3814 = vmatpush1.msra.mxu0 %v2356
      %3815 = vmatprep.subr.mxu0 %v2353
      %3816 = vmatpush1.msra.mxu0 %v2352
      %3817 = vmatprep.subr.mxu0 %v2349
      %3818 = vmatpush1.msra.mxu0 %v2348
      %3819 = vmatprep.subr.mxu0 %v2473
      %3820 = vmatpush2.msra.mxu0 %v2472
      %3821 = vmatprep.subr.mxu0 %v2469
      %3822 = vmatpush2.msra.mxu0 %v2468
      %3823 = vmatprep.subr.mxu0 %v2465
      %3824 = vmatpush2.msra.mxu0 %v2464
      %3825 = vmatprep.subr.mxu0 %v2461
      %3826 = vmatpush2.msra.mxu0 %v2460
      %3827 = vmatprep.subr.mxu0 %v2457
      %3828 = vmatpush2.msra.mxu0 %v2456
      %3829 = vmatprep.subr.mxu0 %v2453
      %3830 = vmatpush2.msra.mxu0 %v2452
      %3831 = vmatprep.subr.mxu0 %v2449
      %3832 = vmatpush2.msra.mxu0 %v2448
      %3833 = vmatprep.subr.mxu0 %v2445
      %3834 = vmatpush2.msra.mxu0 %v2444
      %3835 = vmatprep.subr.mxu0 %v2441
      %3836 = vmatpush2.msra.mxu0 %v2440
      %3837 = vmatprep.subr.mxu0 %v2437
      %3838 = vmatpush2.msra.mxu0 %v2436
      %3839 = vmatprep.subr.mxu0 %v2433
      %3840 = vmatpush2.msra.mxu0 %v2432
      %3841 = vmatprep.subr.mxu0 %v2429
      %3842 = vmatpush2.msra.mxu0 %v2428
      %3843 = vmatprep.subr.mxu0 %v2425
      %3844 = vmatpush2.msra.mxu0 %v2424
      %3845 = vmatprep.subr.mxu0 %v2421
      %3846 = vmatpush2.msra.mxu0 %v2420
      %3847 = vmatprep.subr.mxu0 %v2417
      %3848 = vmatpush2.msra.mxu0 %v2416
      %3849 = vmatprep.subr.mxu0 %v2413
      %3850 = vmatpush2.msra.mxu0 %v2412
      %3851 = vmatprep.mubr.f32.mxu0 %v2616
      %3852 = vmatmul.mubr.f32.gmra.mxu0 %v2612
      %v3853 = vpop.f32.mrf.mxu0
      %v3854 = vadd.f32 %v3783, %v3853
      %v3855 = vpop.f32.mrf.mxu0
      %v3856 = vadd.f32 %v3785, %v3855
      %3857 = vdwg.mxu0
      %3858 = vmatprep.subr.mxu0 %v363
      %3859 = vmatpush1.msra.mxu0 %v362
      %3860 = vmatprep.subr.mxu0 %v359
      %3861 = vmatpush1.msra.mxu0 %v358
      %3862 = vmatprep.subr.mxu0 %v355
      %3863 = vmatpush1.msra.mxu0 %v354
      %3864 = vmatprep.subr.mxu0 %v351
      %3865 = vmatpush1.msra.mxu0 %v350
      %3866 = vmatprep.subr.mxu0 %v347
      %3867 = vmatpush1.msra.mxu0 %v346
      %3868 = vmatprep.subr.mxu0 %v343
      %3869 = vmatpush1.msra.mxu0 %v342
      %3870 = vmatprep.subr.mxu0 %v339
      %3871 = vmatpush1.msra.mxu0 %v338
      %3872 = vmatprep.subr.mxu0 %v335
      %3873 = vmatpush1.msra.mxu0 %v334
      %3874 = vmatprep.subr.mxu0 %v331
      %3875 = vmatpush1.msra.mxu0 %v330
      %3876 = vmatprep.subr.mxu0 %v327
      %3877 = vmatpush1.msra.mxu0 %v326
      %3878 = vmatprep.subr.mxu0 %v323
      %3879 = vmatpush1.msra.mxu0 %v322
      %3880 = vmatprep.subr.mxu0 %v319
      %3881 = vmatpush1.msra.mxu0 %v318
      %3882 = vmatprep.subr.mxu0 %v315
      %3883 = vmatpush1.msra.mxu0 %v314
      %3884 = vmatprep.subr.mxu0 %v311
      %3885 = vmatpush1.msra.mxu0 %v310
      %3886 = vmatprep.subr.mxu0 %v307
      %3887 = vmatpush1.msra.mxu0 %v306
      %3888 = vmatprep.subr.mxu0 %v303
      %3889 = vmatpush1.msra.mxu0 %v302
      %3890 = vmatprep.subr.mxu0 %v427
      %3891 = vmatpush2.msra.mxu0 %v426
      %3892 = vmatprep.subr.mxu0 %v423
      %3893 = vmatpush2.msra.mxu0 %v422
      %3894 = vmatprep.subr.mxu0 %v419
      %3895 = vmatpush2.msra.mxu0 %v418
      %3896 = vmatprep.subr.mxu0 %v415
      %3897 = vmatpush2.msra.mxu0 %v414
      %3898 = vmatprep.subr.mxu0 %v411
      %3899 = vmatpush2.msra.mxu0 %v410
      %3900 = vmatprep.subr.mxu0 %v407
      %3901 = vmatpush2.msra.mxu0 %v406
      %3902 = vmatprep.subr.mxu0 %v403
      %3903 = vmatpush2.msra.mxu0 %v402
      %3904 = vmatprep.subr.mxu0 %v399
      %3905 = vmatpush2.msra.mxu0 %v398
      %3906 = vmatprep.subr.mxu0 %v395
      %3907 = vmatpush2.msra.mxu0 %v394
      %3908 = vmatprep.subr.mxu0 %v391
      %3909 = vmatpush2.msra.mxu0 %v390
      %3910 = vmatprep.subr.mxu0 %v387
      %3911 = vmatpush2.msra.mxu0 %v386
      %3912 = vmatprep.subr.mxu0 %v383
      %3913 = vmatpush2.msra.mxu0 %v382
      %3914 = vmatprep.subr.mxu0 %v379
      %3915 = vmatpush2.msra.mxu0 %v378
      %3916 = vmatprep.subr.mxu0 %v375
      %3917 = vmatpush2.msra.mxu0 %v374
      %3918 = vmatprep.subr.mxu0 %v371
      %3919 = vmatpush2.msra.mxu0 %v370
      %3920 = vmatprep.subr.mxu0 %v367
      %3921 = vmatpush2.msra.mxu0 %v366
      %3922 = vmatprep.mubr.f32.mxu0 %v2488
      %3923 = vmatmul.mubr.f32.gmra.mxu0 %v2484
      %v3924 = vpop.f32.mrf.mxu0
      %v3925 = vadd.f32 0.0, %v3924
      %v3926 = vpop.f32.mrf.mxu0
      %v3927 = vadd.f32 0.0, %v3926
      %3928 = vdwg.mxu0
      %3929 = vmatprep.subr.mxu0 %v491
      %3930 = vmatpush1.msra.mxu0 %v490
      %3931 = vmatprep.subr.mxu0 %v487
      %3932 = vmatpush1.msra.mxu0 %v486
      %3933 = vmatprep.subr.mxu0 %v483
      %3934 = vmatpush1.msra.mxu0 %v482
      %3935 = vmatprep.subr.mxu0 %v479
      %3936 = vmatpush1.msra.mxu0 %v478
      %3937 = vmatprep.subr.mxu0 %v475
      %3938 = vmatpush1.msra.mxu0 %v474
      %3939 = vmatprep.subr.mxu0 %v471
      %3940 = vmatpush1.msra.mxu0 %v470
      %3941 = vmatprep.subr.mxu0 %v467
      %3942 = vmatpush1.msra.mxu0 %v466
      %3943 = vmatprep.subr.mxu0 %v463
      %3944 = vmatpush1.msra.mxu0 %v462
      %3945 = vmatprep.subr.mxu0 %v459
      %3946 = vmatpush1.msra.mxu0 %v458
      %3947 = vmatprep.subr.mxu0 %v455
      %3948 = vmatpush1.msra.mxu0 %v454
      %3949 = vmatprep.subr.mxu0 %v451
      %3950 = vmatpush1.msra.mxu0 %v450
      %3951 = vmatprep.subr.mxu0 %v447
      %3952 = vmatpush1.msra.mxu0 %v446
      %3953 = vmatprep.subr.mxu0 %v443
      %3954 = vmatpush1.msra.mxu0 %v442
      %3955 = vmatprep.subr.mxu0 %v439
      %3956 = vmatpush1.msra.mxu0 %v438
      %3957 = vmatprep.subr.mxu0 %v435
      %3958 = vmatpush1.msra.mxu0 %v434
      %3959 = vmatprep.subr.mxu0 %v431
      %3960 = vmatpush1.msra.mxu0 %v430
      %3961 = vmatprep.subr.mxu0 %v555
      %3962 = vmatpush2.msra.mxu0 %v554
      %3963 = vmatprep.subr.mxu0 %v551
      %3964 = vmatpush2.msra.mxu0 %v550
      %3965 = vmatprep.subr.mxu0 %v547
      %3966 = vmatpush2.msra.mxu0 %v546
      %3967 = vmatprep.subr.mxu0 %v543
      %3968 = vmatpush2.msra.mxu0 %v542
      %3969 = vmatprep.subr.mxu0 %v539
      %3970 = vmatpush2.msra.mxu0 %v538
      %3971 = vmatprep.subr.mxu0 %v535
      %3972 = vmatpush2.msra.mxu0 %v534
      %3973 = vmatprep.subr.mxu0 %v531
      %3974 = vmatpush2.msra.mxu0 %v530
      %3975 = vmatprep.subr.mxu0 %v527
      %3976 = vmatpush2.msra.mxu0 %v526
      %3977 = vmatprep.subr.mxu0 %v523
      %3978 = vmatpush2.msra.mxu0 %v522
      %3979 = vmatprep.subr.mxu0 %v519
      %3980 = vmatpush2.msra.mxu0 %v518
      %3981 = vmatprep.subr.mxu0 %v515
      %3982 = vmatpush2.msra.mxu0 %v514
      %3983 = vmatprep.subr.mxu0 %v511
      %3984 = vmatpush2.msra.mxu0 %v510
      %3985 = vmatprep.subr.mxu0 %v507
      %3986 = vmatpush2.msra.mxu0 %v506
      %3987 = vmatprep.subr.mxu0 %v503
      %3988 = vmatpush2.msra.mxu0 %v502
      %3989 = vmatprep.subr.mxu0 %v499
      %3990 = vmatpush2.msra.mxu0 %v498
      %3991 = vmatprep.subr.mxu0 %v495
      %3992 = vmatpush2.msra.mxu0 %v494
      %3993 = vmatprep.mubr.f32.mxu0 %v2496
      %3994 = vmatmul.mubr.f32.gmra.mxu0 %v2492
      %v3995 = vpop.f32.mrf.mxu0
      %v3996 = vadd.f32 %v3925, %v3995
      %v3997 = vpop.f32.mrf.mxu0
      %v3998 = vadd.f32 %v3927, %v3997
      %3999 = vdwg.mxu0
      %4000 = vmatprep.subr.mxu0 %v619
      %4001 = vmatpush1.msra.mxu0 %v618
      %4002 = vmatprep.subr.mxu0 %v615
      %4003 = vmatpush1.msra.mxu0 %v614
      %4004 = vmatprep.subr.mxu0 %v611
      %4005 = vmatpush1.msra.mxu0 %v610
      %4006 = vmatprep.subr.mxu0 %v607
      %4007 = vmatpush1.msra.mxu0 %v606
      %4008 = vmatprep.subr.mxu0 %v603
      %4009 = vmatpush1.msra.mxu0 %v602
      %4010 = vmatprep.subr.mxu0 %v599
      %4011 = vmatpush1.msra.mxu0 %v598
      %4012 = vmatprep.subr.mxu0 %v595
      %4013 = vmatpush1.msra.mxu0 %v594
      %4014 = vmatprep.subr.mxu0 %v591
      %4015 = vmatpush1.msra.mxu0 %v590
      %4016 = vmatprep.subr.mxu0 %v587
      %4017 = vmatpush1.msra.mxu0 %v586
      %4018 = vmatprep.subr.mxu0 %v583
      %4019 = vmatpush1.msra.mxu0 %v582
      %4020 = vmatprep.subr.mxu0 %v579
      %4021 = vmatpush1.msra.mxu0 %v578
      %4022 = vmatprep.subr.mxu0 %v575
      %4023 = vmatpush1.msra.mxu0 %v574
      %4024 = vmatprep.subr.mxu0 %v571
      %4025 = vmatpush1.msra.mxu0 %v570
      %4026 = vmatprep.subr.mxu0 %v567
      %4027 = vmatpush1.msra.mxu0 %v566
      %4028 = vmatprep.subr.mxu0 %v563
      %4029 = vmatpush1.msra.mxu0 %v562
      %4030 = vmatprep.subr.mxu0 %v559
      %4031 = vmatpush1.msra.mxu0 %v558
      %4032 = vmatprep.subr.mxu0 %v683
      %4033 = vmatpush2.msra.mxu0 %v682
      %4034 = vmatprep.subr.mxu0 %v679
      %4035 = vmatpush2.msra.mxu0 %v678
      %4036 = vmatprep.subr.mxu0 %v675
      %4037 = vmatpush2.msra.mxu0 %v674
      %4038 = vmatprep.subr.mxu0 %v671
      %4039 = vmatpush2.msra.mxu0 %v670
      %4040 = vmatprep.subr.mxu0 %v667
      %4041 = vmatpush2.msra.mxu0 %v666
      %4042 = vmatprep.subr.mxu0 %v663
      %4043 = vmatpush2.msra.mxu0 %v662
      %4044 = vmatprep.subr.mxu0 %v659
      %4045 = vmatpush2.msra.mxu0 %v658
      %4046 = vmatprep.subr.mxu0 %v655
      %4047 = vmatpush2.msra.mxu0 %v654
      %4048 = vmatprep.subr.mxu0 %v651
      %4049 = vmatpush2.msra.mxu0 %v650
      %4050 = vmatprep.subr.mxu0 %v647
      %4051 = vmatpush2.msra.mxu0 %v646
      %4052 = vmatprep.subr.mxu0 %v643
      %4053 = vmatpush2.msra.mxu0 %v642
      %4054 = vmatprep.subr.mxu0 %v639
      %4055 = vmatpush2.msra.mxu0 %v638
      %4056 = vmatprep.subr.mxu0 %v635
      %4057 = vmatpush2.msra.mxu0 %v634
      %4058 = vmatprep.subr.mxu0 %v631
      %4059 = vmatpush2.msra.mxu0 %v630
      %4060 = vmatprep.subr.mxu0 %v627
      %4061 = vmatpush2.msra.mxu0 %v626
      %4062 = vmatprep.subr.mxu0 %v623
      %4063 = vmatpush2.msra.mxu0 %v622
      %4064 = vmatprep.mubr.f32.mxu0 %v2504
      %4065 = vmatmul.mubr.f32.gmra.mxu0 %v2500
      %v4066 = vpop.f32.mrf.mxu0
      %v4067 = vadd.f32 %v3996, %v4066
      %v4068 = vpop.f32.mrf.mxu0
      %v4069 = vadd.f32 %v3998, %v4068
      %4070 = vdwg.mxu0
      %4071 = vmatprep.subr.mxu0 %v747
      %4072 = vmatpush1.msra.mxu0 %v746
      %4073 = vmatprep.subr.mxu0 %v743
      %4074 = vmatpush1.msra.mxu0 %v742
      %4075 = vmatprep.subr.mxu0 %v739
      %4076 = vmatpush1.msra.mxu0 %v738
      %4077 = vmatprep.subr.mxu0 %v735
      %4078 = vmatpush1.msra.mxu0 %v734
      %4079 = vmatprep.subr.mxu0 %v731
      %4080 = vmatpush1.msra.mxu0 %v730
      %4081 = vmatprep.subr.mxu0 %v727
      %4082 = vmatpush1.msra.mxu0 %v726
      %4083 = vmatprep.subr.mxu0 %v723
      %4084 = vmatpush1.msra.mxu0 %v722
      %4085 = vmatprep.subr.mxu0 %v719
      %4086 = vmatpush1.msra.mxu0 %v718
      %4087 = vmatprep.subr.mxu0 %v715
      %4088 = vmatpush1.msra.mxu0 %v714
      %4089 = vmatprep.subr.mxu0 %v711
      %4090 = vmatpush1.msra.mxu0 %v710
      %4091 = vmatprep.subr.mxu0 %v707
      %4092 = vmatpush1.msra.mxu0 %v706
      %4093 = vmatprep.subr.mxu0 %v703
      %4094 = vmatpush1.msra.mxu0 %v702
      %4095 = vmatprep.subr.mxu0 %v699
      %4096 = vmatpush1.msra.mxu0 %v698
      %4097 = vmatprep.subr.mxu0 %v695
      %4098 = vmatpush1.msra.mxu0 %v694
      %4099 = vmatprep.subr.mxu0 %v691
      %4100 = vmatpush1.msra.mxu0 %v690
      %4101 = vmatprep.subr.mxu0 %v687
      %4102 = vmatpush1.msra.mxu0 %v686
      %4103 = vmatprep.subr.mxu0 %v811
      %4104 = vmatpush2.msra.mxu0 %v810
      %4105 = vmatprep.subr.mxu0 %v807
      %4106 = vmatpush2.msra.mxu0 %v806
      %4107 = vmatprep.subr.mxu0 %v803
      %4108 = vmatpush2.msra.mxu0 %v802
      %4109 = vmatprep.subr.mxu0 %v799
      %4110 = vmatpush2.msra.mxu0 %v798
      %4111 = vmatprep.subr.mxu0 %v795
      %4112 = vmatpush2.msra.mxu0 %v794
      %4113 = vmatprep.subr.mxu0 %v791
      %4114 = vmatpush2.msra.mxu0 %v790
      %4115 = vmatprep.subr.mxu0 %v787
      %4116 = vmatpush2.msra.mxu0 %v786
      %4117 = vmatprep.subr.mxu0 %v783
      %4118 = vmatpush2.msra.mxu0 %v782
      %4119 = vmatprep.subr.mxu0 %v779
      %4120 = vmatpush2.msra.mxu0 %v778
      %4121 = vmatprep.subr.mxu0 %v775
      %4122 = vmatpush2.msra.mxu0 %v774
      %4123 = vmatprep.subr.mxu0 %v771
      %4124 = vmatpush2.msra.mxu0 %v770
      %4125 = vmatprep.subr.mxu0 %v767
      %4126 = vmatpush2.msra.mxu0 %v766
      %4127 = vmatprep.subr.mxu0 %v763
      %4128 = vmatpush2.msra.mxu0 %v762
      %4129 = vmatprep.subr.mxu0 %v759
      %4130 = vmatpush2.msra.mxu0 %v758
      %4131 = vmatprep.subr.mxu0 %v755
      %4132 = vmatpush2.msra.mxu0 %v754
      %4133 = vmatprep.subr.mxu0 %v751
      %4134 = vmatpush2.msra.mxu0 %v750
      %4135 = vmatprep.mubr.f32.mxu0 %v2512
      %4136 = vmatmul.mubr.f32.gmra.mxu0 %v2508
      %v4137 = vpop.f32.mrf.mxu0
      %v4138 = vadd.f32 %v4067, %v4137
      %v4139 = vpop.f32.mrf.mxu0
      %v4140 = vadd.f32 %v4069, %v4139
      %4141 = vdwg.mxu0
      %4142 = vmatprep.subr.mxu0 %v875
      %4143 = vmatpush1.msra.mxu0 %v874
      %4144 = vmatprep.subr.mxu0 %v871
      %4145 = vmatpush1.msra.mxu0 %v870
      %4146 = vmatprep.subr.mxu0 %v867
      %4147 = vmatpush1.msra.mxu0 %v866
      %4148 = vmatprep.subr.mxu0 %v863
      %4149 = vmatpush1.msra.mxu0 %v862
      %4150 = vmatprep.subr.mxu0 %v859
      %4151 = vmatpush1.msra.mxu0 %v858
      %4152 = vmatprep.subr.mxu0 %v855
      %4153 = vmatpush1.msra.mxu0 %v854
      %4154 = vmatprep.subr.mxu0 %v851
      %4155 = vmatpush1.msra.mxu0 %v850
      %4156 = vmatprep.subr.mxu0 %v847
      %4157 = vmatpush1.msra.mxu0 %v846
      %4158 = vmatprep.subr.mxu0 %v843
      %4159 = vmatpush1.msra.mxu0 %v842
      %4160 = vmatprep.subr.mxu0 %v839
      %4161 = vmatpush1.msra.mxu0 %v838
      %4162 = vmatprep.subr.mxu0 %v835
      %4163 = vmatpush1.msra.mxu0 %v834
      %4164 = vmatprep.subr.mxu0 %v831
      %4165 = vmatpush1.msra.mxu0 %v830
      %4166 = vmatprep.subr.mxu0 %v827
      %4167 = vmatpush1.msra.mxu0 %v826
      %4168 = vmatprep.subr.mxu0 %v823
      %4169 = vmatpush1.msra.mxu0 %v822
      %4170 = vmatprep.subr.mxu0 %v819
      %4171 = vmatpush1.msra.mxu0 %v818
      %4172 = vmatprep.subr.mxu0 %v815
      %4173 = vmatpush1.msra.mxu0 %v814
      %4174 = vmatprep.subr.mxu0 %v939
      %4175 = vmatpush2.msra.mxu0 %v938
      %4176 = vmatprep.subr.mxu0 %v935
      %4177 = vmatpush2.msra.mxu0 %v934
      %4178 = vmatprep.subr.mxu0 %v931
      %4179 = vmatpush2.msra.mxu0 %v930
      %4180 = vmatprep.subr.mxu0 %v927
      %4181 = vmatpush2.msra.mxu0 %v926
      %4182 = vmatprep.subr.mxu0 %v923
      %4183 = vmatpush2.msra.mxu0 %v922
      %4184 = vmatprep.subr.mxu0 %v919
      %4185 = vmatpush2.msra.mxu0 %v918
      %4186 = vmatprep.subr.mxu0 %v915
      %4187 = vmatpush2.msra.mxu0 %v914
      %4188 = vmatprep.subr.mxu0 %v911
      %4189 = vmatpush2.msra.mxu0 %v910
      %4190 = vmatprep.subr.mxu0 %v907
      %4191 = vmatpush2.msra.mxu0 %v906
      %4192 = vmatprep.subr.mxu0 %v903
      %4193 = vmatpush2.msra.mxu0 %v902
      %4194 = vmatprep.subr.mxu0 %v899
      %4195 = vmatpush2.msra.mxu0 %v898
      %4196 = vmatprep.subr.mxu0 %v895
      %4197 = vmatpush2.msra.mxu0 %v894
      %4198 = vmatprep.subr.mxu0 %v891
      %4199 = vmatpush2.msra.mxu0 %v890
      %4200 = vmatprep.subr.mxu0 %v887
      %4201 = vmatpush2.msra.mxu0 %v886
      %4202 = vmatprep.subr.mxu0 %v883
      %4203 = vmatpush2.msra.mxu0 %v882
      %4204 = vmatprep.subr.mxu0 %v879
      %4205 = vmatpush2.msra.mxu0 %v878
      %4206 = vmatprep.mubr.f32.mxu0 %v2520
      %4207 = vmatmul.mubr.f32.gmra.mxu0 %v2516
      %v4208 = vpop.f32.mrf.mxu0
      %v4209 = vadd.f32 %v4138, %v4208
      %v4210 = vpop.f32.mrf.mxu0
      %v4211 = vadd.f32 %v4140, %v4210
      %4212 = vdwg.mxu0
      %4213 = vmatprep.subr.mxu0 %v1003
      %4214 = vmatpush1.msra.mxu0 %v1002
      %4215 = vmatprep.subr.mxu0 %v999
      %4216 = vmatpush1.msra.mxu0 %v998
      %4217 = vmatprep.subr.mxu0 %v995
      %4218 = vmatpush1.msra.mxu0 %v994
      %4219 = vmatprep.subr.mxu0 %v991
      %4220 = vmatpush1.msra.mxu0 %v990
      %4221 = vmatprep.subr.mxu0 %v987
      %4222 = vmatpush1.msra.mxu0 %v986
      %4223 = vmatprep.subr.mxu0 %v983
      %4224 = vmatpush1.msra.mxu0 %v982
      %4225 = vmatprep.subr.mxu0 %v979
      %4226 = vmatpush1.msra.mxu0 %v978
      %4227 = vmatprep.subr.mxu0 %v975
      %4228 = vmatpush1.msra.mxu0 %v974
      %4229 = vmatprep.subr.mxu0 %v971
      %4230 = vmatpush1.msra.mxu0 %v970
      %4231 = vmatprep.subr.mxu0 %v967
      %4232 = vmatpush1.msra.mxu0 %v966
      %4233 = vmatprep.subr.mxu0 %v963
      %4234 = vmatpush1.msra.mxu0 %v962
      %4235 = vmatprep.subr.mxu0 %v959
      %4236 = vmatpush1.msra.mxu0 %v958
      %4237 = vmatprep.subr.mxu0 %v955
      %4238 = vmatpush1.msra.mxu0 %v954
      %4239 = vmatprep.subr.mxu0 %v951
      %4240 = vmatpush1.msra.mxu0 %v950
      %4241 = vmatprep.subr.mxu0 %v947
      %4242 = vmatpush1.msra.mxu0 %v946
      %4243 = vmatprep.subr.mxu0 %v943
      %4244 = vmatpush1.msra.mxu0 %v942
      %4245 = vmatprep.subr.mxu0 %v1067
      %4246 = vmatpush2.msra.mxu0 %v1066
      %4247 = vmatprep.subr.mxu0 %v1063
      %4248 = vmatpush2.msra.mxu0 %v1062
      %4249 = vmatprep.subr.mxu0 %v1059
      %4250 = vmatpush2.msra.mxu0 %v1058
      %4251 = vmatprep.subr.mxu0 %v1055
      %4252 = vmatpush2.msra.mxu0 %v1054
      %4253 = vmatprep.subr.mxu0 %v1051
      %4254 = vmatpush2.msra.mxu0 %v1050
      %4255 = vmatprep.subr.mxu0 %v1047
      %4256 = vmatpush2.msra.mxu0 %v1046
      %4257 = vmatprep.subr.mxu0 %v1043
      %4258 = vmatpush2.msra.mxu0 %v1042
      %4259 = vmatprep.subr.mxu0 %v1039
      %4260 = vmatpush2.msra.mxu0 %v1038
      %4261 = vmatprep.subr.mxu0 %v1035
      %4262 = vmatpush2.msra.mxu0 %v1034
      %4263 = vmatprep.subr.mxu0 %v1031
      %4264 = vmatpush2.msra.mxu0 %v1030
      %4265 = vmatprep.subr.mxu0 %v1027
      %4266 = vmatpush2.msra.mxu0 %v1026
      %4267 = vmatprep.subr.mxu0 %v1023
      %4268 = vmatpush2.msra.mxu0 %v1022
      %4269 = vmatprep.subr.mxu0 %v1019
      %4270 = vmatpush2.msra.mxu0 %v1018
      %4271 = vmatprep.subr.mxu0 %v1015
      %4272 = vmatpush2.msra.mxu0 %v1014
      %4273 = vmatprep.subr.mxu0 %v1011
      %4274 = vmatpush2.msra.mxu0 %v1010
      %4275 = vmatprep.subr.mxu0 %v1007
      %4276 = vmatpush2.msra.mxu0 %v1006
      %4277 = vmatprep.mubr.f32.mxu0 %v2528
      %4278 = vmatmul.mubr.f32.gmra.mxu0 %v2524
      %v4279 = vpop.f32.mrf.mxu0
      %v4280 = vadd.f32 %v4209, %v4279
      %v4281 = vpop.f32.mrf.mxu0
      %v4282 = vadd.f32 %v4211, %v4281
      %4283 = vdwg.mxu0
      %4284 = vmatprep.subr.mxu0 %v1131
      %4285 = vmatpush1.msra.mxu0 %v1130
      %4286 = vmatprep.subr.mxu0 %v1127
      %4287 = vmatpush1.msra.mxu0 %v1126
      %4288 = vmatprep.subr.mxu0 %v1123
      %4289 = vmatpush1.msra.mxu0 %v1122
      %4290 = vmatprep.subr.mxu0 %v1119
      %4291 = vmatpush1.msra.mxu0 %v1118
      %4292 = vmatprep.subr.mxu0 %v1115
      %4293 = vmatpush1.msra.mxu0 %v1114
      %4294 = vmatprep.subr.mxu0 %v1111
      %4295 = vmatpush1.msra.mxu0 %v1110
      %4296 = vmatprep.subr.mxu0 %v1107
      %4297 = vmatpush1.msra.mxu0 %v1106
      %4298 = vmatprep.subr.mxu0 %v1103
      %4299 = vmatpush1.msra.mxu0 %v1102
      %4300 = vmatprep.subr.mxu0 %v1099
      %4301 = vmatpush1.msra.mxu0 %v1098
      %4302 = vmatprep.subr.mxu0 %v1095
      %4303 = vmatpush1.msra.mxu0 %v1094
      %4304 = vmatprep.subr.mxu0 %v1091
      %4305 = vmatpush1.msra.mxu0 %v1090
      %4306 = vmatprep.subr.mxu0 %v1087
      %4307 = vmatpush1.msra.mxu0 %v1086
      %4308 = vmatprep.subr.mxu0 %v1083
      %4309 = vmatpush1.msra.mxu0 %v1082
      %4310 = vmatprep.subr.mxu0 %v1079
      %4311 = vmatpush1.msra.mxu0 %v1078
      %4312 = vmatprep.subr.mxu0 %v1075
      %4313 = vmatpush1.msra.mxu0 %v1074
      %4314 = vmatprep.subr.mxu0 %v1071
      %4315 = vmatpush1.msra.mxu0 %v1070
      %4316 = vmatprep.subr.mxu0 %v1195
      %4317 = vmatpush2.msra.mxu0 %v1194
      %4318 = vmatprep.subr.mxu0 %v1191
      %4319 = vmatpush2.msra.mxu0 %v1190
      %4320 = vmatprep.subr.mxu0 %v1187
      %4321 = vmatpush2.msra.mxu0 %v1186
      %4322 = vmatprep.subr.mxu0 %v1183
      %4323 = vmatpush2.msra.mxu0 %v1182
      %4324 = vmatprep.subr.mxu0 %v1179
      %4325 = vmatpush2.msra.mxu0 %v1178
      %4326 = vmatprep.subr.mxu0 %v1175
      %4327 = vmatpush2.msra.mxu0 %v1174
      %4328 = vmatprep.subr.mxu0 %v1171
      %4329 = vmatpush2.msra.mxu0 %v1170
      %4330 = vmatprep.subr.mxu0 %v1167
      %4331 = vmatpush2.msra.mxu0 %v1166
      %4332 = vmatprep.subr.mxu0 %v1163
      %4333 = vmatpush2.msra.mxu0 %v1162
      %4334 = vmatprep.subr.mxu0 %v1159
      %4335 = vmatpush2.msra.mxu0 %v1158
      %4336 = vmatprep.subr.mxu0 %v1155
      %4337 = vmatpush2.msra.mxu0 %v1154
      %4338 = vmatprep.subr.mxu0 %v1151
      %4339 = vmatpush2.msra.mxu0 %v1150
      %4340 = vmatprep.subr.mxu0 %v1147
      %4341 = vmatpush2.msra.mxu0 %v1146
      %4342 = vmatprep.subr.mxu0 %v1143
      %4343 = vmatpush2.msra.mxu0 %v1142
      %4344 = vmatprep.subr.mxu0 %v1139
      %4345 = vmatpush2.msra.mxu0 %v1138
      %4346 = vmatprep.subr.mxu0 %v1135
      %4347 = vmatpush2.msra.mxu0 %v1134
      %4348 = vmatprep.mubr.f32.mxu0 %v2536
      %4349 = vmatmul.mubr.f32.gmra.mxu0 %v2532
      %v4350 = vpop.f32.mrf.mxu0
      %v4351 = vadd.f32 %v4280, %v4350
      %v4352 = vpop.f32.mrf.mxu0
      %v4353 = vadd.f32 %v4282, %v4352
      %4354 = vdwg.mxu0
      %4355 = vmatprep.subr.mxu0 %v1259
      %4356 = vmatpush1.msra.mxu0 %v1258
      %4357 = vmatprep.subr.mxu0 %v1255
      %4358 = vmatpush1.msra.mxu0 %v1254
      %4359 = vmatprep.subr.mxu0 %v1251
      %4360 = vmatpush1.msra.mxu0 %v1250
      %4361 = vmatprep.subr.mxu0 %v1247
      %4362 = vmatpush1.msra.mxu0 %v1246
      %4363 = vmatprep.subr.mxu0 %v1243
      %4364 = vmatpush1.msra.mxu0 %v1242
      %4365 = vmatprep.subr.mxu0 %v1239
      %4366 = vmatpush1.msra.mxu0 %v1238
      %4367 = vmatprep.subr.mxu0 %v1235
      %4368 = vmatpush1.msra.mxu0 %v1234
      %4369 = vmatprep.subr.mxu0 %v1231
      %4370 = vmatpush1.msra.mxu0 %v1230
      %4371 = vmatprep.subr.mxu0 %v1227
      %4372 = vmatpush1.msra.mxu0 %v1226
      %4373 = vmatprep.subr.mxu0 %v1223
      %4374 = vmatpush1.msra.mxu0 %v1222
      %4375 = vmatprep.subr.mxu0 %v1219
      %4376 = vmatpush1.msra.mxu0 %v1218
      %4377 = vmatprep.subr.mxu0 %v1215
      %4378 = vmatpush1.msra.mxu0 %v1214
      %4379 = vmatprep.subr.mxu0 %v1211
      %4380 = vmatpush1.msra.mxu0 %v1210
      %4381 = vmatprep.subr.mxu0 %v1207
      %4382 = vmatpush1.msra.mxu0 %v1206
      %4383 = vmatprep.subr.mxu0 %v1203
      %4384 = vmatpush1.msra.mxu0 %v1202
      %4385 = vmatprep.subr.mxu0 %v1199
      %4386 = vmatpush1.msra.mxu0 %v1198
      %4387 = vmatprep.subr.mxu0 %v1323
      %4388 = vmatpush2.msra.mxu0 %v1322
      %4389 = vmatprep.subr.mxu0 %v1319
      %4390 = vmatpush2.msra.mxu0 %v1318
      %4391 = vmatprep.subr.mxu0 %v1315
      %4392 = vmatpush2.msra.mxu0 %v1314
      %4393 = vmatprep.subr.mxu0 %v1311
      %4394 = vmatpush2.msra.mxu0 %v1310
      %4395 = vmatprep.subr.mxu0 %v1307
      %4396 = vmatpush2.msra.mxu0 %v1306
      %4397 = vmatprep.subr.mxu0 %v1303
      %4398 = vmatpush2.msra.mxu0 %v1302
      %4399 = vmatprep.subr.mxu0 %v1299
      %4400 = vmatpush2.msra.mxu0 %v1298
      %4401 = vmatprep.subr.mxu0 %v1295
      %4402 = vmatpush2.msra.mxu0 %v1294
      %4403 = vmatprep.subr.mxu0 %v1291
      %4404 = vmatpush2.msra.mxu0 %v1290
      %4405 = vmatprep.subr.mxu0 %v1287
      %4406 = vmatpush2.msra.mxu0 %v1286
      %4407 = vmatprep.subr.mxu0 %v1283
      %4408 = vmatpush2.msra.mxu0 %v1282
      %4409 = vmatprep.subr.mxu0 %v1279
      %4410 = vmatpush2.msra.mxu0 %v1278
      %4411 = vmatprep.subr.mxu0 %v1275
      %4412 = vmatpush2.msra.mxu0 %v1274
      %4413 = vmatprep.subr.mxu0 %v1271
      %4414 = vmatpush2.msra.mxu0 %v1270
      %4415 = vmatprep.subr.mxu0 %v1267
      %4416 = vmatpush2.msra.mxu0 %v1266
      %4417 = vmatprep.subr.mxu0 %v1263
      %4418 = vmatpush2.msra.mxu0 %v1262
      %4419 = vmatprep.mubr.f32.mxu0 %v2544
      %4420 = vmatmul.mubr.f32.gmra.mxu0 %v2540
      %v4421 = vpop.f32.mrf.mxu0
      %v4422 = vadd.f32 %v4351, %v4421
      %v4423 = vpop.f32.mrf.mxu0
      %v4424 = vadd.f32 %v4353, %v4423
      %4425 = vdwg.mxu0
      %4426 = vmatprep.subr.mxu0 %v1387
      %4427 = vmatpush1.msra.mxu0 %v1386
      %4428 = vmatprep.subr.mxu0 %v1383
      %4429 = vmatpush1.msra.mxu0 %v1382
      %4430 = vmatprep.subr.mxu0 %v1379
      %4431 = vmatpush1.msra.mxu0 %v1378
      %4432 = vmatprep.subr.mxu0 %v1375
      %4433 = vmatpush1.msra.mxu0 %v1374
      %4434 = vmatprep.subr.mxu0 %v1371
      %4435 = vmatpush1.msra.mxu0 %v1370
      %4436 = vmatprep.subr.mxu0 %v1367
      %4437 = vmatpush1.msra.mxu0 %v1366
      %4438 = vmatprep.subr.mxu0 %v1363
      %4439 = vmatpush1.msra.mxu0 %v1362
      %4440 = vmatprep.subr.mxu0 %v1359
      %4441 = vmatpush1.msra.mxu0 %v1358
      %4442 = vmatprep.subr.mxu0 %v1355
      %4443 = vmatpush1.msra.mxu0 %v1354
      %4444 = vmatprep.subr.mxu0 %v1351
      %4445 = vmatpush1.msra.mxu0 %v1350
      %4446 = vmatprep.subr.mxu0 %v1347
      %4447 = vmatpush1.msra.mxu0 %v1346
      %4448 = vmatprep.subr.mxu0 %v1343
      %4449 = vmatpush1.msra.mxu0 %v1342
      %4450 = vmatprep.subr.mxu0 %v1339
      %4451 = vmatpush1.msra.mxu0 %v1338
      %4452 = vmatprep.subr.mxu0 %v1335
      %4453 = vmatpush1.msra.mxu0 %v1334
      %4454 = vmatprep.subr.mxu0 %v1331
      %4455 = vmatpush1.msra.mxu0 %v1330
      %4456 = vmatprep.subr.mxu0 %v1327
      %4457 = vmatpush1.msra.mxu0 %v1326
      %4458 = vmatprep.subr.mxu0 %v1451
      %4459 = vmatpush2.msra.mxu0 %v1450
      %4460 = vmatprep.subr.mxu0 %v1447
      %4461 = vmatpush2.msra.mxu0 %v1446
      %4462 = vmatprep.subr.mxu0 %v1443
      %4463 = vmatpush2.msra.mxu0 %v1442
      %4464 = vmatprep.subr.mxu0 %v1439
      %4465 = vmatpush2.msra.mxu0 %v1438
      %4466 = vmatprep.subr.mxu0 %v1435
      %4467 = vmatpush2.msra.mxu0 %v1434
      %4468 = vmatprep.subr.mxu0 %v1431
      %4469 = vmatpush2.msra.mxu0 %v1430
      %4470 = vmatprep.subr.mxu0 %v1427
      %4471 = vmatpush2.msra.mxu0 %v1426
      %4472 = vmatprep.subr.mxu0 %v1423
      %4473 = vmatpush2.msra.mxu0 %v1422
      %4474 = vmatprep.subr.mxu0 %v1419
      %4475 = vmatpush2.msra.mxu0 %v1418
      %4476 = vmatprep.subr.mxu0 %v1415
      %4477 = vmatpush2.msra.mxu0 %v1414
      %4478 = vmatprep.subr.mxu0 %v1411
      %4479 = vmatpush2.msra.mxu0 %v1410
      %4480 = vmatprep.subr.mxu0 %v1407
      %4481 = vmatpush2.msra.mxu0 %v1406
      %4482 = vmatprep.subr.mxu0 %v1403
      %4483 = vmatpush2.msra.mxu0 %v1402
      %4484 = vmatprep.subr.mxu0 %v1399
      %4485 = vmatpush2.msra.mxu0 %v1398
      %4486 = vmatprep.subr.mxu0 %v1395
      %4487 = vmatpush2.msra.mxu0 %v1394
      %4488 = vmatprep.subr.mxu0 %v1391
      %4489 = vmatpush2.msra.mxu0 %v1390
      %4490 = vmatprep.mubr.f32.mxu0 %v2552
      %4491 = vmatmul.mubr.f32.gmra.mxu0 %v2548
      %v4492 = vpop.f32.mrf.mxu0
      %v4493 = vadd.f32 %v4422, %v4492
      %v4494 = vpop.f32.mrf.mxu0
      %v4495 = vadd.f32 %v4424, %v4494
      %4496 = vdwg.mxu0
      %4497 = vmatprep.subr.mxu0 %v1515
      %4498 = vmatpush1.msra.mxu0 %v1514
      %4499 = vmatprep.subr.mxu0 %v1511
      %4500 = vmatpush1.msra.mxu0 %v1510
      %4501 = vmatprep.subr.mxu0 %v1507
      %4502 = vmatpush1.msra.mxu0 %v1506
      %4503 = vmatprep.subr.mxu0 %v1503
      %4504 = vmatpush1.msra.mxu0 %v1502
      %4505 = vmatprep.subr.mxu0 %v1499
      %4506 = vmatpush1.msra.mxu0 %v1498
      %4507 = vmatprep.subr.mxu0 %v1495
      %4508 = vmatpush1.msra.mxu0 %v1494
      %4509 = vmatprep.subr.mxu0 %v1491
      %4510 = vmatpush1.msra.mxu0 %v1490
      %4511 = vmatprep.subr.mxu0 %v1487
      %4512 = vmatpush1.msra.mxu0 %v1486
      %4513 = vmatprep.subr.mxu0 %v1483
      %4514 = vmatpush1.msra.mxu0 %v1482
      %4515 = vmatprep.subr.mxu0 %v1479
      %4516 = vmatpush1.msra.mxu0 %v1478
      %4517 = vmatprep.subr.mxu0 %v1475
      %4518 = vmatpush1.msra.mxu0 %v1474
      %4519 = vmatprep.subr.mxu0 %v1471
      %4520 = vmatpush1.msra.mxu0 %v1470
      %4521 = vmatprep.subr.mxu0 %v1467
      %4522 = vmatpush1.msra.mxu0 %v1466
      %4523 = vmatprep.subr.mxu0 %v1463
      %4524 = vmatpush1.msra.mxu0 %v1462
      %4525 = vmatprep.subr.mxu0 %v1459
      %4526 = vmatpush1.msra.mxu0 %v1458
      %4527 = vmatprep.subr.mxu0 %v1455
      %4528 = vmatpush1.msra.mxu0 %v1454
      %4529 = vmatprep.subr.mxu0 %v1579
      %4530 = vmatpush2.msra.mxu0 %v1578
      %4531 = vmatprep.subr.mxu0 %v1575
      %4532 = vmatpush2.msra.mxu0 %v1574
      %4533 = vmatprep.subr.mxu0 %v1571
      %4534 = vmatpush2.msra.mxu0 %v1570
      %4535 = vmatprep.subr.mxu0 %v1567
      %4536 = vmatpush2.msra.mxu0 %v1566
      %4537 = vmatprep.subr.mxu0 %v1563
      %4538 = vmatpush2.msra.mxu0 %v1562
      %4539 = vmatprep.subr.mxu0 %v1559
      %4540 = vmatpush2.msra.mxu0 %v1558
      %4541 = vmatprep.subr.mxu0 %v1555
      %4542 = vmatpush2.msra.mxu0 %v1554
      %4543 = vmatprep.subr.mxu0 %v1551
      %4544 = vmatpush2.msra.mxu0 %v1550
      %4545 = vmatprep.subr.mxu0 %v1547
      %4546 = vmatpush2.msra.mxu0 %v1546
      %4547 = vmatprep.subr.mxu0 %v1543
      %4548 = vmatpush2.msra.mxu0 %v1542
      %4549 = vmatprep.subr.mxu0 %v1539
      %4550 = vmatpush2.msra.mxu0 %v1538
      %4551 = vmatprep.subr.mxu0 %v1535
      %4552 = vmatpush2.msra.mxu0 %v1534
      %4553 = vmatprep.subr.mxu0 %v1531
      %4554 = vmatpush2.msra.mxu0 %v1530
      %4555 = vmatprep.subr.mxu0 %v1527
      %4556 = vmatpush2.msra.mxu0 %v1526
      %4557 = vmatprep.subr.mxu0 %v1523
      %4558 = vmatpush2.msra.mxu0 %v1522
      %4559 = vmatprep.subr.mxu0 %v1519
      %4560 = vmatpush2.msra.mxu0 %v1518
      %4561 = vmatprep.mubr.f32.mxu0 %v2560
      %4562 = vmatmul.mubr.f32.gmra.mxu0 %v2556
      %v4563 = vpop.f32.mrf.mxu0
      %v4564 = vadd.f32 %v4493, %v4563
      %v4565 = vpop.f32.mrf.mxu0
      %v4566 = vadd.f32 %v4495, %v4565
      %4567 = vdwg.mxu0
      %4568 = vmatprep.subr.mxu0 %v1643
      %4569 = vmatpush1.msra.mxu0 %v1642
      %4570 = vmatprep.subr.mxu0 %v1639
      %4571 = vmatpush1.msra.mxu0 %v1638
      %4572 = vmatprep.subr.mxu0 %v1635
      %4573 = vmatpush1.msra.mxu0 %v1634
      %4574 = vmatprep.subr.mxu0 %v1631
      %4575 = vmatpush1.msra.mxu0 %v1630
      %4576 = vmatprep.subr.mxu0 %v1627
      %4577 = vmatpush1.msra.mxu0 %v1626
      %4578 = vmatprep.subr.mxu0 %v1623
      %4579 = vmatpush1.msra.mxu0 %v1622
      %4580 = vmatprep.subr.mxu0 %v1619
      %4581 = vmatpush1.msra.mxu0 %v1618
      %4582 = vmatprep.subr.mxu0 %v1615
      %4583 = vmatpush1.msra.mxu0 %v1614
      %4584 = vmatprep.subr.mxu0 %v1611
      %4585 = vmatpush1.msra.mxu0 %v1610
      %4586 = vmatprep.subr.mxu0 %v1607
      %4587 = vmatpush1.msra.mxu0 %v1606
      %4588 = vmatprep.subr.mxu0 %v1603
      %4589 = vmatpush1.msra.mxu0 %v1602
      %4590 = vmatprep.subr.mxu0 %v1599
      %4591 = vmatpush1.msra.mxu0 %v1598
      %4592 = vmatprep.subr.mxu0 %v1595
      %4593 = vmatpush1.msra.mxu0 %v1594
      %4594 = vmatprep.subr.mxu0 %v1591
      %4595 = vmatpush1.msra.mxu0 %v1590
      %4596 = vmatprep.subr.mxu0 %v1587
      %4597 = vmatpush1.msra.mxu0 %v1586
      %4598 = vmatprep.subr.mxu0 %v1583
      %4599 = vmatpush1.msra.mxu0 %v1582
      %4600 = vmatprep.subr.mxu0 %v1707
      %4601 = vmatpush2.msra.mxu0 %v1706
      %4602 = vmatprep.subr.mxu0 %v1703
      %4603 = vmatpush2.msra.mxu0 %v1702
      %4604 = vmatprep.subr.mxu0 %v1699
      %4605 = vmatpush2.msra.mxu0 %v1698
      %4606 = vmatprep.subr.mxu0 %v1695
      %4607 = vmatpush2.msra.mxu0 %v1694
      %4608 = vmatprep.subr.mxu0 %v1691
      %4609 = vmatpush2.msra.mxu0 %v1690
      %4610 = vmatprep.subr.mxu0 %v1687
      %4611 = vmatpush2.msra.mxu0 %v1686
      %4612 = vmatprep.subr.mxu0 %v1683
      %4613 = vmatpush2.msra.mxu0 %v1682
      %4614 = vmatprep.subr.mxu0 %v1679
      %4615 = vmatpush2.msra.mxu0 %v1678
      %4616 = vmatprep.subr.mxu0 %v1675
      %4617 = vmatpush2.msra.mxu0 %v1674
      %4618 = vmatprep.subr.mxu0 %v1671
      %4619 = vmatpush2.msra.mxu0 %v1670
      %4620 = vmatprep.subr.mxu0 %v1667
      %4621 = vmatpush2.msra.mxu0 %v1666
      %4622 = vmatprep.subr.mxu0 %v1663
      %4623 = vmatpush2.msra.mxu0 %v1662
      %4624 = vmatprep.subr.mxu0 %v1659
      %4625 = vmatpush2.msra.mxu0 %v1658
      %4626 = vmatprep.subr.mxu0 %v1655
      %4627 = vmatpush2.msra.mxu0 %v1654
      %4628 = vmatprep.subr.mxu0 %v1651
      %4629 = vmatpush2.msra.mxu0 %v1650
      %4630 = vmatprep.subr.mxu0 %v1647
      %4631 = vmatpush2.msra.mxu0 %v1646
      %4632 = vmatprep.mubr.f32.mxu0 %v2568
      %4633 = vmatmul.mubr.f32.gmra.mxu0 %v2564
      %v4634 = vpop.f32.mrf.mxu0
      %v4635 = vadd.f32 %v4564, %v4634
      %v4636 = vpop.f32.mrf.mxu0
      %v4637 = vadd.f32 %v4566, %v4636
      %4638 = vdwg.mxu0
      %4639 = vmatprep.subr.mxu0 %v1771
      %4640 = vmatpush1.msra.mxu0 %v1770
      %4641 = vmatprep.subr.mxu0 %v1767
      %4642 = vmatpush1.msra.mxu0 %v1766
      %4643 = vmatprep.subr.mxu0 %v1763
      %4644 = vmatpush1.msra.mxu0 %v1762
      %4645 = vmatprep.subr.mxu0 %v1759
      %4646 = vmatpush1.msra.mxu0 %v1758
      %4647 = vmatprep.subr.mxu0 %v1755
      %4648 = vmatpush1.msra.mxu0 %v1754
      %4649 = vmatprep.subr.mxu0 %v1751
      %4650 = vmatpush1.msra.mxu0 %v1750
      %4651 = vmatprep.subr.mxu0 %v1747
      %4652 = vmatpush1.msra.mxu0 %v1746
      %4653 = vmatprep.subr.mxu0 %v1743
      %4654 = vmatpush1.msra.mxu0 %v1742
      %4655 = vmatprep.subr.mxu0 %v1739
      %4656 = vmatpush1.msra.mxu0 %v1738
      %4657 = vmatprep.subr.mxu0 %v1735
      %4658 = vmatpush1.msra.mxu0 %v1734
      %4659 = vmatprep.subr.mxu0 %v1731
      %4660 = vmatpush1.msra.mxu0 %v1730
      %4661 = vmatprep.subr.mxu0 %v1727
      %4662 = vmatpush1.msra.mxu0 %v1726
      %4663 = vmatprep.subr.mxu0 %v1723
      %4664 = vmatpush1.msra.mxu0 %v1722
      %4665 = vmatprep.subr.mxu0 %v1719
      %4666 = vmatpush1.msra.mxu0 %v1718
      %4667 = vmatprep.subr.mxu0 %v1715
      %4668 = vmatpush1.msra.mxu0 %v1714
      %4669 = vmatprep.subr.mxu0 %v1711
      %4670 = vmatpush1.msra.mxu0 %v1710
      %4671 = vmatprep.subr.mxu0 %v1835
      %4672 = vmatpush2.msra.mxu0 %v1834
      %4673 = vmatprep.subr.mxu0 %v1831
      %4674 = vmatpush2.msra.mxu0 %v1830
      %4675 = vmatprep.subr.mxu0 %v1827
      %4676 = vmatpush2.msra.mxu0 %v1826
      %4677 = vmatprep.subr.mxu0 %v1823
      %4678 = vmatpush2.msra.mxu0 %v1822
      %4679 = vmatprep.subr.mxu0 %v1819
      %4680 = vmatpush2.msra.mxu0 %v1818
      %4681 = vmatprep.subr.mxu0 %v1815
      %4682 = vmatpush2.msra.mxu0 %v1814
      %4683 = vmatprep.subr.mxu0 %v1811
      %4684 = vmatpush2.msra.mxu0 %v1810
      %4685 = vmatprep.subr.mxu0 %v1807
      %4686 = vmatpush2.msra.mxu0 %v1806
      %4687 = vmatprep.subr.mxu0 %v1803
      %4688 = vmatpush2.msra.mxu0 %v1802
      %4689 = vmatprep.subr.mxu0 %v1799
      %4690 = vmatpush2.msra.mxu0 %v1798
      %4691 = vmatprep.subr.mxu0 %v1795
      %4692 = vmatpush2.msra.mxu0 %v1794
      %4693 = vmatprep.subr.mxu0 %v1791
      %4694 = vmatpush2.msra.mxu0 %v1790
      %4695 = vmatprep.subr.mxu0 %v1787
      %4696 = vmatpush2.msra.mxu0 %v1786
      %4697 = vmatprep.subr.mxu0 %v1783
      %4698 = vmatpush2.msra.mxu0 %v1782
      %4699 = vmatprep.subr.mxu0 %v1779
      %4700 = vmatpush2.msra.mxu0 %v1778
      %4701 = vmatprep.subr.mxu0 %v1775
      %4702 = vmatpush2.msra.mxu0 %v1774
      %4703 = vmatprep.mubr.f32.mxu0 %v2576
      %4704 = vmatmul.mubr.f32.gmra.mxu0 %v2572
      %v4705 = vpop.f32.mrf.mxu0
      %v4706 = vadd.f32 %v4635, %v4705
      %v4707 = vpop.f32.mrf.mxu0
      %v4708 = vadd.f32 %v4637, %v4707
      %4709 = vdwg.mxu0
      %4710 = vmatprep.subr.mxu0 %v1899
      %4711 = vmatpush1.msra.mxu0 %v1898
      %4712 = vmatprep.subr.mxu0 %v1895
      %4713 = vmatpush1.msra.mxu0 %v1894
      %4714 = vmatprep.subr.mxu0 %v1891
      %4715 = vmatpush1.msra.mxu0 %v1890
      %4716 = vmatprep.subr.mxu0 %v1887
      %4717 = vmatpush1.msra.mxu0 %v1886
      %4718 = vmatprep.subr.mxu0 %v1883
      %4719 = vmatpush1.msra.mxu0 %v1882
      %4720 = vmatprep.subr.mxu0 %v1879
      %4721 = vmatpush1.msra.mxu0 %v1878
      %4722 = vmatprep.subr.mxu0 %v1875
      %4723 = vmatpush1.msra.mxu0 %v1874
      %4724 = vmatprep.subr.mxu0 %v1871
      %4725 = vmatpush1.msra.mxu0 %v1870
      %4726 = vmatprep.subr.mxu0 %v1867
      %4727 = vmatpush1.msra.mxu0 %v1866
      %4728 = vmatprep.subr.mxu0 %v1863
      %4729 = vmatpush1.msra.mxu0 %v1862
      %4730 = vmatprep.subr.mxu0 %v1859
      %4731 = vmatpush1.msra.mxu0 %v1858
      %4732 = vmatprep.subr.mxu0 %v1855
      %4733 = vmatpush1.msra.mxu0 %v1854
      %4734 = vmatprep.subr.mxu0 %v1851
      %4735 = vmatpush1.msra.mxu0 %v1850
      %4736 = vmatprep.subr.mxu0 %v1847
      %4737 = vmatpush1.msra.mxu0 %v1846
      %4738 = vmatprep.subr.mxu0 %v1843
      %4739 = vmatpush1.msra.mxu0 %v1842
      %4740 = vmatprep.subr.mxu0 %v1839
      %4741 = vmatpush1.msra.mxu0 %v1838
      %4742 = vmatprep.subr.mxu0 %v1963
      %4743 = vmatpush2.msra.mxu0 %v1962
      %4744 = vmatprep.subr.mxu0 %v1959
      %4745 = vmatpush2.msra.mxu0 %v1958
      %4746 = vmatprep.subr.mxu0 %v1955
      %4747 = vmatpush2.msra.mxu0 %v1954
      %4748 = vmatprep.subr.mxu0 %v1951
      %4749 = vmatpush2.msra.mxu0 %v1950
      %4750 = vmatprep.subr.mxu0 %v1947
      %4751 = vmatpush2.msra.mxu0 %v1946
      %4752 = vmatprep.subr.mxu0 %v1943
      %4753 = vmatpush2.msra.mxu0 %v1942
      %4754 = vmatprep.subr.mxu0 %v1939
      %4755 = vmatpush2.msra.mxu0 %v1938
      %4756 = vmatprep.subr.mxu0 %v1935
      %4757 = vmatpush2.msra.mxu0 %v1934
      %4758 = vmatprep.subr.mxu0 %v1931
      %4759 = vmatpush2.msra.mxu0 %v1930
      %4760 = vmatprep.subr.mxu0 %v1927
      %4761 = vmatpush2.msra.mxu0 %v1926
      %4762 = vmatprep.subr.mxu0 %v1923
      %4763 = vmatpush2.msra.mxu0 %v1922
      %4764 = vmatprep.subr.mxu0 %v1919
      %4765 = vmatpush2.msra.mxu0 %v1918
      %4766 = vmatprep.subr.mxu0 %v1915
      %4767 = vmatpush2.msra.mxu0 %v1914
      %4768 = vmatprep.subr.mxu0 %v1911
      %4769 = vmatpush2.msra.mxu0 %v1910
      %4770 = vmatprep.subr.mxu0 %v1907
      %4771 = vmatpush2.msra.mxu0 %v1906
      %4772 = vmatprep.subr.mxu0 %v1903
      %4773 = vmatpush2.msra.mxu0 %v1902
      %4774 = vmatprep.mubr.f32.mxu0 %v2584
      %4775 = vmatmul.mubr.f32.gmra.mxu0 %v2580
      %v4776 = vpop.f32.mrf.mxu0
      %v4777 = vadd.f32 %v4706, %v4776
      %v4778 = vpop.f32.mrf.mxu0
      %v4779 = vadd.f32 %v4708, %v4778
      %4780 = vdwg.mxu0
      %4781 = vmatprep.subr.mxu0 %v2027
      %4782 = vmatpush1.msra.mxu0 %v2026
      %4783 = vmatprep.subr.mxu0 %v2023
      %4784 = vmatpush1.msra.mxu0 %v2022
      %4785 = vmatprep.subr.mxu0 %v2019
      %4786 = vmatpush1.msra.mxu0 %v2018
      %4787 = vmatprep.subr.mxu0 %v2015
      %4788 = vmatpush1.msra.mxu0 %v2014
      %4789 = vmatprep.subr.mxu0 %v2011
      %4790 = vmatpush1.msra.mxu0 %v2010
      %4791 = vmatprep.subr.mxu0 %v2007
      %4792 = vmatpush1.msra.mxu0 %v2006
      %4793 = vmatprep.subr.mxu0 %v2003
      %4794 = vmatpush1.msra.mxu0 %v2002
      %4795 = vmatprep.subr.mxu0 %v1999
      %4796 = vmatpush1.msra.mxu0 %v1998
      %4797 = vmatprep.subr.mxu0 %v1995
      %4798 = vmatpush1.msra.mxu0 %v1994
      %4799 = vmatprep.subr.mxu0 %v1991
      %4800 = vmatpush1.msra.mxu0 %v1990
      %4801 = vmatprep.subr.mxu0 %v1987
      %4802 = vmatpush1.msra.mxu0 %v1986
      %4803 = vmatprep.subr.mxu0 %v1983
      %4804 = vmatpush1.msra.mxu0 %v1982
      %4805 = vmatprep.subr.mxu0 %v1979
      %4806 = vmatpush1.msra.mxu0 %v1978
      %4807 = vmatprep.subr.mxu0 %v1975
      %4808 = vmatpush1.msra.mxu0 %v1974
      %4809 = vmatprep.subr.mxu0 %v1971
      %4810 = vmatpush1.msra.mxu0 %v1970
      %4811 = vmatprep.subr.mxu0 %v1967
      %4812 = vmatpush1.msra.mxu0 %v1966
      %4813 = vmatprep.subr.mxu0 %v2091
      %4814 = vmatpush2.msra.mxu0 %v2090
      %4815 = vmatprep.subr.mxu0 %v2087
      %4816 = vmatpush2.msra.mxu0 %v2086
      %4817 = vmatprep.subr.mxu0 %v2083
      %4818 = vmatpush2.msra.mxu0 %v2082
      %4819 = vmatprep.subr.mxu0 %v2079
      %4820 = vmatpush2.msra.mxu0 %v2078
      %4821 = vmatprep.subr.mxu0 %v2075
      %4822 = vmatpush2.msra.mxu0 %v2074
      %4823 = vmatprep.subr.mxu0 %v2071
      %4824 = vmatpush2.msra.mxu0 %v2070
      %4825 = vmatprep.subr.mxu0 %v2067
      %4826 = vmatpush2.msra.mxu0 %v2066
      %4827 = vmatprep.subr.mxu0 %v2063
      %4828 = vmatpush2.msra.mxu0 %v2062
      %4829 = vmatprep.subr.mxu0 %v2059
      %4830 = vmatpush2.msra.mxu0 %v2058
      %4831 = vmatprep.subr.mxu0 %v2055
      %4832 = vmatpush2.msra.mxu0 %v2054
      %4833 = vmatprep.subr.mxu0 %v2051
      %4834 = vmatpush2.msra.mxu0 %v2050
      %4835 = vmatprep.subr.mxu0 %v2047
      %4836 = vmatpush2.msra.mxu0 %v2046
      %4837 = vmatprep.subr.mxu0 %v2043
      %4838 = vmatpush2.msra.mxu0 %v2042
      %4839 = vmatprep.subr.mxu0 %v2039
      %4840 = vmatpush2.msra.mxu0 %v2038
      %4841 = vmatprep.subr.mxu0 %v2035
      %4842 = vmatpush2.msra.mxu0 %v2034
      %4843 = vmatprep.subr.mxu0 %v2031
      %4844 = vmatpush2.msra.mxu0 %v2030
      %4845 = vmatprep.mubr.f32.mxu0 %v2592
      %4846 = vmatmul.mubr.f32.gmra.mxu0 %v2588
      %v4847 = vpop.f32.mrf.mxu0
      %v4848 = vadd.f32 %v4777, %v4847
      %v4849 = vpop.f32.mrf.mxu0
      %v4850 = vadd.f32 %v4779, %v4849
      %4851 = vdwg.mxu0
      %4852 = vmatprep.subr.mxu0 %v2155
      %4853 = vmatpush1.msra.mxu0 %v2154
      %4854 = vmatprep.subr.mxu0 %v2151
      %4855 = vmatpush1.msra.mxu0 %v2150
      %4856 = vmatprep.subr.mxu0 %v2147
      %4857 = vmatpush1.msra.mxu0 %v2146
      %4858 = vmatprep.subr.mxu0 %v2143
      %4859 = vmatpush1.msra.mxu0 %v2142
      %4860 = vmatprep.subr.mxu0 %v2139
      %4861 = vmatpush1.msra.mxu0 %v2138
      %4862 = vmatprep.subr.mxu0 %v2135
      %4863 = vmatpush1.msra.mxu0 %v2134
      %4864 = vmatprep.subr.mxu0 %v2131
      %4865 = vmatpush1.msra.mxu0 %v2130
      %4866 = vmatprep.subr.mxu0 %v2127
      %4867 = vmatpush1.msra.mxu0 %v2126
      %4868 = vmatprep.subr.mxu0 %v2123
      %4869 = vmatpush1.msra.mxu0 %v2122
      %4870 = vmatprep.subr.mxu0 %v2119
      %4871 = vmatpush1.msra.mxu0 %v2118
      %4872 = vmatprep.subr.mxu0 %v2115
      %4873 = vmatpush1.msra.mxu0 %v2114
      %4874 = vmatprep.subr.mxu0 %v2111
      %4875 = vmatpush1.msra.mxu0 %v2110
      %4876 = vmatprep.subr.mxu0 %v2107
      %4877 = vmatpush1.msra.mxu0 %v2106
      %4878 = vmatprep.subr.mxu0 %v2103
      %4879 = vmatpush1.msra.mxu0 %v2102
      %4880 = vmatprep.subr.mxu0 %v2099
      %4881 = vmatpush1.msra.mxu0 %v2098
      %4882 = vmatprep.subr.mxu0 %v2095
      %4883 = vmatpush1.msra.mxu0 %v2094
      %4884 = vmatprep.subr.mxu0 %v2219
      %4885 = vmatpush2.msra.mxu0 %v2218
      %4886 = vmatprep.subr.mxu0 %v2215
      %4887 = vmatpush2.msra.mxu0 %v2214
      %4888 = vmatprep.subr.mxu0 %v2211
      %4889 = vmatpush2.msra.mxu0 %v2210
      %4890 = vmatprep.subr.mxu0 %v2207
      %4891 = vmatpush2.msra.mxu0 %v2206
      %4892 = vmatprep.subr.mxu0 %v2203
      %4893 = vmatpush2.msra.mxu0 %v2202
      %4894 = vmatprep.subr.mxu0 %v2199
      %4895 = vmatpush2.msra.mxu0 %v2198
      %4896 = vmatprep.subr.mxu0 %v2195
      %4897 = vmatpush2.msra.mxu0 %v2194
      %4898 = vmatprep.subr.mxu0 %v2191
      %4899 = vmatpush2.msra.mxu0 %v2190
      %4900 = vmatprep.subr.mxu0 %v2187
      %4901 = vmatpush2.msra.mxu0 %v2186
      %4902 = vmatprep.subr.mxu0 %v2183
      %4903 = vmatpush2.msra.mxu0 %v2182
      %4904 = vmatprep.subr.mxu0 %v2179
      %4905 = vmatpush2.msra.mxu0 %v2178
      %4906 = vmatprep.subr.mxu0 %v2175
      %4907 = vmatpush2.msra.mxu0 %v2174
      %4908 = vmatprep.subr.mxu0 %v2171
      %4909 = vmatpush2.msra.mxu0 %v2170
      %4910 = vmatprep.subr.mxu0 %v2167
      %4911 = vmatpush2.msra.mxu0 %v2166
      %4912 = vmatprep.subr.mxu0 %v2163
      %4913 = vmatpush2.msra.mxu0 %v2162
      %4914 = vmatprep.subr.mxu0 %v2159
      %4915 = vmatpush2.msra.mxu0 %v2158
      %4916 = vmatprep.mubr.f32.mxu0 %v2600
      %4917 = vmatmul.mubr.f32.gmra.mxu0 %v2596
      %v4918 = vpop.f32.mrf.mxu0
      %v4919 = vadd.f32 %v4848, %v4918
      %v4920 = vpop.f32.mrf.mxu0
      %v4921 = vadd.f32 %v4850, %v4920
      %4922 = vdwg.mxu0
      %4923 = vmatprep.subr.mxu0 %v2283
      %4924 = vmatpush1.msra.mxu0 %v2282
      %4925 = vmatprep.subr.mxu0 %v2279
      %4926 = vmatpush1.msra.mxu0 %v2278
      %4927 = vmatprep.subr.mxu0 %v2275
      %4928 = vmatpush1.msra.mxu0 %v2274
      %4929 = vmatprep.subr.mxu0 %v2271
      %4930 = vmatpush1.msra.mxu0 %v2270
      %4931 = vmatprep.subr.mxu0 %v2267
      %4932 = vmatpush1.msra.mxu0 %v2266
      %4933 = vmatprep.subr.mxu0 %v2263
      %4934 = vmatpush1.msra.mxu0 %v2262
      %4935 = vmatprep.subr.mxu0 %v2259
      %4936 = vmatpush1.msra.mxu0 %v2258
      %4937 = vmatprep.subr.mxu0 %v2255
      %4938 = vmatpush1.msra.mxu0 %v2254
      %4939 = vmatprep.subr.mxu0 %v2251
      %4940 = vmatpush1.msra.mxu0 %v2250
      %4941 = vmatprep.subr.mxu0 %v2247
      %4942 = vmatpush1.msra.mxu0 %v2246
      %4943 = vmatprep.subr.mxu0 %v2243
      %4944 = vmatpush1.msra.mxu0 %v2242
      %4945 = vmatprep.subr.mxu0 %v2239
      %4946 = vmatpush1.msra.mxu0 %v2238
      %4947 = vmatprep.subr.mxu0 %v2235
      %4948 = vmatpush1.msra.mxu0 %v2234
      %4949 = vmatprep.subr.mxu0 %v2231
      %4950 = vmatpush1.msra.mxu0 %v2230
      %4951 = vmatprep.subr.mxu0 %v2227
      %4952 = vmatpush1.msra.mxu0 %v2226
      %4953 = vmatprep.subr.mxu0 %v2223
      %4954 = vmatpush1.msra.mxu0 %v2222
      %4955 = vmatprep.subr.mxu0 %v2347
      %4956 = vmatpush2.msra.mxu0 %v2346
      %4957 = vmatprep.subr.mxu0 %v2343
      %4958 = vmatpush2.msra.mxu0 %v2342
      %4959 = vmatprep.subr.mxu0 %v2339
      %4960 = vmatpush2.msra.mxu0 %v2338
      %4961 = vmatprep.subr.mxu0 %v2335
      %4962 = vmatpush2.msra.mxu0 %v2334
      %4963 = vmatprep.subr.mxu0 %v2331
      %4964 = vmatpush2.msra.mxu0 %v2330
      %4965 = vmatprep.subr.mxu0 %v2327
      %4966 = vmatpush2.msra.mxu0 %v2326
      %4967 = vmatprep.subr.mxu0 %v2323
      %4968 = vmatpush2.msra.mxu0 %v2322
      %4969 = vmatprep.subr.mxu0 %v2319
      %4970 = vmatpush2.msra.mxu0 %v2318
      %4971 = vmatprep.subr.mxu0 %v2315
      %4972 = vmatpush2.msra.mxu0 %v2314
      %4973 = vmatprep.subr.mxu0 %v2311
      %4974 = vmatpush2.msra.mxu0 %v2310
      %4975 = vmatprep.subr.mxu0 %v2307
      %4976 = vmatpush2.msra.mxu0 %v2306
      %4977 = vmatprep.subr.mxu0 %v2303
      %4978 = vmatpush2.msra.mxu0 %v2302
      %4979 = vmatprep.subr.mxu0 %v2299
      %4980 = vmatpush2.msra.mxu0 %v2298
      %4981 = vmatprep.subr.mxu0 %v2295
      %4982 = vmatpush2.msra.mxu0 %v2294
      %4983 = vmatprep.subr.mxu0 %v2291
      %4984 = vmatpush2.msra.mxu0 %v2290
      %4985 = vmatprep.subr.mxu0 %v2287
      %4986 = vmatpush2.msra.mxu0 %v2286
      %4987 = vmatprep.mubr.f32.mxu0 %v2608
      %4988 = vmatmul.mubr.f32.gmra.mxu0 %v2604
      %v4989 = vpop.f32.mrf.mxu0
      %v4990 = vadd.f32 %v4919, %v4989
      %v4991 = vpop.f32.mrf.mxu0
      %v4992 = vadd.f32 %v4921, %v4991
      %4993 = vdwg.mxu0
      %4994 = vmatprep.subr.mxu0 %v2411
      %4995 = vmatpush1.msra.mxu0 %v2410
      %4996 = vmatprep.subr.mxu0 %v2407
      %4997 = vmatpush1.msra.mxu0 %v2406
      %4998 = vmatprep.subr.mxu0 %v2403
      %4999 = vmatpush1.msra.mxu0 %v2402
      %5000 = vmatprep.subr.mxu0 %v2399
      %5001 = vmatpush1.msra.mxu0 %v2398
      %5002 = vmatprep.subr.mxu0 %v2395
      %5003 = vmatpush1.msra.mxu0 %v2394
      %5004 = vmatprep.subr.mxu0 %v2391
      %5005 = vmatpush1.msra.mxu0 %v2390
      %5006 = vmatprep.subr.mxu0 %v2387
      %5007 = vmatpush1.msra.mxu0 %v2386
      %5008 = vmatprep.subr.mxu0 %v2383
      %5009 = vmatpush1.msra.mxu0 %v2382
      %5010 = vmatprep.subr.mxu0 %v2379
      %5011 = vmatpush1.msra.mxu0 %v2378
      %5012 = vmatprep.subr.mxu0 %v2375
      %5013 = vmatpush1.msra.mxu0 %v2374
      %5014 = vmatprep.subr.mxu0 %v2371
      %5015 = vmatpush1.msra.mxu0 %v2370
      %5016 = vmatprep.subr.mxu0 %v2367
      %5017 = vmatpush1.msra.mxu0 %v2366
      %5018 = vmatprep.subr.mxu0 %v2363
      %5019 = vmatpush1.msra.mxu0 %v2362
      %5020 = vmatprep.subr.mxu0 %v2359
      %5021 = vmatpush1.msra.mxu0 %v2358
      %5022 = vmatprep.subr.mxu0 %v2355
      %5023 = vmatpush1.msra.mxu0 %v2354
      %5024 = vmatprep.subr.mxu0 %v2351
      %5025 = vmatpush1.msra.mxu0 %v2350
      %5026 = vmatprep.subr.mxu0 %v2475
      %5027 = vmatpush2.msra.mxu0 %v2474
      %5028 = vmatprep.subr.mxu0 %v2471
      %5029 = vmatpush2.msra.mxu0 %v2470
      %5030 = vmatprep.subr.mxu0 %v2467
      %5031 = vmatpush2.msra.mxu0 %v2466
      %5032 = vmatprep.subr.mxu0 %v2463
      %5033 = vmatpush2.msra.mxu0 %v2462
      %5034 = vmatprep.subr.mxu0 %v2459
      %5035 = vmatpush2.msra.mxu0 %v2458
      %5036 = vmatprep.subr.mxu0 %v2455
      %5037 = vmatpush2.msra.mxu0 %v2454
      %5038 = vmatprep.subr.mxu0 %v2451
      %5039 = vmatpush2.msra.mxu0 %v2450
      %5040 = vmatprep.subr.mxu0 %v2447
      %5041 = vmatpush2.msra.mxu0 %v2446
      %5042 = vmatprep.subr.mxu0 %v2443
      %5043 = vmatpush2.msra.mxu0 %v2442
      %5044 = vmatprep.subr.mxu0 %v2439
      %5045 = vmatpush2.msra.mxu0 %v2438
      %5046 = vmatprep.subr.mxu0 %v2435
      %5047 = vmatpush2.msra.mxu0 %v2434
      %5048 = vmatprep.subr.mxu0 %v2431
      %5049 = vmatpush2.msra.mxu0 %v2430
      %5050 = vmatprep.subr.mxu0 %v2427
      %5051 = vmatpush2.msra.mxu0 %v2426
      %5052 = vmatprep.subr.mxu0 %v2423
      %5053 = vmatpush2.msra.mxu0 %v2422
      %5054 = vmatprep.subr.mxu0 %v2419
      %5055 = vmatpush2.msra.mxu0 %v2418
      %5056 = vmatprep.subr.mxu0 %v2415
      %5057 = vmatpush2.msra.mxu0 %v2414
      %5058 = vmatprep.mubr.f32.mxu0 %v2616
      %5059 = vmatmul.mubr.f32.gmra.mxu0 %v2612
      %v5060 = vpop.f32.mrf.mxu0
      %v5061 = vadd.f32 %v4990, %v5060
      %v5062 = vpop.f32.mrf.mxu0
      %v5063 = vadd.f32 %v4992, %v5062
      %5064 = vdwg.mxu0
      %v5069 = vcombine.low %v3854, %v3856
      %v5070 = vcombine.low %v5061, %v5063
      %v5072 = vunpack.c.l.s4 1966171168
      %v5073 = vunpack.c.0.s8 %v5072
      %v5074 = vlaneseq
      %v5075 = vshrl.u32 %v5074, 7
      %v5076 = vsub.s32 %v5073, %v5075
      %v5077 = vrot.slane %v5069, %v5076
      %v5079 = vunpack.c.l.s4 1966171168
      %v5080 = vunpack.c.0.s8 %v5079
      %v5081 = vlaneseq
      %v5082 = vshrl.u32 %v5081, 7
      %v5083 = vsub.s32 %v5080, %v5082
      %v5084 = vrot.slane %v5070, %v5083
      %v5085 = vcombine.low %v5077, %v5084
      %v5087 = vunpack.c.l.s4 1966171168
      %v5088 = vunpack.c.0.s8 %v5087
      %v5089 = vlaneseq
      %v5090 = vshrl.u32 %v5089, 7
      %v5091 = vsub.s32 %v5088, %v5090
      %v5092 = vrot.slane %v5085, %v5091
      %v5094 = vadd.f32 %v294, %v5092
      %v5095 = vlaneseq
      %vm5096 = vcmp.ge.s32.totalorder %v5095, 0
      %vm5097 = vcmp.lt.s32.totalorder %v5095, 390
      %vm5098 = vmand %vm5096, %vm5097
      %5099 = vst.msk [vmem:[#allocation2] sm:$0xf] %vm5098, %v5094
      %p5100 = scmp.eq.s32.totalorder %s21, 1
      // Predicated region
      $region45: #{mlp_forward.1} parent=39 // pred_check
        %p5101 = pneg %p5100
      $region46: #{mlp_forward.1} parent=39 // pred_check_branch
        %5103 = sbr.rel (%p5101) target = $region48
      $region47: #{mlp_forward.1} parent=39 // pred_region
        %p5104 = scmp.eq.s32.totalorder %s20, 0
        %s5105 = scalar_select %p5104, 1, 0
        %s5106 = scvt.s32.f32 %s5105
        %v5107 = vld [vmem:[#allocation2] sm:$0xf]
        %v5108 = vld [vmem:[%s2] sm:$0xf]
        %v5109 = vstv %s5106
        %v5110 = vmul.f32 %v5109, %v5108
        %v5111 = vadd.f32 %v5107, %v5110
        %v5112 = vld [vmem:[%s3] sm:$0xff]
        %v5113 = vld [vmem:[%s3 + $0x8] sm:$0xff]
        %v5114 = vld [vmem:[%s3 + $0x10] sm:$0xff]
        %v5115 = vld [vmem:[%s3 + $0x18] sm:$0xff]
        %v5116 = vld [vmem:[%s3 + $0x20] sm:$0xff]
        %v5117 = vld [vmem:[%s3 + $0x28] sm:$0xff]
        %v5118 = vld [vmem:[%s3 + $0x30] sm:$0xff]
        %v5119 = vld [vmem:[%s3 + $0x38] sm:$0xff]
        %v5120 = vld [vmem:[%s3 + $0x40] sm:$0xff]
        %v5121 = vld [vmem:[%s3 + $0x48] sm:$0xff]
        %v5122 = vld [vmem:[%s3 + $0x50] sm:$0xff]
        %v5123 = vld [vmem:[%s3 + $0x58] sm:$0xff]
        %v5124 = vld [vmem:[%s3 + $0x60] sm:$0xff]
        %v5125 = vld [vmem:[%s3 + $0x68] sm:$0xff]
        %v5126 = vld [vmem:[%s3 + $0x70] sm:$0xff]
        %v5127 = vld [vmem:[%s3 + $0x78] sm:$0xff]
        %v5128 = vld [vmem:[%s3 + $0x80] sm:$0xff]
        %v5129 = vld [vmem:[%s3 + $0x88] sm:$0xff]
        %v5130 = vld [vmem:[%s3 + $0x90] sm:$0xff]
        %v5131 = vld [vmem:[%s3 + $0x98] sm:$0xff]
        %v5132 = vld [vmem:[%s3 + $0xa0] sm:$0xff]
        %v5133 = vld [vmem:[%s3 + $0xa8] sm:$0xff]
        %v5134 = vld [vmem:[%s3 + $0xb0] sm:$0xff]
        %v5135 = vld [vmem:[%s3 + $0xb8] sm:$0xff]
        %v5136 = vld [vmem:[%s3 + $0xc0] sm:$0xff]
        %v5137 = vld [vmem:[%s3 + $0xc8] sm:$0xff]
        %v5138 = vld [vmem:[%s3 + $0xd0] sm:$0xff]
        %v5139 = vld [vmem:[%s3 + $0xd8] sm:$0xff]
        %v5140 = vld [vmem:[%s3 + $0xe0] sm:$0xff]
        %v5141 = vld [vmem:[%s3 + $0xe8] sm:$0xff]
        %v5142 = vld [vmem:[%s3 + $0xf0] sm:$0xff]
        %v5143 = vld [vmem:[%s3 + $0xf8] sm:$0xff]
        %v5144 = vld [vmem:[%s3 + $0x100] sm:$0xff]
        %v5145 = vld [vmem:[%s3 + $0x108] sm:$0xff]
        %v5146 = vld [vmem:[%s3 + $0x110] sm:$0xff]
        %v5147 = vld [vmem:[%s3 + $0x118] sm:$0xff]
        %v5148 = vld [vmem:[%s3 + $0x120] sm:$0xff]
        %v5149 = vld [vmem:[%s3 + $0x128] sm:$0xff]
        %v5150 = vld [vmem:[%s3 + $0x130] sm:$0xff]
        %v5151 = vld [vmem:[%s3 + $0x138] sm:$0xff]
        %v5152 = vld [vmem:[%s3 + $0x140] sm:$0xff]
        %v5153 = vld [vmem:[%s3 + $0x148] sm:$0xff]
        %v5154 = vld [vmem:[%s3 + $0x150] sm:$0xff]
        %v5155 = vld [vmem:[%s3 + $0x158] sm:$0xff]
        %v5156 = vld [vmem:[%s3 + $0x160] sm:$0xff]
        %v5157 = vld [vmem:[%s3 + $0x168] sm:$0xff]
        %v5158 = vld [vmem:[%s3 + $0x170] sm:$0xff]
        %v5159 = vld [vmem:[%s3 + $0x178] sm:$0xff]
        %v5160 = vld [vmem:[%s3 + $0x180] sm:$0x3f]
        %v5161 = vld [vmem:[%s4] sm:$0x1]
        %v5162 = vmul.f32 %v5109, %v5161
        %v5164 = vlaneseq
        %v5165 = vshrl.u32 %v5164, 7
        %v5166 = vsub.s32 0, %v5165
        %v5167 = vrot.slane %v5111, %v5166
        %v5168 = vlaneseq
        %v5169 = vshrl.u32 %v5168, 7
        %v5170 = vsub.s32 1, %v5169
        %v5171 = vrot.slane %v5111, %v5170
        %v5172 = vlaneseq
        %v5173 = vshrl.u32 %v5172, 7
        %v5174 = vsub.s32 2, %v5173
        %v5175 = vrot.slane %v5111, %v5174
        %v5176 = vlaneseq
        %v5177 = vshrl.u32 %v5176, 7
        %v5178 = vsub.s32 3, %v5177
        %v5179 = vrot.slane %v5111, %v5178
        %vm5183 = vcmask 48128
        %v5184 = vsel %vm5183, %v5179, 0
        %vm5186 = vcmask 1045504
        %v5188 = vsel %vm5186, %v5160, 0
        %5190 = vmatprep.subr.mxu0 0.0
        %5191 = vmatpush1.msra.mxu0 %v5127
        %5192 = vmatprep.subr.mxu0 0.0
        %5193 = vmatpush1.msra.mxu0 %v5126
        %5194 = vmatprep.subr.mxu0 0.0
        %5195 = vmatpush1.msra.mxu0 %v5125
        %5196 = vmatprep.subr.mxu0 0.0
        %5197 = vmatpush1.msra.mxu0 %v5124
        %5198 = vmatprep.subr.mxu0 0.0
        %5199 = vmatpush1.msra.mxu0 %v5123
        %5200 = vmatprep.subr.mxu0 0.0
        %5201 = vmatpush1.msra.mxu0 %v5122
        %5202 = vmatprep.subr.mxu0 0.0
        %5203 = vmatpush1.msra.mxu0 %v5121
        %5204 = vmatprep.subr.mxu0 0.0
        %5205 = vmatpush1.msra.mxu0 %v5120
        %5206 = vmatprep.subr.mxu0 0.0
        %5207 = vmatpush1.msra.mxu0 %v5119
        %5208 = vmatprep.subr.mxu0 0.0
        %5209 = vmatpush1.msra.mxu0 %v5118
        %5210 = vmatprep.subr.mxu0 0.0
        %5211 = vmatpush1.msra.mxu0 %v5117
        %5212 = vmatprep.subr.mxu0 0.0
        %5213 = vmatpush1.msra.mxu0 %v5116
        %5214 = vmatprep.subr.mxu0 0.0
        %5215 = vmatpush1.msra.mxu0 %v5115
        %5216 = vmatprep.subr.mxu0 0.0
        %5217 = vmatpush1.msra.mxu0 %v5114
        %5218 = vmatprep.subr.mxu0 0.0
        %5219 = vmatpush1.msra.mxu0 %v5113
        %5220 = vmatprep.subr.mxu0 0.0
        %5221 = vmatpush1.msra.mxu0 %v5112
        %5222 = vmatprep.subr.mxu0 0.0
        %5223 = vmatpush2.msra.mxu0 %v5143
        %5224 = vmatprep.subr.mxu0 0.0
        %5225 = vmatpush2.msra.mxu0 %v5142
        %5226 = vmatprep.subr.mxu0 0.0
        %5227 = vmatpush2.msra.mxu0 %v5141
        %5228 = vmatprep.subr.mxu0 0.0
        %5229 = vmatpush2.msra.mxu0 %v5140
        %5230 = vmatprep.subr.mxu0 0.0
        %5231 = vmatpush2.msra.mxu0 %v5139
        %5232 = vmatprep.subr.mxu0 0.0
        %5233 = vmatpush2.msra.mxu0 %v5138
        %5234 = vmatprep.subr.mxu0 0.0
        %5235 = vmatpush2.msra.mxu0 %v5137
        %5236 = vmatprep.subr.mxu0 0.0
        %5237 = vmatpush2.msra.mxu0 %v5136
        %5238 = vmatprep.subr.mxu0 0.0
        %5239 = vmatpush2.msra.mxu0 %v5135
        %5240 = vmatprep.subr.mxu0 0.0
        %5241 = vmatpush2.msra.mxu0 %v5134
        %5242 = vmatprep.subr.mxu0 0.0
        %5243 = vmatpush2.msra.mxu0 %v5133
        %5244 = vmatprep.subr.mxu0 0.0
        %5245 = vmatpush2.msra.mxu0 %v5132
        %5246 = vmatprep.subr.mxu0 0.0
        %5247 = vmatpush2.msra.mxu0 %v5131
        %5248 = vmatprep.subr.mxu0 0.0
        %5249 = vmatpush2.msra.mxu0 %v5130
        %5250 = vmatprep.subr.mxu0 0.0
        %5251 = vmatpush2.msra.mxu0 %v5129
        %5252 = vmatprep.subr.mxu0 0.0
        %5253 = vmatpush2.msra.mxu0 %v5128
        %5254 = vmatprep.mubr.f32.mxu0 %v5171
        %5255 = vmatmul.mubr.f32.gmra.mxu0 %v5167
        %v5256 = vpop.f32.mrf.mxu0
        %v5257 = vadd.f32 %v5162, %v5256
        %v5258 = vpop.f32.mrf.mxu0
        %5259 = vdwg.mxu0
        %5260 = vmatprep.subr.mxu0 0.0
        %5261 = vmatpush1.msra.mxu0 %v5159
        %5262 = vmatprep.subr.mxu0 0.0
        %5263 = vmatpush1.msra.mxu0 %v5158
        %5264 = vmatprep.subr.mxu0 0.0
        %5265 = vmatpush1.msra.mxu0 %v5157
        %5266 = vmatprep.subr.mxu0 0.0
        %5267 = vmatpush1.msra.mxu0 %v5156
        %5268 = vmatprep.subr.mxu0 0.0
        %5269 = vmatpush1.msra.mxu0 %v5155
        %5270 = vmatprep.subr.mxu0 0.0
        %5271 = vmatpush1.msra.mxu0 %v5154
        %5272 = vmatprep.subr.mxu0 0.0
        %5273 = vmatpush1.msra.mxu0 %v5153
        %5274 = vmatprep.subr.mxu0 0.0
        %5275 = vmatpush1.msra.mxu0 %v5152
        %5276 = vmatprep.subr.mxu0 0.0
        %5277 = vmatpush1.msra.mxu0 %v5151
        %5278 = vmatprep.subr.mxu0 0.0
        %5279 = vmatpush1.msra.mxu0 %v5150
        %5280 = vmatprep.subr.mxu0 0.0
        %5281 = vmatpush1.msra.mxu0 %v5149
        %5282 = vmatprep.subr.mxu0 0.0
        %5283 = vmatpush1.msra.mxu0 %v5148
        %5284 = vmatprep.subr.mxu0 0.0
        %5285 = vmatpush1.msra.mxu0 %v5147
        %5286 = vmatprep.subr.mxu0 0.0
        %5287 = vmatpush1.msra.mxu0 %v5146
        %5288 = vmatprep.subr.mxu0 0.0
        %5289 = vmatpush1.msra.mxu0 %v5145
        %5290 = vmatprep.subr.mxu0 0.0
        %5291 = vmatpush1.msra.mxu0 %v5144
        %5292 = vmatprep.subr.mxu0 0.0
        %5293 = vmatpush2.msra.mxu0 0.0
        %5294 = vmatprep.subr.mxu0 0.0
        %5295 = vmatpush2.msra.mxu0 0.0
        %5296 = vmatprep.subr.mxu0 0.0
        %5297 = vmatpush2.msra.mxu0 0.0
        %5298 = vmatprep.subr.mxu0 0.0
        %5299 = vmatpush2.msra.mxu0 0.0
        %5300 = vmatprep.subr.mxu0 0.0
        %5301 = vmatpush2.msra.mxu0 0.0
        %5302 = vmatprep.subr.mxu0 0.0
        %5303 = vmatpush2.msra.mxu0 0.0
        %5304 = vmatprep.subr.mxu0 0.0
        %5305 = vmatpush2.msra.mxu0 0.0
        %5306 = vmatprep.subr.mxu0 0.0
        %5307 = vmatpush2.msra.mxu0 0.0
        %5308 = vmatprep.subr.mxu0 0.0
        %5309 = vmatpush2.msra.mxu0 0.0
        %5310 = vmatprep.subr.mxu0 0.0
        %5311 = vmatpush2.msra.mxu0 0.0
        %5312 = vmatprep.subr.mxu0 0.0
        %5313 = vmatpush2.msra.mxu0 0.0
        %5314 = vmatprep.subr.mxu0 0.0
        %5315 = vmatpush2.msra.mxu0 0.0
        %5316 = vmatprep.subr.mxu0 0.0
        %5317 = vmatpush2.msra.mxu0 0.0
        %5318 = vmatprep.subr.mxu0 0.0
        %5319 = vmatpush2.msra.mxu0 0.0
        %5320 = vmatprep.subr.mxu0 0.0
        %5321 = vmatpush2.msra.mxu0 0.0
        %5322 = vmatprep.subr.mxu0 0.0
        %5323 = vmatpush2.msra.mxu0 %v5188
        %5324 = vmatprep.mubr.f32.mxu0 %v5184
        %5325 = vmatmul.mubr.f32.gmra.mxu0 %v5175
        %v5326 = vpop.f32.mrf.mxu0
        %v5327 = vadd.f32 %v5257, %v5326
        %v5328 = vpop.f32.mrf.mxu0
        %5329 = vdwg.mxu0
        %vm5330 = vcmask 24576
        %5331 = vst.msk [vmem:[%s284] sm:$0x1] %vm5330, %v5327
      $region48: #{mlp_forward.1} parent=39 // pred_fallthru
        _
      %p5332 = scmp.lt.s32.totalorder %s20, 1
      %s5333 = scalar_select %p5332, %s20, 1
      %s5334 = scalar_lea.vmem %s5, %s5333
      // Predicated region
      $region49: #{mlp_forward.1} parent=39 // pred_check
        %p5335 = pneg %p169
      $region50: #{mlp_forward.1} parent=39 // pred_check_branch
        %5337 = sbr.rel (%p5335) target = $region52
      $region51: #{mlp_forward.1} parent=39 // pred_region
        _
      $region52: #{mlp_forward.1} parent=39 // pred_fallthru
        _
    $region40: #{mlp_forward.1} parent=5 // pred_fallthru
      _
    %p5338 = scmp.le.s32.totalorder 2, %s11
    // Predicated region
    $region53: #{mlp_forward.1} parent=5 // pred_check
      %p5339 = pneg %p5338
    $region54: #{mlp_forward.1} parent=5 // pred_check_branch
      %5341 = sbr.rel (%p5339) target = $region56
    $region55: #{mlp_forward.1} parent=5 // pred_region
      %s5342 = ssub.s32 %s11, 2
      // Predicated region
      $region57: #{mlp_forward.1} parent=55 // pred_check
        %p5343 = pneg %p175
      $region58: #{mlp_forward.1} parent=55 // pred_check_branch
        %5345 = sbr.rel (%p5343) target = $region60
      $region59: #{mlp_forward.1} parent=55 // pred_region
        %p5346 = scmp.lt.s32.totalorder %s22, 1
        %s5347 = scalar_select %p5346, %s22, 1
        %s5348 = scalar_lea.vmem %s5, %s5347
      $region60: #{mlp_forward.1} parent=55 // pred_fallthru
        _
    $region56: #{mlp_forward.1} parent=5 // pred_fallthru
      _
  $region6: #{mlp_forward.1} parent=0 // loop_footer
    %s15 = sadd.s32 1, %s11
  $region7: #{mlp_forward.1} parent=0 // loop_footer_branch
    %10 = sbr.rel target = $region3
  $region8: #{mlp_forward.1} parent=0 // loop_exit
    _

</llo_original>
